<compile_context>
chip_gen: v7x
topology: tpu7x:2x2x1
jax: 0.10.0
libtpu: 0.0.40
codegen_flags: <defaults>
</compile_context>

<pallas_src>
import math

import jax
import jax.numpy as jnp
from jax.experimental import pallas as pl
from jax.experimental.pallas import tpu as pltpu

EPS = 1e-5            # nn.BatchNorm2d default eps
NEG_SLOPE = 0.1       # LeakyReLU(0.1)
LANE = 128
SUBLANE = 8
DEFAULT_VMEM_LIMIT = 32 * 1024 * 1024   # safe scoped-VMEM ceiling on v5e/v6e/v7x


def _round_up(x, m):
    return (x + m - 1) // m * m


def downsample_layer_nhwc(x, w, gamma, beta, *, tm_rows=512,
                          vmem_limit_bytes=DEFAULT_VMEM_LIMIT):
    """Fused Conv(3x3,s2,p1)+BN(train)+LeakyReLU.  x: (N,H,W,Cin) -> (N,OH,OW,Cout) f32.

    w is the PyTorch Conv2d weight (Cout, Cin, 3, 3).  The conv bias is not
    needed: training-mode BN mean subtraction cancels it exactly.
    """
    N, H, W, Cin = x.shape
    Cout = w.shape[0]
    S, P, KH, KW = 2, 1, 3, 3
    OH = (H + 2 * P - KH) // S + 1
    OW = (W + 2 * P - KW) // S + 1
    Cp = _round_up(Cout, LANE)                     # lane-dense output stores

    # ---- choose the output-row tile (TOH rows of OW pixels per grid step) ----
    # TOH multiple of row_step => TM = TOH*OW is a multiple of 8 (sublane rule).
    row_step = SUBLANE // math.gcd(OW, SUBLANE)
    toh = max(1, tm_rows // OW)
    toh = max(row_step, (toh // row_step) * row_step)
    toh = min(toh, _round_up(OH, row_step))
    # v7x has 2 TensorCores: keep >= 2 "parallel" grid steps when possible.
    if N == 1 and toh >= OH and OH > row_step:
        toh = max(row_step, ((-(-OH // 2)) // row_step) * row_step)
    n_rt = -(-OH // toh)                           # row tiles per image
    OHp = n_rt * toh                               # padded output rows
    G = N * n_rt                                   # pass-1 grid size (>= 2 here)
    TM = toh * OW                                  # conv-output rows per step
    Mp = G * TM

    # ---- XLA-side glue: bf16, zero-pad, split into 4 stride-2 parity phases --
    # phase[q][p][n, r, j, :] = x_pad[n, 2r+q, 2j+p, :]; every conv tap is a
    # CONTIGUOUS slice of one phase -> no im2col materialization, no strided
    # loads inside the kernel.  Total glue traffic ~1x the input (vs 2.25x).
    xb = x.astype(jnp.bfloat16)
    Hp2 = 2 * OHp + 2
    Wp2 = 2 * OW + 2
    xp = jnp.pad(xb, ((0, 0), (P, Hp2 - H - P), (P, Wp2 - W - P), (0, 0)))
    row_idx = jnp.arange(n_rt)[:, None] * toh + jnp.arange(toh + 1)[None, :]

    def _phase(q, p):
        ph = xp[:, q::2, p::2, :]                  # (N, OHp+1, OW+1, Cin)
        ph = ph[:, row_idx]                        # overlapped row slabs
        return ph.reshape(G, toh + 1, OW + 1, Cin)

    ph_ee, ph_eo, ph_oe, ph_oo = _phase(0, 0), _phase(0, 1), _phase(1, 0), _phase(1, 1)

    # PyTorch (Cout, Cin, kh, kw) -> (9, Cin, Cp) bf16, tap-major (t = kh*3+kw).
    w_taps = jnp.transpose(w, (2, 3, 1, 0)).reshape(9, Cin, Cout)
    w_taps = jnp.pad(w_taps, ((0, 0), (0, 0), (0, Cp - Cout))).astype(jnp.bfloat16)

    # ---- Pass 1: fused im2col + conv matmul + per-tile partial BN stats ------
    def conv_stats_kernel(ee, eo, oe, oo, w_ref, y_ref, stats_ref):
        phases = ((ee, eo), (oe, oo))              # [row parity][col parity]
        acc = None
        for kh in range(3):
            q, dr = kh % 2, kh // 2
            for kw in range(3):
                p, dc = kw % 2, kw // 2
                a = phases[q][p][dr:dr + toh, dc:dc + OW, :].reshape(TM, Cin)
                t = jnp.dot(a, w_ref[kh * 3 + kw],
                            preferred_element_type=jnp.float32)
                acc = t if acc is None else acc + t
        y_ref[...] = acc.astype(y_ref.dtype)       # bf16 intermediate (halves HBM)
        # rows 0/1 = per-tile sum / sum-of-squares; rows 2-7 are never read.
        stats_ref[0:1, :] = jnp.sum(acc, axis=0, keepdims=True)
        stats_ref[1:2, :] = jnp.sum(acc * acc, axis=0, keepdims=True)

    ph_spec = pl.BlockSpec((None, toh + 1, OW + 1, Cin), lambda i: (i, 0, 0, 0))
    flops1 = 2 * Mp * (9 * Cin) * Cp
    bytes1 = (4 * G * (toh + 1) * (OW + 1) * Cin * 2 + 9 * Cin * Cp * 2
              + Mp * Cp * 2 + 8 * G * Cp * 4)

    def _run_pass1(single_buffer_w):
        w_kwargs = {"pipeline_mode": pl.Buffered(1)} if single_buffer_w else {}
        w_spec = pl.BlockSpec((9, Cin, Cp), lambda i: (0, 0, 0), **w_kwargs)
        return pl.pallas_call(
            conv_stats_kernel,
            out_shape=(jax.ShapeDtypeStruct((Mp, Cp), jnp.bfloat16),
                       jax.ShapeDtypeStruct((8, G * Cp), jnp.float32)),
            grid_spec=pltpu.PrefetchScalarGridSpec(
                num_scalar_prefetch=0,
                grid=(G,),
                in_specs=[ph_spec, ph_spec, ph_spec, ph_spec, w_spec],
                out_specs=[pl.BlockSpec((TM, Cp), lambda i: (i, 0)),
                           pl.BlockSpec((8, Cp), lambda i: (0, i))]),
            compiler_params=pltpu.CompilerParams(
                dimension_semantics=("parallel",),
                vmem_limit_bytes=vmem_limit_bytes),
            cost_estimate=pl.CostEstimate(
                flops=flops1, transcendentals=0, bytes_accessed=bytes1),
        )(ph_ee, ph_eo, ph_oe, ph_oo, w_taps)

    try:
        # Resident weights single-buffered (constant index map) to save VMEM.
        y_conv, stats = _run_pass1(True)
    except Exception:  # graceful fallback if this Pallas rejects Buffered(1)
        y_conv, stats = _run_pass1(False)

    # ---- Tiny XLA reduction: Chan parallel-variance combine + BN fold --------
    stats = stats.reshape(8, G, Cp)
    s_t, ss_t = stats[0], stats[1]                               # (G, Cp)
    valid_rows = jnp.minimum(toh, OH - jnp.arange(n_rt) * toh)   # rows per tile
    cnt = (jnp.tile(valid_rows, N) * OW).astype(jnp.float32)[:, None]   # (G, 1)
    m_true = float(N * OH * OW)
    mean = jnp.sum(s_t, axis=0) / m_true
    mu_t = s_t / cnt
    m2_t = ss_t - cnt * mu_t * mu_t            # exact per-tile centered SS (padded rows are 0)
    m2 = jnp.sum(m2_t, axis=0) + jnp.sum(cnt * jnp.square(mu_t - mean), axis=0)
    var = jnp.maximum(m2 / m_true, 0.0)        # biased batch variance (PyTorch BN train)
    gamma_p = jnp.pad(gamma.astype(jnp.float32), (0, Cp - Cout))
    beta_p = jnp.pad(beta.astype(jnp.float32), (0, Cp - Cout))
    rstd = jax.lax.rsqrt(var + EPS)
    scale = (gamma_p * rstd).reshape(1, Cp)
    shift = (beta_p - mean * gamma_p * rstd).reshape(1, Cp)

    # ---- Pass 2: normalize + LeakyReLU (pure HBM streaming, bigger tiles) ----
    tm2 = TM
    for cand in range(1, G + 1):               # grow the row tile; keep >=2 steps
        if G % cand:
            continue
        rows = TM * cand
        if rows * Cp * (2 + 4) * 2 > vmem_limit_bytes // 2:
            continue
        if G // cand < 2 and G >= 2:
            continue
        tm2 = rows
    n2 = Mp // tm2

    def bn_lrelu_kernel(y_ref, scale_ref, shift_ref, o_ref):
        z = y_ref[...].astype(jnp.float32) * scale_ref[...] + shift_ref[...]
        o_ref[...] = jnp.maximum(z, NEG_SLOPE * z)   # single vmax, no select

    # Final output stays f32 to match the PyTorch module's output dtype.
    out = pl.pallas_call(
        bn_lrelu_kernel,
        out_shape=jax.ShapeDtypeStruct((Mp, Cp), jnp.float32),
        grid_spec=pltpu.PrefetchScalarGridSpec(
            num_scalar_prefetch=0,
            grid=(n2,),
            in_specs=[pl.BlockSpec((tm2, Cp), lambda i: (i, 0)),
                      pl.BlockSpec((1, Cp), lambda i: (0, 0)),
                      pl.BlockSpec((1, Cp), lambda i: (0, 0))],
            out_specs=pl.BlockSpec((tm2, Cp), lambda i: (i, 0))),
        compiler_params=pltpu.CompilerParams(
            dimension_semantics=("parallel",),
            vmem_limit_bytes=vmem_limit_bytes),
        cost_estimate=pl.CostEstimate(
            flops=3 * Mp * Cp, transcendentals=0,
            bytes_accessed=Mp * Cp * 2 + Mp * Cp * 4 + 2 * Cp * 4),
    )(y_conv, scale, shift)

    return out.reshape(N, OHp, OW, Cp)[:, :OH, :, :Cout]


def downsample_layer(x_nchw, w, b, gamma, beta, **kwargs):
    """PyTorch-faithful NCHW interface.  x_nchw: (N, Cin, H, W) -> (N, Cout, OH, OW)."""
    del b  # cancelled exactly by training-mode BN mean subtraction
    # TODO(synk): callers that can work in NHWC should use downsample_layer_nhwc
    # directly and skip these two layout passes over the activation.
    x = jnp.transpose(x_nchw, (0, 2, 3, 1))
    y = downsample_layer_nhwc(x, w, gamma, beta, **kwargs)
    return jnp.transpose(y, (0, 3, 1, 2))


def _reference(x, w, b, gamma, beta):
    """Pure-JAX f32 reference matching PyTorch semantics (training-mode BN)."""
    y = jax.lax.conv_general_dilated(
        x.astype(jnp.float32), w.astype(jnp.float32),
        window_strides=(2, 2), padding=((1, 1), (1, 1)),
        dimension_numbers=("NCHW", "OIHW", "NCHW"),
        precision=jax.lax.Precision.HIGHEST)
    y = y + b.reshape(1, -1, 1, 1)
    mean = y.mean(axis=(0, 2, 3), keepdims=True)
    var = jnp.square(y - mean).mean(axis=(0, 2, 3), keepdims=True)
    yhat = (y - mean) / jnp.sqrt(var + EPS)
    z = yhat * gamma.reshape(1, -1, 1, 1) + beta.reshape(1, -1, 1, 1)
    return jnp.where(z >= 0, z, NEG_SLOPE * z)


if __name__ == "__main__":
    key = jax.random.PRNGKey(0)
    k1, k2, k3, k4, k5 = jax.random.split(key, 5)

    N, Cin, H, W = 2, 4, 16, 16
    Cout = 8

    x = jax.random.normal(k1, (N, Cin, H, W), jnp.float32)
    # Deterministic synthetic parameters (shapes from nn.Conv2d / nn.BatchNorm2d).
    w = 0.1 * jax.random.normal(k2, (Cout, Cin, 3, 3), jnp.float32)
    b = 0.1 * jax.random.normal(k3, (Cout,), jnp.float32)
    gamma = 1.0 + 0.1 * jax.random.normal(k4, (Cout,), jnp.float32)
    beta = 0.1 * jax.random.normal(k5, (Cout,), jnp.float32)

    out = jax.block_until_ready(downsample_layer(x, w, b, gamma, beta))
    assert out.shape == (N, Cout, H // 2, W // 2), out.shape

    # Check vs reference fed the same bf16-rounded inputs (the intermediate is
    # also bf16 now per the perf review, so tolerances include one extra 2^-9
    # relative rounding of the conv output).
    ref_q = _reference(x.astype(jnp.bfloat16).astype(jnp.float32),
                       w.astype(jnp.bfloat16).astype(jnp.float32), b, gamma, beta)
    assert jnp.allclose(out, ref_q, atol=2.5e-2, rtol=2.5e-2), \
        "mismatch vs bf16-quantized reference"

    # Loose check vs full-f32 PyTorch-faithful reference.
    ref = _reference(x, w, b, gamma, beta)
    assert jnp.allclose(out, ref, atol=5e-2, rtol=5e-2), "mismatch vs f32 reference"

    print("KERNEL_OK")
</pallas_src>

<mosaic_0001>
module attributes {stable_mosaic.version = 11 : i64} {
  func.func @conv_stats_kernel(%arg0: i32, %arg1: memref<1x9x9x4xbf16, #tpu.memory_space<vmem>>, %arg2: memref<1x9x9x4xbf16, #tpu.memory_space<vmem>>, %arg3: memref<1x9x9x4xbf16, #tpu.memory_space<vmem>>, %arg4: memref<1x9x9x4xbf16, #tpu.memory_space<vmem>>, %arg5: memref<9x4x128xbf16, #tpu.memory_space<vmem>>, %arg6: memref<64x128xbf16, #tpu.memory_space<vmem>>, %arg7: memref<8x128xf32, #tpu.memory_space<vmem>>) attributes {dimension_semantics = [#tpu.dimension_semantics<parallel>], iteration_bounds = array<i64: 2>, scalar_prefetch = 0 : i64, scratch_operands = 0 : i64, tpu.core_type = #tpu.core_type<tc>, window_params = [{transform_indices = @transform_0, window_bounds = array<i64: 1, 9, 9, 4>}, {transform_indices = @transform_1, window_bounds = array<i64: 1, 9, 9, 4>}, {transform_indices = @transform_2, window_bounds = array<i64: 1, 9, 9, 4>}, {transform_indices = @transform_3, window_bounds = array<i64: 1, 9, 9, 4>}, {pipeline_mode = #tpu.pipeline_mode<synchronous>, transform_indices = @transform_4, window_bounds = array<i64: 9, 4, 128>}, {transform_indices = @transform_5, window_bounds = array<i64: 64, 128>}, {transform_indices = @transform_6, window_bounds = array<i64: 8, 128>}]} {
    %c0 = arith.constant 0 : index
    %c0_0 = arith.constant 0 : index
    %c0_1 = arith.constant 0 : index
    %c0_2 = arith.constant 0 : index
    %0 = vector.load %arg1[%c0, %c0_0, %c0_1, %c0_2] : memref<1x9x9x4xbf16, #tpu.memory_space<vmem>>, vector<1x8x8x4xbf16>
    %1 = vector.shape_cast %0 : vector<1x8x8x4xbf16> to vector<8x8x4xbf16>
    %2 = vector.shape_cast %1 : vector<8x8x4xbf16> to vector<64x4xbf16>
    %c0_3 = arith.constant 0 : index
    %c0_4 = arith.constant 0 : index
    %c0_5 = arith.constant 0 : index
    %3 = vector.load %arg5[%c0_3, %c0_4, %c0_5] : memref<9x4x128xbf16, #tpu.memory_space<vmem>>, vector<1x4x128xbf16>
    %4 = vector.shape_cast %3 : vector<1x4x128xbf16> to vector<4x128xbf16>
    %cst = arith.constant dense<0.000000e+00> : vector<64x128xf32>
    %5 = tpu.matmul %2, %4, %cst {dimension_numbers = #tpu.dot_dimension_numbers<[1], [0], [0], [1], [0, 0, 1, 1], [], []>} : vector<64x4xbf16>, vector<4x128xbf16>, vector<64x128xf32> -> vector<64x128xf32>
    %c0_6 = arith.constant 0 : index
    %c0_7 = arith.constant 0 : index
    %c0_8 = arith.constant 0 : index
    %c0_9 = arith.constant 0 : index
    %6 = vector.load %arg2[%c0_6, %c0_7, %c0_8, %c0_9] : memref<1x9x9x4xbf16, #tpu.memory_space<vmem>>, vector<1x8x8x4xbf16>
    %7 = vector.shape_cast %6 : vector<1x8x8x4xbf16> to vector<8x8x4xbf16>
    %8 = vector.shape_cast %7 : vector<8x8x4xbf16> to vector<64x4xbf16>
    %c1 = arith.constant 1 : index
    %c0_10 = arith.constant 0 : index
    %c0_11 = arith.constant 0 : index
    %9 = vector.load %arg5[%c1, %c0_10, %c0_11] : memref<9x4x128xbf16, #tpu.memory_space<vmem>>, vector<1x4x128xbf16>
    %10 = vector.shape_cast %9 : vector<1x4x128xbf16> to vector<4x128xbf16>
    %cst_12 = arith.constant dense<0.000000e+00> : vector<64x128xf32>
    %11 = tpu.matmul %8, %10, %cst_12 {dimension_numbers = #tpu.dot_dimension_numbers<[1], [0], [0], [1], [0, 0, 1, 1], [], []>} : vector<64x4xbf16>, vector<4x128xbf16>, vector<64x128xf32> -> vector<64x128xf32>
    %12 = arith.addf %5, %11 : vector<64x128xf32>
    %c0_13 = arith.constant 0 : index
    %c0_14 = arith.constant 0 : index
    %c1_15 = arith.constant 1 : index
    %c0_16 = arith.constant 0 : index
    %13 = vector.load %arg1[%c0_13, %c0_14, %c1_15, %c0_16] : memref<1x9x9x4xbf16, #tpu.memory_space<vmem>>, vector<1x8x8x4xbf16>
    %14 = vector.shape_cast %13 : vector<1x8x8x4xbf16> to vector<8x8x4xbf16>
    %15 = vector.shape_cast %14 : vector<8x8x4xbf16> to vector<64x4xbf16>
    %c2 = arith.constant 2 : index
    %c0_17 = arith.constant 0 : index
    %c0_18 = arith.constant 0 : index
    %16 = vector.load %arg5[%c2, %c0_17, %c0_18] : memref<9x4x128xbf16, #tpu.memory_space<vmem>>, vector<1x4x128xbf16>
    %17 = vector.shape_cast %16 : vector<1x4x128xbf16> to vector<4x128xbf16>
    %cst_19 = arith.constant dense<0.000000e+00> : vector<64x128xf32>
    %18 = tpu.matmul %15, %17, %cst_19 {dimension_numbers = #tpu.dot_dimension_numbers<[1], [0], [0], [1], [0, 0, 1, 1], [], []>} : vector<64x4xbf16>, vector<4x128xbf16>, vector<64x128xf32> -> vector<64x128xf32>
    %19 = arith.addf %12, %18 : vector<64x128xf32>
    %c0_20 = arith.constant 0 : index
    %c0_21 = arith.constant 0 : index
    %c0_22 = arith.constant 0 : index
    %c0_23 = arith.constant 0 : index
    %20 = vector.load %arg3[%c0_20, %c0_21, %c0_22, %c0_23] : memref<1x9x9x4xbf16, #tpu.memory_space<vmem>>, vector<1x8x8x4xbf16>
    %21 = vector.shape_cast %20 : vector<1x8x8x4xbf16> to vector<8x8x4xbf16>
    %22 = vector.shape_cast %21 : vector<8x8x4xbf16> to vector<64x4xbf16>
    %c3 = arith.constant 3 : index
    %c0_24 = arith.constant 0 : index
    %c0_25 = arith.constant 0 : index
    %23 = vector.load %arg5[%c3, %c0_24, %c0_25] : memref<9x4x128xbf16, #tpu.memory_space<vmem>>, vector<1x4x128xbf16>
    %24 = vector.shape_cast %23 : vector<1x4x128xbf16> to vector<4x128xbf16>
    %cst_26 = arith.constant dense<0.000000e+00> : vector<64x128xf32>
    %25 = tpu.matmul %22, %24, %cst_26 {dimension_numbers = #tpu.dot_dimension_numbers<[1], [0], [0], [1], [0, 0, 1, 1], [], []>} : vector<64x4xbf16>, vector<4x128xbf16>, vector<64x128xf32> -> vector<64x128xf32>
    %26 = arith.addf %19, %25 : vector<64x128xf32>
    %c0_27 = arith.constant 0 : index
    %c0_28 = arith.constant 0 : index
    %c0_29 = arith.constant 0 : index
    %c0_30 = arith.constant 0 : index
    %27 = vector.load %arg4[%c0_27, %c0_28, %c0_29, %c0_30] : memref<1x9x9x4xbf16, #tpu.memory_space<vmem>>, vector<1x8x8x4xbf16>
    %28 = vector.shape_cast %27 : vector<1x8x8x4xbf16> to vector<8x8x4xbf16>
    %29 = vector.shape_cast %28 : vector<8x8x4xbf16> to vector<64x4xbf16>
    %c4 = arith.constant 4 : index
    %c0_31 = arith.constant 0 : index
    %c0_32 = arith.constant 0 : index
    %30 = vector.load %arg5[%c4, %c0_31, %c0_32] : memref<9x4x128xbf16, #tpu.memory_space<vmem>>, vector<1x4x128xbf16>
    %31 = vector.shape_cast %30 : vector<1x4x128xbf16> to vector<4x128xbf16>
    %cst_33 = arith.constant dense<0.000000e+00> : vector<64x128xf32>
    %32 = tpu.matmul %29, %31, %cst_33 {dimension_numbers = #tpu.dot_dimension_numbers<[1], [0], [0], [1], [0, 0, 1, 1], [], []>} : vector<64x4xbf16>, vector<4x128xbf16>, vector<64x128xf32> -> vector<64x128xf32>
    %33 = arith.addf %26, %32 : vector<64x128xf32>
    %c0_34 = arith.constant 0 : index
    %c0_35 = arith.constant 0 : index
    %c1_36 = arith.constant 1 : index
    %c0_37 = arith.constant 0 : index
    %34 = vector.load %arg3[%c0_34, %c0_35, %c1_36, %c0_37] : memref<1x9x9x4xbf16, #tpu.memory_space<vmem>>, vector<1x8x8x4xbf16>
    %35 = vector.shape_cast %34 : vector<1x8x8x4xbf16> to vector<8x8x4xbf16>
    %36 = vector.shape_cast %35 : vector<8x8x4xbf16> to vector<64x4xbf16>
    %c5 = arith.constant 5 : index
    %c0_38 = arith.constant 0 : index
    %c0_39 = arith.constant 0 : index
    %37 = vector.load %arg5[%c5, %c0_38, %c0_39] : memref<9x4x128xbf16, #tpu.memory_space<vmem>>, vector<1x4x128xbf16>
    %38 = vector.shape_cast %37 : vector<1x4x128xbf16> to vector<4x128xbf16>
    %cst_40 = arith.constant dense<0.000000e+00> : vector<64x128xf32>
    %39 = tpu.matmul %36, %38, %cst_40 {dimension_numbers = #tpu.dot_dimension_numbers<[1], [0], [0], [1], [0, 0, 1, 1], [], []>} : vector<64x4xbf16>, vector<4x128xbf16>, vector<64x128xf32> -> vector<64x128xf32>
    %40 = arith.addf %33, %39 : vector<64x128xf32>
    %c0_41 = arith.constant 0 : index
    %c1_42 = arith.constant 1 : index
    %c0_43 = arith.constant 0 : index
    %c0_44 = arith.constant 0 : index
    %41 = vector.load %arg1[%c0_41, %c1_42, %c0_43, %c0_44] : memref<1x9x9x4xbf16, #tpu.memory_space<vmem>>, vector<1x8x8x4xbf16>
    %42 = vector.shape_cast %41 : vector<1x8x8x4xbf16> to vector<8x8x4xbf16>
    %43 = vector.shape_cast %42 : vector<8x8x4xbf16> to vector<64x4xbf16>
    %c6 = arith.constant 6 : index
    %c0_45 = arith.constant 0 : index
    %c0_46 = arith.constant 0 : index
    %44 = vector.load %arg5[%c6, %c0_45, %c0_46] : memref<9x4x128xbf16, #tpu.memory_space<vmem>>, vector<1x4x128xbf16>
    %45 = vector.shape_cast %44 : vector<1x4x128xbf16> to vector<4x128xbf16>
    %cst_47 = arith.constant dense<0.000000e+00> : vector<64x128xf32>
    %46 = tpu.matmul %43, %45, %cst_47 {dimension_numbers = #tpu.dot_dimension_numbers<[1], [0], [0], [1], [0, 0, 1, 1], [], []>} : vector<64x4xbf16>, vector<4x128xbf16>, vector<64x128xf32> -> vector<64x128xf32>
    %47 = arith.addf %40, %46 : vector<64x128xf32>
    %c0_48 = arith.constant 0 : index
    %c1_49 = arith.constant 1 : index
    %c0_50 = arith.constant 0 : index
    %c0_51 = arith.constant 0 : index
    %48 = vector.load %arg2[%c0_48, %c1_49, %c0_50, %c0_51] : memref<1x9x9x4xbf16, #tpu.memory_space<vmem>>, vector<1x8x8x4xbf16>
    %49 = vector.shape_cast %48 : vector<1x8x8x4xbf16> to vector<8x8x4xbf16>
    %50 = vector.shape_cast %49 : vector<8x8x4xbf16> to vector<64x4xbf16>
    %c7 = arith.constant 7 : index
    %c0_52 = arith.constant 0 : index
    %c0_53 = arith.constant 0 : index
    %51 = vector.load %arg5[%c7, %c0_52, %c0_53] : memref<9x4x128xbf16, #tpu.memory_space<vmem>>, vector<1x4x128xbf16>
    %52 = vector.shape_cast %51 : vector<1x4x128xbf16> to vector<4x128xbf16>
    %cst_54 = arith.constant dense<0.000000e+00> : vector<64x128xf32>
    %53 = tpu.matmul %50, %52, %cst_54 {dimension_numbers = #tpu.dot_dimension_numbers<[1], [0], [0], [1], [0, 0, 1, 1], [], []>} : vector<64x4xbf16>, vector<4x128xbf16>, vector<64x128xf32> -> vector<64x128xf32>
    %54 = arith.addf %47, %53 : vector<64x128xf32>
    %c0_55 = arith.constant 0 : index
    %c1_56 = arith.constant 1 : index
    %c1_57 = arith.constant 1 : index
    %c0_58 = arith.constant 0 : index
    %55 = vector.load %arg1[%c0_55, %c1_56, %c1_57, %c0_58] : memref<1x9x9x4xbf16, #tpu.memory_space<vmem>>, vector<1x8x8x4xbf16>
    %56 = vector.shape_cast %55 : vector<1x8x8x4xbf16> to vector<8x8x4xbf16>
    %57 = vector.shape_cast %56 : vector<8x8x4xbf16> to vector<64x4xbf16>
    %c8 = arith.constant 8 : index
    %c0_59 = arith.constant 0 : index
    %c0_60 = arith.constant 0 : index
    %58 = vector.load %arg5[%c8, %c0_59, %c0_60] : memref<9x4x128xbf16, #tpu.memory_space<vmem>>, vector<1x4x128xbf16>
    %59 = vector.shape_cast %58 : vector<1x4x128xbf16> to vector<4x128xbf16>
    %cst_61 = arith.constant dense<0.000000e+00> : vector<64x128xf32>
    %60 = tpu.matmul %57, %59, %cst_61 {dimension_numbers = #tpu.dot_dimension_numbers<[1], [0], [0], [1], [0, 0, 1, 1], [], []>} : vector<64x4xbf16>, vector<4x128xbf16>, vector<64x128xf32> -> vector<64x128xf32>
    %61 = arith.addf %54, %60 : vector<64x128xf32>
    %62 = arith.truncf %61 : vector<64x128xf32> to vector<64x128xbf16>
    %c0_62 = arith.constant 0 : index
    %c0_63 = arith.constant 0 : index
    %63 = vector.load %arg6[%c0_62, %c0_63] : memref<64x128xbf16, #tpu.memory_space<vmem>>, vector<64x128xbf16>
    tpu.vector_store %arg6[%c0_62, %c0_63], %62 {strides = array<i32>} : memref<64x128xbf16, #tpu.memory_space<vmem>>, vector<64x128xbf16>,
    %cst_64 = arith.constant dense<0.000000e+00> : vector<128xf32>
    %64 = vector.multi_reduction <add>, %61, %cst_64 [0] : vector<64x128xf32> to vector<128xf32>
    %65 = vector.shape_cast %64 : vector<128xf32> to vector<1x128xf32>
    %c0_65 = arith.constant 0 : index
    %c0_66 = arith.constant 0 : index
    %66 = vector.load %arg7[%c0_65, %c0_66] : memref<8x128xf32, #tpu.memory_space<vmem>>, vector<1x128xf32>
    tpu.vector_store %arg7[%c0_65, %c0_66], %65 {strides = array<i32>} : memref<8x128xf32, #tpu.memory_space<vmem>>, vector<1x128xf32>,
    %67 = arith.mulf %61, %61 : vector<64x128xf32>
    %cst_67 = arith.constant dense<0.000000e+00> : vector<128xf32>
    %68 = vector.multi_reduction <add>, %67, %cst_67 [0] : vector<64x128xf32> to vector<128xf32>
    %69 = vector.shape_cast %68 : vector<128xf32> to vector<1x128xf32>
    %c1_68 = arith.constant 1 : index
    %c0_69 = arith.constant 0 : index
    %70 = vector.load %arg7[%c1_68, %c0_69] : memref<8x128xf32, #tpu.memory_space<vmem>>, vector<1x128xf32>
    tpu.vector_store %arg7[%c1_68, %c0_69], %69 {strides = array<i32>} : memref<8x128xf32, #tpu.memory_space<vmem>>, vector<1x128xf32>,
    return
  }
  func.func @transform_0(%arg0: i32) -> (i32, i32, i32, i32) {
    %c0_i32 = arith.constant 0 : i32
    %c0_i32_0 = arith.constant 0 : i32
    %c0_i32_1 = arith.constant 0 : i32
    %c0_i32_2 = arith.constant 0 : i32
    return %arg0, %c0_i32, %c0_i32_0, %c0_i32_1 : i32, i32, i32, i32
  }
  func.func @transform_1(%arg0: i32) -> (i32, i32, i32, i32) {
    %c0_i32 = arith.constant 0 : i32
    %c0_i32_0 = arith.constant 0 : i32
    %c0_i32_1 = arith.constant 0 : i32
    %c0_i32_2 = arith.constant 0 : i32
    return %arg0, %c0_i32, %c0_i32_0, %c0_i32_1 : i32, i32, i32, i32
  }
  func.func @transform_2(%arg0: i32) -> (i32, i32, i32, i32) {
    %c0_i32 = arith.constant 0 : i32
    %c0_i32_0 = arith.constant 0 : i32
    %c0_i32_1 = arith.constant 0 : i32
    %c0_i32_2 = arith.constant 0 : i32
    return %arg0, %c0_i32, %c0_i32_0, %c0_i32_1 : i32, i32, i32, i32
  }
  func.func @transform_3(%arg0: i32) -> (i32, i32, i32, i32) {
    %c0_i32 = arith.constant 0 : i32
    %c0_i32_0 = arith.constant 0 : i32
    %c0_i32_1 = arith.constant 0 : i32
    %c0_i32_2 = arith.constant 0 : i32
    return %arg0, %c0_i32, %c0_i32_0, %c0_i32_1 : i32, i32, i32, i32
  }
  func.func @transform_4(%arg0: i32) -> (i32, i32, i32) {
    %c0_i32 = arith.constant 0 : i32
    %c0_i32_0 = arith.constant 0 : i32
    %c0_i32_1 = arith.constant 0 : i32
    %c0_i32_2 = arith.constant 0 : i32
    return %c0_i32, %c0_i32_0, %c0_i32_1 : i32, i32, i32
  }
  func.func @transform_5(%arg0: i32) -> (i32, i32) {
    %c0_i32 = arith.constant 0 : i32
    %c0_i32_0 = arith.constant 0 : i32
    return %arg0, %c0_i32 : i32, i32
  }
  func.func @transform_6(%arg0: i32) -> (i32, i32) {
    %c0_i32 = arith.constant 0 : i32
    %c0_i32_0 = arith.constant 0 : i32
    return %c0_i32, %arg0 : i32, i32
  }
}

module attributes {stable_mosaic.version = 11 : i64} {
  func.func @conv_stats_kernel(%arg0: i32, %arg1: memref<1x9x9x4xbf16, #tpu.memory_space<vmem>>, %arg2: memref<1x9x9x4xbf16, #tpu.memory_space<vmem>>, %arg3: memref<1x9x9x4xbf16, #tpu.memory_space<vmem>>, %arg4: memref<1x9x9x4xbf16, #tpu.memory_space<vmem>>, %arg5: memref<9x4x128xbf16, #tpu.memory_space<vmem>>, %arg6: memref<64x128xbf16, #tpu.memory_space<vmem>>, %arg7: memref<8x128xf32, #tpu.memory_space<vmem>>) attributes {dimension_semantics = [#tpu.dimension_semantics<parallel>], iteration_bounds = array<i64: 2>, scalar_prefetch = 0 : i64, scratch_operands = 0 : i64, tpu.core_type = #tpu.core_type<tc>, window_params = [{transform_indices = @transform_0, window_bounds = array<i64: 1, 9, 9, 4>}, {transform_indices = @transform_1, window_bounds = array<i64: 1, 9, 9, 4>}, {transform_indices = @transform_2, window_bounds = array<i64: 1, 9, 9, 4>}, {transform_indices = @transform_3, window_bounds = array<i64: 1, 9, 9, 4>}, {pipeline_mode = #tpu.pipeline_mode<synchronous>, transform_indices = @transform_4, window_bounds = array<i64: 9, 4, 128>}, {transform_indices = @transform_5, window_bounds = array<i64: 64, 128>}, {transform_indices = @transform_6, window_bounds = array<i64: 8, 128>}]} {
    %c0 = arith.constant 0 : index
    %c0_0 = arith.constant 0 : index
    %c0_1 = arith.constant 0 : index
    %c0_2 = arith.constant 0 : index
    %0 = vector.load %arg1[%c0, %c0_0, %c0_1, %c0_2] : memref<1x9x9x4xbf16, #tpu.memory_space<vmem>>, vector<1x8x8x4xbf16>
    %1 = vector.shape_cast %0 : vector<1x8x8x4xbf16> to vector<8x8x4xbf16>
    %2 = vector.shape_cast %1 : vector<8x8x4xbf16> to vector<64x4xbf16>
    %c0_3 = arith.constant 0 : index
    %c0_4 = arith.constant 0 : index
    %c0_5 = arith.constant 0 : index
    %3 = vector.load %arg5[%c0_3, %c0_4, %c0_5] : memref<9x4x128xbf16, #tpu.memory_space<vmem>>, vector<1x4x128xbf16>
    %4 = vector.shape_cast %3 : vector<1x4x128xbf16> to vector<4x128xbf16>
    %cst = arith.constant dense<0.000000e+00> : vector<64x128xf32>
    %5 = tpu.matmul %2, %4, %cst {dimension_numbers = #tpu.dot_dimension_numbers<[1], [0], [0], [1], [0, 0, 1, 1], [], []>} : vector<64x4xbf16>, vector<4x128xbf16>, vector<64x128xf32> -> vector<64x128xf32>
    %c0_6 = arith.constant 0 : index
    %c0_7 = arith.constant 0 : index
    %c0_8 = arith.constant 0 : index
    %c0_9 = arith.constant 0 : index
    %6 = vector.load %arg2[%c0_6, %c0_7, %c0_8, %c0_9] : memref<1x9x9x4xbf16, #tpu.memory_space<vmem>>, vector<1x8x8x4xbf16>
    %7 = vector.shape_cast %6 : vector<1x8x8x4xbf16> to vector<8x8x4xbf16>
    %8 = vector.shape_cast %7 : vector<8x8x4xbf16> to vector<64x4xbf16>
    %c1 = arith.constant 1 : index
    %c0_10 = arith.constant 0 : index
    %c0_11 = arith.constant 0 : index
    %9 = vector.load %arg5[%c1, %c0_10, %c0_11] : memref<9x4x128xbf16, #tpu.memory_space<vmem>>, vector<1x4x128xbf16>
    %10 = vector.shape_cast %9 : vector<1x4x128xbf16> to vector<4x128xbf16>
    %cst_12 = arith.constant dense<0.000000e+00> : vector<64x128xf32>
    %11 = tpu.matmul %8, %10, %cst_12 {dimension_numbers = #tpu.dot_dimension_numbers<[1], [0], [0], [1], [0, 0, 1, 1], [], []>} : vector<64x4xbf16>, vector<4x128xbf16>, vector<64x128xf32> -> vector<64x128xf32>
    %12 = arith.addf %5, %11 : vector<64x128xf32>
    %c0_13 = arith.constant 0 : index
    %c0_14 = arith.constant 0 : index
    %c1_15 = arith.constant 1 : index
    %c0_16 = arith.constant 0 : index
    %13 = vector.load %arg1[%c0_13, %c0_14, %c1_15, %c0_16] : memref<1x9x9x4xbf16, #tpu.memory_space<vmem>>, vector<1x8x8x4xbf16>
    %14 = vector.shape_cast %13 : vector<1x8x8x4xbf16> to vector<8x8x4xbf16>
    %15 = vector.shape_cast %14 : vector<8x8x4xbf16> to vector<64x4xbf16>
    %c2 = arith.constant 2 : index
    %c0_17 = arith.constant 0 : index
    %c0_18 = arith.constant 0 : index
    %16 = vector.load %arg5[%c2, %c0_17, %c0_18] : memref<9x4x128xbf16, #tpu.memory_space<vmem>>, vector<1x4x128xbf16>
    %17 = vector.shape_cast %16 : vector<1x4x128xbf16> to vector<4x128xbf16>
    %cst_19 = arith.constant dense<0.000000e+00> : vector<64x128xf32>
    %18 = tpu.matmul %15, %17, %cst_19 {dimension_numbers = #tpu.dot_dimension_numbers<[1], [0], [0], [1], [0, 0, 1, 1], [], []>} : vector<64x4xbf16>, vector<4x128xbf16>, vector<64x128xf32> -> vector<64x128xf32>
    %19 = arith.addf %12, %18 : vector<64x128xf32>
    %c0_20 = arith.constant 0 : index
    %c0_21 = arith.constant 0 : index
    %c0_22 = arith.constant 0 : index
    %c0_23 = arith.constant 0 : index
    %20 = vector.load %arg3[%c0_20, %c0_21, %c0_22, %c0_23] : memref<1x9x9x4xbf16, #tpu.memory_space<vmem>>, vector<1x8x8x4xbf16>
    %21 = vector.shape_cast %20 : vector<1x8x8x4xbf16> to vector<8x8x4xbf16>
    %22 = vector.shape_cast %21 : vector<8x8x4xbf16> to vector<64x4xbf16>
    %c3 = arith.constant 3 : index
    %c0_24 = arith.constant 0 : index
    %c0_25 = arith.constant 0 : index
    %23 = vector.load %arg5[%c3, %c0_24, %c0_25] : memref<9x4x128xbf16, #tpu.memory_space<vmem>>, vector<1x4x128xbf16>
    %24 = vector.shape_cast %23 : vector<1x4x128xbf16> to vector<4x128xbf16>
    %cst_26 = arith.constant dense<0.000000e+00> : vector<64x128xf32>
    %25 = tpu.matmul %22, %24, %cst_26 {dimension_numbers = #tpu.dot_dimension_numbers<[1], [0], [0], [1], [0, 0, 1, 1], [], []>} : vector<64x4xbf16>, vector<4x128xbf16>, vector<64x128xf32> -> vector<64x128xf32>
    %26 = arith.addf %19, %25 : vector<64x128xf32>
    %c0_27 = arith.constant 0 : index
    %c0_28 = arith.constant 0 : index
    %c0_29 = arith.constant 0 : index
    %c0_30 = arith.constant 0 : index
    %27 = vector.load %arg4[%c0_27, %c0_28, %c0_29, %c0_30] : memref<1x9x9x4xbf16, #tpu.memory_space<vmem>>, vector<1x8x8x4xbf16>
    %28 = vector.shape_cast %27 : vector<1x8x8x4xbf16> to vector<8x8x4xbf16>
    %29 = vector.shape_cast %28 : vector<8x8x4xbf16> to vector<64x4xbf16>
    %c4 = arith.constant 4 : index
    %c0_31 = arith.constant 0 : index
    %c0_32 = arith.constant 0 : index
    %30 = vector.load %arg5[%c4, %c0_31, %c0_32] : memref<9x4x128xbf16, #tpu.memory_space<vmem>>, vector<1x4x128xbf16>
    %31 = vector.shape_cast %30 : vector<1x4x128xbf16> to vector<4x128xbf16>
    %cst_33 = arith.constant dense<0.000000e+00> : vector<64x128xf32>
    %32 = tpu.matmul %29, %31, %cst_33 {dimension_numbers = #tpu.dot_dimension_numbers<[1], [0], [0], [1], [0, 0, 1, 1], [], []>} : vector<64x4xbf16>, vector<4x128xbf16>, vector<64x128xf32> -> vector<64x128xf32>
    %33 = arith.addf %26, %32 : vector<64x128xf32>
    %c0_34 = arith.constant 0 : index
    %c0_35 = arith.constant 0 : index
    %c1_36 = arith.constant 1 : index
    %c0_37 = arith.constant 0 : index
    %34 = vector.load %arg3[%c0_34, %c0_35, %c1_36, %c0_37] : memref<1x9x9x4xbf16, #tpu.memory_space<vmem>>, vector<1x8x8x4xbf16>
    %35 = vector.shape_cast %34 : vector<1x8x8x4xbf16> to vector<8x8x4xbf16>
    %36 = vector.shape_cast %35 : vector<8x8x4xbf16> to vector<64x4xbf16>
    %c5 = arith.constant 5 : index
    %c0_38 = arith.constant 0 : index
    %c0_39 = arith.constant 0 : index
    %37 = vector.load %arg5[%c5, %c0_38, %c0_39] : memref<9x4x128xbf16, #tpu.memory_space<vmem>>, vector<1x4x128xbf16>
    %38 = vector.shape_cast %37 : vector<1x4x128xbf16> to vector<4x128xbf16>
    %cst_40 = arith.constant dense<0.000000e+00> : vector<64x128xf32>
    %39 = tpu.matmul %36, %38, %cst_40 {dimension_numbers = #tpu.dot_dimension_numbers<[1], [0], [0], [1], [0, 0, 1, 1], [], []>} : vector<64x4xbf16>, vector<4x128xbf16>, vector<64x128xf32> -> vector<64x128xf32>
    %40 = arith.addf %33, %39 : vector<64x128xf32>
    %c0_41 = arith.constant 0 : index
    %c1_42 = arith.constant 1 : index
    %c0_43 = arith.constant 0 : index
    %c0_44 = arith.constant 0 : index
    %41 = vector.load %arg1[%c0_41, %c1_42, %c0_43, %c0_44] : memref<1x9x9x4xbf16, #tpu.memory_space<vmem>>, vector<1x8x8x4xbf16>
    %42 = vector.shape_cast %41 : vector<1x8x8x4xbf16> to vector<8x8x4xbf16>
    %43 = vector.shape_cast %42 : vector<8x8x4xbf16> to vector<64x4xbf16>
    %c6 = arith.constant 6 : index
    %c0_45 = arith.constant 0 : index
    %c0_46 = arith.constant 0 : index
    %44 = vector.load %arg5[%c6, %c0_45, %c0_46] : memref<9x4x128xbf16, #tpu.memory_space<vmem>>, vector<1x4x128xbf16>
    %45 = vector.shape_cast %44 : vector<1x4x128xbf16> to vector<4x128xbf16>
    %cst_47 = arith.constant dense<0.000000e+00> : vector<64x128xf32>
    %46 = tpu.matmul %43, %45, %cst_47 {dimension_numbers = #tpu.dot_dimension_numbers<[1], [0], [0], [1], [0, 0, 1, 1], [], []>} : vector<64x4xbf16>, vector<4x128xbf16>, vector<64x128xf32> -> vector<64x128xf32>
    %47 = arith.addf %40, %46 : vector<64x128xf32>
    %c0_48 = arith.constant 0 : index
    %c1_49 = arith.constant 1 : index
    %c0_50 = arith.constant 0 : index
    %c0_51 = arith.constant 0 : index
    %48 = vector.load %arg2[%c0_48, %c1_49, %c0_50, %c0_51] : memref<1x9x9x4xbf16, #tpu.memory_space<vmem>>, vector<1x8x8x4xbf16>
    %49 = vector.shape_cast %48 : vector<1x8x8x4xbf16> to vector<8x8x4xbf16>
    %50 = vector.shape_cast %49 : vector<8x8x4xbf16> to vector<64x4xbf16>
    %c7 = arith.constant 7 : index
    %c0_52 = arith.constant 0 : index
    %c0_53 = arith.constant 0 : index
    %51 = vector.load %arg5[%c7, %c0_52, %c0_53] : memref<9x4x128xbf16, #tpu.memory_space<vmem>>, vector<1x4x128xbf16>
    %52 = vector.shape_cast %51 : vector<1x4x128xbf16> to vector<4x128xbf16>
    %cst_54 = arith.constant dense<0.000000e+00> : vector<64x128xf32>
    %53 = tpu.matmul %50, %52, %cst_54 {dimension_numbers = #tpu.dot_dimension_numbers<[1], [0], [0], [1], [0, 0, 1, 1], [], []>} : vector<64x4xbf16>, vector<4x128xbf16>, vector<64x128xf32> -> vector<64x128xf32>
    %54 = arith.addf %47, %53 : vector<64x128xf32>
    %c0_55 = arith.constant 0 : index
    %c1_56 = arith.constant 1 : index
    %c1_57 = arith.constant 1 : index
    %c0_58 = arith.constant 0 : index
    %55 = vector.load %arg1[%c0_55, %c1_56, %c1_57, %c0_58] : memref<1x9x9x4xbf16, #tpu.memory_space<vmem>>, vector<1x8x8x4xbf16>
    %56 = vector.shape_cast %55 : vector<1x8x8x4xbf16> to vector<8x8x4xbf16>
    %57 = vector.shape_cast %56 : vector<8x8x4xbf16> to vector<64x4xbf16>
    %c8 = arith.constant 8 : index
    %c0_59 = arith.constant 0 : index
    %c0_60 = arith.constant 0 : index
    %58 = vector.load %arg5[%c8, %c0_59, %c0_60] : memref<9x4x128xbf16, #tpu.memory_space<vmem>>, vector<1x4x128xbf16>
    %59 = vector.shape_cast %58 : vector<1x4x128xbf16> to vector<4x128xbf16>
    %cst_61 = arith.constant dense<0.000000e+00> : vector<64x128xf32>
    %60 = tpu.matmul %57, %59, %cst_61 {dimension_numbers = #tpu.dot_dimension_numbers<[1], [0], [0], [1], [0, 0, 1, 1], [], []>} : vector<64x4xbf16>, vector<4x128xbf16>, vector<64x128xf32> -> vector<64x128xf32>
    %61 = arith.addf %54, %60 : vector<64x128xf32>
    %62 = arith.truncf %61 : vector<64x128xf32> to vector<64x128xbf16>
    %c0_62 = arith.constant 0 : index
    %c0_63 = arith.constant 0 : index
    %63 = vector.load %arg6[%c0_62, %c0_63] : memref<64x128xbf16, #tpu.memory_space<vmem>>, vector<64x128xbf16>
    tpu.vector_store %arg6[%c0_62, %c0_63], %62 {strides = array<i32>} : memref<64x128xbf16, #tpu.memory_space<vmem>>, vector<64x128xbf16>,
    %cst_64 = arith.constant dense<0.000000e+00> : vector<128xf32>
    %64 = vector.multi_reduction <add>, %61, %cst_64 [0] : vector<64x128xf32> to vector<128xf32>
    %65 = vector.shape_cast %64 : vector<128xf32> to vector<1x128xf32>
    %c0_65 = arith.constant 0 : index
    %c0_66 = arith.constant 0 : index
    %66 = vector.load %arg7[%c0_65, %c0_66] : memref<8x128xf32, #tpu.memory_space<vmem>>, vector<1x128xf32>
    tpu.vector_store %arg7[%c0_65, %c0_66], %65 {strides = array<i32>} : memref<8x128xf32, #tpu.memory_space<vmem>>, vector<1x128xf32>,
    %67 = arith.mulf %61, %61 : vector<64x128xf32>
    %cst_67 = arith.constant dense<0.000000e+00> : vector<128xf32>
    %68 = vector.multi_reduction <add>, %67, %cst_67 [0] : vector<64x128xf32> to vector<128xf32>
    %69 = vector.shape_cast %68 : vector<128xf32> to vector<1x128xf32>
    %c1_68 = arith.constant 1 : index
    %c0_69 = arith.constant 0 : index
    %70 = vector.load %arg7[%c1_68, %c0_69] : memref<8x128xf32, #tpu.memory_space<vmem>>, vector<1x128xf32>
    tpu.vector_store %arg7[%c1_68, %c0_69], %69 {strides = array<i32>} : memref<8x128xf32, #tpu.memory_space<vmem>>, vector<1x128xf32>,
    return
  }
  func.func @transform_0(%arg0: i32) -> (i32, i32, i32, i32) {
    %c0_i32 = arith.constant 0 : i32
    %c0_i32_0 = arith.constant 0 : i32
    %c0_i32_1 = arith.constant 0 : i32
    %c0_i32_2 = arith.constant 0 : i32
    return %arg0, %c0_i32, %c0_i32_0, %c0_i32_1 : i32, i32, i32, i32
  }
  func.func @transform_1(%arg0: i32) -> (i32, i32, i32, i32) {
    %c0_i32 = arith.constant 0 : i32
    %c0_i32_0 = arith.constant 0 : i32
    %c0_i32_1 = arith.constant 0 : i32
    %c0_i32_2 = arith.constant 0 : i32
    return %arg0, %c0_i32, %c0_i32_0, %c0_i32_1 : i32, i32, i32, i32
  }
  func.func @transform_2(%arg0: i32) -> (i32, i32, i32, i32) {
    %c0_i32 = arith.constant 0 : i32
    %c0_i32_0 = arith.constant 0 : i32
    %c0_i32_1 = arith.constant 0 : i32
    %c0_i32_2 = arith.constant 0 : i32
    return %arg0, %c0_i32, %c0_i32_0, %c0_i32_1 : i32, i32, i32, i32
  }
  func.func @transform_3(%arg0: i32) -> (i32, i32, i32, i32) {
    %c0_i32 = arith.constant 0 : i32
    %c0_i32_0 = arith.constant 0 : i32
    %c0_i32_1 = arith.constant 0 : i32
    %c0_i32_2 = arith.constant 0 : i32
    return %arg0, %c0_i32, %c0_i32_0, %c0_i32_1 : i32, i32, i32, i32
  }
  func.func @transform_4(%arg0: i32) -> (i32, i32, i32) {
    %c0_i32 = arith.constant 0 : i32
    %c0_i32_0 = arith.constant 0 : i32
    %c0_i32_1 = arith.constant 0 : i32
    %c0_i32_2 = arith.constant 0 : i32
    return %c0_i32, %c0_i32_0, %c0_i32_1 : i32, i32, i32
  }
  func.func @transform_5(%arg0: i32) -> (i32, i32) {
    %c0_i32 = arith.constant 0 : i32
    %c0_i32_0 = arith.constant 0 : i32
    return %arg0, %c0_i32 : i32, i32
  }
  func.func @transform_6(%arg0: i32) -> (i32, i32) {
    %c0_i32 = arith.constant 0 : i32
    %c0_i32_0 = arith.constant 0 : i32
    return %c0_i32, %arg0 : i32, i32
  }
}

</mosaic_0001>

<llo_original>
// kernel: tpu_custom_call.1
$region0: #{tpu_custom_call.1}
  #allocation0 [shape = 'u32[]', space=smem, size = 0x4, offset = 0x4, fixed_abs, tag = 'smem constant byte address 0x4 - core index']
  #allocation1 [shape = 'u32[144,128]{1,0:T(1,128)}', space=vmem, size = 0x12000, scoped, tag = 'internal scratch']
  %s0 = inlined_call_operand.vmem [shape: bf16[2,9,9,4], index: 0, kind: input, shape index: {}]
  %s1 = inlined_call_operand.vmem [shape: bf16[2,9,9,4], index: 1, kind: input, shape index: {}]
  %s2 = inlined_call_operand.vmem [shape: bf16[2,9,9,4], index: 2, kind: input, shape index: {}]
  %s3 = inlined_call_operand.vmem [shape: bf16[2,9,9,4], index: 3, kind: input, shape index: {}]
  %s4 = inlined_call_operand.vmem [shape: bf16[9,4,128], index: 4, kind: input, shape index: {}]
  %s5 = inlined_call_operand.hbm [shape: bf16[128,128], index: 5, kind: output, shape index: {0}]
  %s6 = inlined_call_operand.hbm [shape: f32[8,256], index: 6, kind: output, shape index: {1}]
  %7 = xla_tuple %s5, %s6
  %s8 = sld [smem:[#allocation0]]
  $region61: #{tpu_custom_call.1} parent=0
    _
  %s10 = ssub.s32 1, %s8
  %s11 = scalar_select 0, %s10, %s8
  $region1: #{tpu_custom_call.1} parent=0
    #allocation2 [shape = 'u8[32768]{0}', space=vmem, size = 0x8000, scoped, tag = 'output window, operand 0']
    #allocation3 [shape = 's32[2]{0}', space=sflag, size = 0x8, scoped, tag = 'scoped memory for tpu_custom_call.1']
    #allocation4 [shape = 'u8[8192]{0}', space=vmem, size = 0x2000, scoped, tag = 'output window, operand 1']
    #allocation5 [shape = 's32[2]{0}', space=sflag, size = 0x8, scoped, tag = 'scoped memory for tpu_custom_call.1']
    %12 = vsyncpa [#allocation3], 0
    %s13 = scalar_lea.sflag [#allocation3], 1
    %14 = vsyncpa %s13, 0
    %15 = vsyncpa [#allocation5], 0
    %s16 = scalar_lea.sflag [#allocation5], 1
    %17 = vsyncpa %s16, 0
    loop: start=0, step=1, limit=4
    $region2: #{tpu_custom_call.1} parent=1 // loop_pre_header
      _
    $region3: #{tpu_custom_call.1} parent=1 // loop_header
      %s19 = sphi 0, %s23
      %p20 = scmp.ge.s32.totalorder %s19, 4
      %s29 = sphi 0, %s31
      %s32 = sphi 0, %s29
      %s33 = sphi 0, %s32
      %s49 = sphi 0, %s33
      %s55 = sphi 0, %s57
      %s58 = sphi 0, %s55
      %s59 = sphi 0, %s58
      %s75 = sphi 0, %s59
      %s81 = sphi 0, %s83
      %s84 = sphi 0, %s81
      %s85 = sphi 0, %s84
      %s101 = sphi 0, %s85
      %s107 = sphi 0, %s109
      %s110 = sphi 0, %s107
      %s111 = sphi 0, %s110
      %s127 = sphi 0, %s111
      %s131 = sphi 0, %s131
      %s133 = sphi 0, %s131
      %s134 = sphi 0, %s133
      %s148 = sphi 0, %s134
      %s154 = sphi 0, %s156
      %s157 = sphi 0, %s154
      %s158 = sphi 0, %s157
      %s174 = sphi 0, %s158
      %s180 = sphi 0, %s182
      %s183 = sphi 0, %s180
      %s184 = sphi 0, %s183
      %s200 = sphi 0, %s184
    $region4: #{tpu_custom_call.1} parent=1 // loop_header_branch
      %22 = sbr.rel (%p20) target = $region8
    $region5: #{tpu_custom_call.1} parent=1 // loop_body
      %s24 = ssub.s32 %s19, 1
      %s25 = ssub.s32 %s19, 2
      %s26 = sadd.s32 %s19, 1
      %s27 = ssub.s32 %s19, %s26
      %p28 = scmp.eq.s32.totalorder %s27, 0
      %s30 = sadd.s32 %s29, 1
      %s31 = scalar_select %p28, %s29, %s30
      %p34 = pneg %p28
      %p35 = scmp.eq.s32.totalorder %s19, 1
      %p36 = por %p34, %p35
      %p37 = scmp.ne.s32.totalorder %s29, %s32
      %p38 = scmp.eq.s32.totalorder %s19, 0
      %p39 = por %p37, %p38
      %p40 = scmp.ne.s32.totalorder %s29, %s32
      %p41 = scmp.eq.s32.totalorder %s24, 1
      %p42 = por %p40, %p41
      %p43 = scmp.ne.s32.totalorder %s32, %s33
      %p44 = scmp.eq.s32.totalorder %s24, 0
      %p45 = por %p43, %p44
      %p46 = scmp.ne.s32.totalorder %s32, %s33
      %p47 = scmp.eq.s32.totalorder %s25, 1
      %p48 = por %p46, %p47
      %p50 = scmp.ne.s32.totalorder %s33, %s49
      %p51 = scmp.eq.s32.totalorder %s25, 0
      %p52 = por %p50, %p51
      %s53 = ssub.s32 %s19, %s26
      %p54 = scmp.eq.s32.totalorder %s53, 0
      %s56 = sadd.s32 %s55, 1
      %s57 = scalar_select %p54, %s55, %s56
      %p60 = pneg %p54
      %p61 = scmp.eq.s32.totalorder %s19, 1
      %p62 = por %p60, %p61
      %p63 = scmp.ne.s32.totalorder %s55, %s58
      %p64 = scmp.eq.s32.totalorder %s19, 0
      %p65 = por %p63, %p64
      %p66 = scmp.ne.s32.totalorder %s55, %s58
      %p67 = scmp.eq.s32.totalorder %s24, 1
      %p68 = por %p66, %p67
      %p69 = scmp.ne.s32.totalorder %s58, %s59
      %p70 = scmp.eq.s32.totalorder %s24, 0
      %p71 = por %p69, %p70
      %p72 = scmp.ne.s32.totalorder %s58, %s59
      %p73 = scmp.eq.s32.totalorder %s25, 1
      %p74 = por %p72, %p73
      %p76 = scmp.ne.s32.totalorder %s59, %s75
      %p77 = scmp.eq.s32.totalorder %s25, 0
      %p78 = por %p76, %p77
      %s79 = ssub.s32 %s19, %s26
      %p80 = scmp.eq.s32.totalorder %s79, 0
      %s82 = sadd.s32 %s81, 1
      %s83 = scalar_select %p80, %s81, %s82
      %p86 = pneg %p80
      %p87 = scmp.eq.s32.totalorder %s19, 1
      %p88 = por %p86, %p87
      %p89 = scmp.ne.s32.totalorder %s81, %s84
      %p90 = scmp.eq.s32.totalorder %s19, 0
      %p91 = por %p89, %p90
      %p92 = scmp.ne.s32.totalorder %s81, %s84
      %p93 = scmp.eq.s32.totalorder %s24, 1
      %p94 = por %p92, %p93
      %p95 = scmp.ne.s32.totalorder %s84, %s85
      %p96 = scmp.eq.s32.totalorder %s24, 0
      %p97 = por %p95, %p96
      %p98 = scmp.ne.s32.totalorder %s84, %s85
      %p99 = scmp.eq.s32.totalorder %s25, 1
      %p100 = por %p98, %p99
      %p102 = scmp.ne.s32.totalorder %s85, %s101
      %p103 = scmp.eq.s32.totalorder %s25, 0
      %p104 = por %p102, %p103
      %s105 = ssub.s32 %s19, %s26
      %p106 = scmp.eq.s32.totalorder %s105, 0
      %s108 = sadd.s32 %s107, 1
      %s109 = scalar_select %p106, %s107, %s108
      %p112 = pneg %p106
      %p113 = scmp.eq.s32.totalorder %s19, 1
      %p114 = por %p112, %p113
      %p115 = scmp.ne.s32.totalorder %s107, %s110
      %p116 = scmp.eq.s32.totalorder %s19, 0
      %p117 = por %p115, %p116
      %p118 = scmp.ne.s32.totalorder %s107, %s110
      %p119 = scmp.eq.s32.totalorder %s24, 1
      %p120 = por %p118, %p119
      %p121 = scmp.ne.s32.totalorder %s110, %s111
      %p122 = scmp.eq.s32.totalorder %s24, 0
      %p123 = por %p121, %p122
      %p124 = scmp.ne.s32.totalorder %s110, %s111
      %p125 = scmp.eq.s32.totalorder %s25, 1
      %p126 = por %p124, %p125
      %p128 = scmp.ne.s32.totalorder %s111, %s127
      %p129 = scmp.eq.s32.totalorder %s25, 0
      %p130 = por %p128, %p129
      %s132 = sadd.s32 %s131, 1
      %p135 = scmp.eq.s32.totalorder %s19, 1
      %p136 = scmp.ne.s32.totalorder %s131, %s133
      %p137 = scmp.eq.s32.totalorder %s19, 0
      %p138 = por %p136, %p137
      %p139 = scmp.ne.s32.totalorder %s131, %s133
      %p140 = scmp.eq.s32.totalorder %s24, 1
      %p141 = por %p139, %p140
      %p142 = scmp.ne.s32.totalorder %s133, %s134
      %p143 = scmp.eq.s32.totalorder %s24, 0
      %p144 = por %p142, %p143
      %p145 = scmp.ne.s32.totalorder %s133, %s134
      %p146 = scmp.eq.s32.totalorder %s25, 1
      %p147 = por %p145, %p146
      %p149 = scmp.ne.s32.totalorder %s134, %s148
      %p150 = scmp.eq.s32.totalorder %s25, 0
      %p151 = por %p149, %p150
      %s152 = ssub.s32 %s19, %s26
      %p153 = scmp.eq.s32.totalorder %s152, 0
      %s155 = sadd.s32 %s154, 1
      %s156 = scalar_select %p153, %s154, %s155
      %p159 = pneg %p153
      %p160 = scmp.eq.s32.totalorder %s19, 1
      %p161 = por %p159, %p160
      %p162 = scmp.ne.s32.totalorder %s154, %s157
      %p163 = scmp.eq.s32.totalorder %s19, 0
      %p164 = por %p162, %p163
      %p165 = scmp.ne.s32.totalorder %s154, %s157
      %p166 = scmp.eq.s32.totalorder %s24, 1
      %p167 = por %p165, %p166
      %p168 = scmp.ne.s32.totalorder %s157, %s158
      %p169 = scmp.eq.s32.totalorder %s24, 0
      %p170 = por %p168, %p169
      %p171 = scmp.ne.s32.totalorder %s157, %s158
      %p172 = scmp.eq.s32.totalorder %s25, 1
      %p173 = por %p171, %p172
      %p175 = scmp.ne.s32.totalorder %s158, %s174
      %p176 = scmp.eq.s32.totalorder %s25, 0
      %p177 = por %p175, %p176
      %s178 = ssub.s32 %s19, %s26
      %p179 = scmp.eq.s32.totalorder %s178, 0
      %s181 = sadd.s32 %s180, 1
      %s182 = scalar_select %p179, %s180, %s181
      %p185 = pneg %p179
      %p186 = scmp.eq.s32.totalorder %s19, 1
      %p187 = por %p185, %p186
      %p188 = scmp.ne.s32.totalorder %s180, %s183
      %p189 = scmp.eq.s32.totalorder %s19, 0
      %p190 = por %p188, %p189
      %p191 = scmp.ne.s32.totalorder %s180, %s183
      %p192 = scmp.eq.s32.totalorder %s24, 1
      %p193 = por %p191, %p192
      %p194 = scmp.ne.s32.totalorder %s183, %s184
      %p195 = scmp.eq.s32.totalorder %s24, 0
      %p196 = por %p194, %p195
      %p197 = scmp.ne.s32.totalorder %s183, %s184
      %p198 = scmp.eq.s32.totalorder %s25, 1
      %p199 = por %p197, %p198
      %p201 = scmp.ne.s32.totalorder %s184, %s200
      %p202 = scmp.eq.s32.totalorder %s25, 0
      %p203 = por %p201, %p202
      %p204 = scmp.le.s32.totalorder 1, %s19
      %p205 = scmp.lt.s32.totalorder %s19, 3
      %p206 = pnand %p204, %p205
      %p207 = pneg %p206
      // Predicated region
      $region9: #{tpu_custom_call.1} parent=5 // pred_check
        _
      $region10: #{tpu_custom_call.1} parent=5 // pred_check_branch
        %209 = sbr.rel (%p206) target = $region12
      $region11: #{tpu_custom_call.1} parent=5 // pred_region
        %s210 = ssub.s32 %s19, 1
        // Predicated region
        $region13: #{tpu_custom_call.1} parent=11 // pred_check
          %p211 = pneg %p144
        $region14: #{tpu_custom_call.1} parent=11 // pred_check_branch
          %213 = sbr.rel (%p211) target = $region16
        $region15: #{tpu_custom_call.1} parent=11 // pred_region
          _
        $region16: #{tpu_custom_call.1} parent=11 // pred_fallthru
          _
      $region12: #{tpu_custom_call.1} parent=5 // pred_fallthru
        _
      %p214 = scmp.lt.s32.totalorder %s19, 2
      // Predicated region
      $region17: #{tpu_custom_call.1} parent=5 // pred_check
        %p215 = pneg %p214
      $region18: #{tpu_custom_call.1} parent=5 // pred_check_branch
        %217 = sbr.rel (%p215) target = $region20
      $region19: #{tpu_custom_call.1} parent=5 // pred_region
        // Predicated region
        $region21: #{tpu_custom_call.1} parent=19 // pred_check
          %p218 = pneg %p39
        $region22: #{tpu_custom_call.1} parent=19 // pred_check_branch
          %220 = sbr.rel (%p218) target = $region24
        $region23: #{tpu_custom_call.1} parent=19 // pred_region
          %p221 = scmp.lt.s32.totalorder %s19, 1
          %s222 = scalar_select %p221, %s19, 1
          %s223 = smul.addr %s222, 18
          %s224 = smul.addr %s223, 4
          %s225 = scalar_lea.vmem %s0, %s224
        $region24: #{tpu_custom_call.1} parent=19 // pred_fallthru
          _
        // Predicated region
        $region25: #{tpu_custom_call.1} parent=19 // pred_check
          %p226 = pneg %p65
        $region26: #{tpu_custom_call.1} parent=19 // pred_check_branch
          %228 = sbr.rel (%p226) target = $region28
        $region27: #{tpu_custom_call.1} parent=19 // pred_region
          %p229 = scmp.lt.s32.totalorder %s19, 1
          %s230 = scalar_select %p229, %s19, 1
          %s231 = smul.addr %s230, 18
          %s232 = smul.addr %s231, 4
          %s233 = scalar_lea.vmem %s1, %s232
        $region28: #{tpu_custom_call.1} parent=19 // pred_fallthru
          _
        // Predicated region
        $region29: #{tpu_custom_call.1} parent=19 // pred_check
          %p234 = pneg %p91
        $region30: #{tpu_custom_call.1} parent=19 // pred_check_branch
          %236 = sbr.rel (%p234) target = $region32
        $region31: #{tpu_custom_call.1} parent=19 // pred_region
          %p237 = scmp.lt.s32.totalorder %s19, 1
          %s238 = scalar_select %p237, %s19, 1
          %s239 = smul.addr %s238, 18
          %s240 = smul.addr %s239, 4
          %s241 = scalar_lea.vmem %s2, %s240
        $region32: #{tpu_custom_call.1} parent=19 // pred_fallthru
          _
        // Predicated region
        $region33: #{tpu_custom_call.1} parent=19 // pred_check
          %p242 = pneg %p117
        $region34: #{tpu_custom_call.1} parent=19 // pred_check_branch
          %244 = sbr.rel (%p242) target = $region36
        $region35: #{tpu_custom_call.1} parent=19 // pred_region
          %p245 = scmp.lt.s32.totalorder %s19, 1
          %s246 = scalar_select %p245, %s19, 1
          %s247 = smul.addr %s246, 18
          %s248 = smul.addr %s247, 4
          %s249 = scalar_lea.vmem %s3, %s248
        $region36: #{tpu_custom_call.1} parent=19 // pred_fallthru
          _
      $region20: #{tpu_custom_call.1} parent=5 // pred_fallthru
        _
      %p250 = scmp.le.s32.totalorder 1, %s19
      %p251 = scmp.lt.s32.totalorder %s19, 3
      %p252 = pnand %p250, %p251
      %p253 = pneg %p252
      // Predicated region
      $region37: #{tpu_custom_call.1} parent=5 // pred_check
        _
      $region38: #{tpu_custom_call.1} parent=5 // pred_check_branch
        %255 = sbr.rel (%p252) target = $region40
      $region39: #{tpu_custom_call.1} parent=5 // pred_region
        %s256 = ssub.s32 %s19, 1
        %p257 = scmp.lt.s32.totalorder %s24, 1
        %s258 = scalar_select %p257, %s24, 1
        %s259 = smul.addr %s258, 18
        %s260 = smul.addr %s259, 4
        %s261 = scalar_lea.vmem %s0, %s260
        %p262 = pneg %p45
        %p263 = pneg %p42
        %p264 = scmp.lt.s32.totalorder %s24, 1
        %s265 = scalar_select %p264, %s24, 1
        %s266 = smul.addr %s265, 18
        %s267 = smul.addr %s266, 4
        %s268 = scalar_lea.vmem %s1, %s267
        %p269 = pneg %p71
        %p270 = pneg %p68
        %p271 = scmp.lt.s32.totalorder %s24, 1
        %s272 = scalar_select %p271, %s24, 1
        %s273 = smul.addr %s272, 18
        %s274 = smul.addr %s273, 4
        %s275 = scalar_lea.vmem %s2, %s274
        %p276 = pneg %p97
        %p277 = pneg %p94
        %p278 = scmp.lt.s32.totalorder %s24, 1
        %s279 = scalar_select %p278, %s24, 1
        %s280 = smul.addr %s279, 18
        %s281 = smul.addr %s280, 4
        %s282 = scalar_lea.vmem %s3, %s281
        %p283 = pneg %p123
        %p284 = pneg %p120
        %p285 = pneg %p144
        %p286 = pneg %p141
        %p287 = pneg %p170
        %p288 = pneg %p167
        %s289 = sand.u32 %s157, 1
        %s290 = scalar_lea.sflag [#allocation3], %s289
        %s291 = sand.u32 %s157, 1
        %s292 = smul.addr %s291, 32
        %s293 = scalar_lea.vmem [#allocation2], %s292
        %p294 = pneg %p196
        %p295 = pneg %p193
        %s296 = sand.u32 %s183, 1
        %s297 = scalar_lea.sflag [#allocation5], %s296
        %s298 = sand.u32 %s183, 1
        %s299 = smul.addr %s298, 8
        %s300 = scalar_lea.vmem [#allocation4], %s299
        %p301 = scmp.lt.s32.totalorder %s24, 1
        %s302 = scalar_select %p301, %s24, 1
        %s303 = smul.addr %s302, 18
        %s304 = smul.addr %s303, 4
        %s305 = scalar_lea.vmem %s0, %s304
        %p306 = scmp.lt.s32.totalorder %s24, 1
        %s307 = scalar_select %p306, %s24, 1
        %s308 = smul.addr %s307, 18
        %s309 = smul.addr %s308, 4
        %s310 = scalar_lea.vmem %s1, %s309
        %p311 = scmp.lt.s32.totalorder %s24, 1
        %s312 = scalar_select %p311, %s24, 1
        %s313 = smul.addr %s312, 18
        %s314 = smul.addr %s313, 4
        %s315 = scalar_lea.vmem %s2, %s314
        %p316 = scmp.lt.s32.totalorder %s24, 1
        %s317 = scalar_select %p316, %s24, 1
        %s318 = smul.addr %s317, 18
        %s319 = smul.addr %s318, 4
        %s320 = scalar_lea.vmem %s3, %s319
        %s321 = smul.u32 8, %s24
        %v323 = vld [vmem:[%s305] sm:$0xf]
        %v324 = vld [vmem:[%s305 + $0x8] sm:$0xf]
        %v325 = vld [vmem:[%s305 + $0x10] sm:$0xf]
        %v326 = vld [vmem:[%s305 + $0x18] sm:$0xf]
        %v327 = vld [vmem:[%s305 + $0x20] sm:$0xf]
        %v328 = vld [vmem:[%s305 + $0x28] sm:$0xf]
        %v329 = vld [vmem:[%s305 + $0x30] sm:$0xf]
        %v330 = vld [vmem:[%s305 + $0x38] sm:$0xf]
        %v331 = vld [vmem:[%s4] sm:$0x3]
        %v332 = vld [vmem:[%s310] sm:$0xf]
        %v333 = vld [vmem:[%s310 + $0x8] sm:$0xf]
        %v334 = vld [vmem:[%s310 + $0x10] sm:$0xf]
        %v335 = vld [vmem:[%s310 + $0x18] sm:$0xf]
        %v336 = vld [vmem:[%s310 + $0x20] sm:$0xf]
        %v337 = vld [vmem:[%s310 + $0x28] sm:$0xf]
        %v338 = vld [vmem:[%s310 + $0x30] sm:$0xf]
        %v339 = vld [vmem:[%s310 + $0x38] sm:$0xf]
        %s340 = scalar_lea.vmem %s4, 2
        %v341 = vld [vmem:[%s340] sm:$0x3]
        %v350 = vunpack.c.l.b16 %v332
        %v351 = vunpack.c.l.b16 %v333
        %v352 = vunpack.c.l.b16 %v334
        %v353 = vunpack.c.l.b16 %v335
        %v354 = vunpack.c.l.b16 %v336
        %v355 = vunpack.c.l.b16 %v337
        %v356 = vunpack.c.l.b16 %v338
        %v357 = vunpack.c.l.b16 %v339
        %v358 = vpack.c.b16 %v351, %v350
        %v359 = vpack.c.b16 %v353, %v352
        %v360 = vpack.c.b16 %v355, %v354
        %v361 = vpack.c.b16 %v357, %v356
        %vm362 = vcmask 31744
        %v364 = vsel %vm362, %v358, 0
        %v367 = vsel %vm362, %v359, 0
        %v370 = vsel %vm362, %v360, 0
        %v373 = vsel %vm362, %v361, 0
        %vm375 = vcmask 1041408
        %v377 = vsel %vm375, %v341, 0
        %379 = vmatprep.subr.bf16.mxu0 0
        %380 = vmatpush1.bf16.msra.mxu0 %v377
        %381 = vmatprep.subr.bf16.mxu0 0
        %382 = vmatpush1.bf16.msra.mxu0 0
        %383 = vmatprep.subr.bf16.mxu0 0
        %384 = vmatpush1.bf16.msra.mxu0 0
        %385 = vmatprep.subr.bf16.mxu0 0
        %386 = vmatpush1.bf16.msra.mxu0 0
        %387 = vmatprep.subr.bf16.mxu0 0
        %388 = vmatpush1.bf16.msra.mxu0 0
        %389 = vmatprep.subr.bf16.mxu0 0
        %390 = vmatpush1.bf16.msra.mxu0 0
        %391 = vmatprep.subr.bf16.mxu0 0
        %392 = vmatpush1.bf16.msra.mxu0 0
        %393 = vmatprep.subr.bf16.mxu0 0
        %394 = vmatpush1.bf16.msra.mxu0 0
        %395 = vmatprep.subr.bf16.mxu0 0
        %396 = vmatpush1.bf16.msra.mxu0 0
        %397 = vmatprep.subr.bf16.mxu0 0
        %398 = vmatpush1.bf16.msra.mxu0 0
        %399 = vmatprep.subr.bf16.mxu0 0
        %400 = vmatpush1.bf16.msra.mxu0 0
        %401 = vmatprep.subr.bf16.mxu0 0
        %402 = vmatpush1.bf16.msra.mxu0 0
        %403 = vmatprep.subr.bf16.mxu0 0
        %404 = vmatpush1.bf16.msra.mxu0 0
        %405 = vmatprep.subr.bf16.mxu0 0
        %406 = vmatpush1.bf16.msra.mxu0 0
        %407 = vmatprep.subr.bf16.mxu0 0
        %408 = vmatpush1.bf16.msra.mxu0 0
        %409 = vmatprep.subr.bf16.mxu0 0
        %410 = vmatpush1.bf16.msra.mxu0 0
        %411 = vmatprep.mubr.bf16.mxu0 0
        %412 = vmatmul.mubr.bf16.gmra.mrb[0].mxu0 %v364
        %v413 = vpop.f32.mrb[0].mxu0
        %v414 = vadd.f32 0.0, %v413
        %v415 = vpop.f32.mrb[0].mxu0
        %v416 = vpop.f32.mrb[0].mxu0
        %v417 = vadd.f32 0.0, %v416
        %v418 = vpop.f32.mrb[0].mxu0
        %419 = vmatprep.mubr.bf16.mxu0 0
        %420 = vmatmul.mubr.bf16.gmra.mrb[0].mxu0 %v367
        %v421 = vpop.f32.mrb[0].mxu0
        %v422 = vadd.f32 0.0, %v421
        %v423 = vpop.f32.mrb[0].mxu0
        %v424 = vpop.f32.mrb[0].mxu0
        %v425 = vadd.f32 0.0, %v424
        %v426 = vpop.f32.mrb[0].mxu0
        %427 = vmatprep.mubr.bf16.mxu0 0
        %428 = vmatmul.mubr.bf16.gmra.mrb[0].mxu0 %v370
        %v429 = vpop.f32.mrb[0].mxu0
        %v430 = vadd.f32 0.0, %v429
        %v431 = vpop.f32.mrb[0].mxu0
        %v432 = vpop.f32.mrb[0].mxu0
        %v433 = vadd.f32 0.0, %v432
        %v434 = vpop.f32.mrb[0].mxu0
        %435 = vmatprep.mubr.bf16.mxu0 0
        %436 = vmatmul.mubr.bf16.gmra.mrb[0].mxu0 %v373
        %v437 = vpop.f32.mrb[0].mxu0
        %v438 = vadd.f32 0.0, %v437
        %v439 = vpop.f32.mrb[0].mxu0
        %v440 = vpop.f32.mrb[0].mxu0
        %v441 = vadd.f32 0.0, %v440
        %v442 = vpop.f32.mrb[0].mxu0
        %443 = vdwg.mxu0
        %v452 = vunpack.c.l.b16 %v323
        %v453 = vunpack.c.l.b16 %v324
        %v454 = vunpack.c.l.b16 %v325
        %v455 = vunpack.c.l.b16 %v326
        %v456 = vunpack.c.l.b16 %v327
        %v457 = vunpack.c.l.b16 %v328
        %v458 = vunpack.c.l.b16 %v329
        %v459 = vunpack.c.l.b16 %v330
        %v460 = vpack.c.b16 %v453, %v452
        %v461 = vpack.c.b16 %v455, %v454
        %v462 = vpack.c.b16 %v457, %v456
        %v463 = vpack.c.b16 %v459, %v458
        %v465 = vsel %vm362, %v460, 0
        %v468 = vsel %vm362, %v461, 0
        %v471 = vsel %vm362, %v462, 0
        %v474 = vsel %vm362, %v463, 0
        %v477 = vsel %vm375, %v331, 0
        %479 = vmatprep.subr.bf16.mxu0 0
        %480 = vmatpush1.bf16.msra.mxu0 %v477
        %481 = vmatprep.subr.bf16.mxu0 0
        %482 = vmatpush1.bf16.msra.mxu0 0
        %483 = vmatprep.subr.bf16.mxu0 0
        %484 = vmatpush1.bf16.msra.mxu0 0
        %485 = vmatprep.subr.bf16.mxu0 0
        %486 = vmatpush1.bf16.msra.mxu0 0
        %487 = vmatprep.subr.bf16.mxu0 0
        %488 = vmatpush1.bf16.msra.mxu0 0
        %489 = vmatprep.subr.bf16.mxu0 0
        %490 = vmatpush1.bf16.msra.mxu0 0
        %491 = vmatprep.subr.bf16.mxu0 0
        %492 = vmatpush1.bf16.msra.mxu0 0
        %493 = vmatprep.subr.bf16.mxu0 0
        %494 = vmatpush1.bf16.msra.mxu0 0
        %495 = vmatprep.subr.bf16.mxu0 0
        %496 = vmatpush1.bf16.msra.mxu0 0
        %497 = vmatprep.subr.bf16.mxu0 0
        %498 = vmatpush1.bf16.msra.mxu0 0
        %499 = vmatprep.subr.bf16.mxu0 0
        %500 = vmatpush1.bf16.msra.mxu0 0
        %501 = vmatprep.subr.bf16.mxu0 0
        %502 = vmatpush1.bf16.msra.mxu0 0
        %503 = vmatprep.subr.bf16.mxu0 0
        %504 = vmatpush1.bf16.msra.mxu0 0
        %505 = vmatprep.subr.bf16.mxu0 0
        %506 = vmatpush1.bf16.msra.mxu0 0
        %507 = vmatprep.subr.bf16.mxu0 0
        %508 = vmatpush1.bf16.msra.mxu0 0
        %509 = vmatprep.subr.bf16.mxu0 0
        %510 = vmatpush1.bf16.msra.mxu0 0
        %511 = vmatprep.mubr.bf16.mxu0 0
        %512 = vmatmul.mubr.bf16.gmra.mrb[0].mxu0 %v465
        %v513 = vpop.f32.mrb[0].mxu0
        %v514 = vadd.f32 %v414, %v513
        %v515 = vpop.f32.mrb[0].mxu0
        %v516 = vpop.f32.mrb[0].mxu0
        %v517 = vadd.f32 %v417, %v516
        %v518 = vpop.f32.mrb[0].mxu0
        %519 = vmatprep.mubr.bf16.mxu0 0
        %520 = vmatmul.mubr.bf16.gmra.mrb[0].mxu0 %v468
        %v521 = vpop.f32.mrb[0].mxu0
        %v522 = vadd.f32 %v422, %v521
        %v523 = vpop.f32.mrb[0].mxu0
        %v524 = vpop.f32.mrb[0].mxu0
        %v525 = vadd.f32 %v425, %v524
        %v526 = vpop.f32.mrb[0].mxu0
        %527 = vmatprep.mubr.bf16.mxu0 0
        %528 = vmatmul.mubr.bf16.gmra.mrb[0].mxu0 %v471
        %v529 = vpop.f32.mrb[0].mxu0
        %v530 = vadd.f32 %v430, %v529
        %v531 = vpop.f32.mrb[0].mxu0
        %v532 = vpop.f32.mrb[0].mxu0
        %v533 = vadd.f32 %v433, %v532
        %v534 = vpop.f32.mrb[0].mxu0
        %535 = vmatprep.mubr.bf16.mxu0 0
        %536 = vmatmul.mubr.bf16.gmra.mrb[0].mxu0 %v474
        %v537 = vpop.f32.mrb[0].mxu0
        %v538 = vadd.f32 %v438, %v537
        %v539 = vpop.f32.mrb[0].mxu0
        %v540 = vpop.f32.mrb[0].mxu0
        %v541 = vadd.f32 %v441, %v540
        %v542 = vpop.f32.mrb[0].mxu0
        %543 = vdwg.mxu0
        %v544 = vld [vmem:[%s305] sm:$0xf]
        %v545 = vld [vmem:[%s305 + $0x4] sm:$0x1]
        %v546 = vld [vmem:[%s305 + $0x8] sm:$0xf]
        %v547 = vld [vmem:[%s305 + $0xc] sm:$0x1]
        %v548 = vld [vmem:[%s305 + $0x10] sm:$0xf]
        %v549 = vld [vmem:[%s305 + $0x14] sm:$0x1]
        %v550 = vld [vmem:[%s305 + $0x18] sm:$0xf]
        %v551 = vld [vmem:[%s305 + $0x1c] sm:$0x1]
        %v552 = vld [vmem:[%s305 + $0x20] sm:$0xf]
        %v553 = vld [vmem:[%s305 + $0x24] sm:$0x1]
        %v554 = vld [vmem:[%s305 + $0x28] sm:$0xf]
        %v555 = vld [vmem:[%s305 + $0x2c] sm:$0x1]
        %v556 = vld [vmem:[%s305 + $0x30] sm:$0xf]
        %v557 = vld [vmem:[%s305 + $0x34] sm:$0x1]
        %v558 = vld [vmem:[%s305 + $0x38] sm:$0xf]
        %v559 = vld [vmem:[%s305 + $0x3c] sm:$0x1]
        %vm560 = vsmask.f32 3328
        %vm561 = vsmask.f32 7440
        %vm562 = vmor %vm560, %vm561
        %v564 = vshrl.u32 %v544, 16
        %v566 = vrot.slane %v564, 4
        %v567 = vshll.u32 %v544, 16
        %v569 = vrot.slane %v567, 5
        %v570 = vor.u32 %v566, %v569
        %v571 = vrot.slane %v570, 4
        %v573 = vshll.u32 %v545, 16
        %v575 = vrot.slane %v573, 5
        %v576 = vsel %vm562, %v571, %v575
        %v578 = vshrl.u32 %v546, 16
        %v580 = vrot.slane %v578, 4
        %v581 = vshll.u32 %v546, 16
        %v583 = vrot.slane %v581, 5
        %v584 = vor.u32 %v580, %v583
        %v585 = vrot.slane %v584, 4
        %v587 = vshll.u32 %v547, 16
        %v589 = vrot.slane %v587, 5
        %v590 = vsel %vm562, %v585, %v589
        %v592 = vshrl.u32 %v548, 16
        %v594 = vrot.slane %v592, 4
        %v595 = vshll.u32 %v548, 16
        %v597 = vrot.slane %v595, 5
        %v598 = vor.u32 %v594, %v597
        %v599 = vrot.slane %v598, 4
        %v601 = vshll.u32 %v549, 16
        %v603 = vrot.slane %v601, 5
        %v604 = vsel %vm562, %v599, %v603
        %v606 = vshrl.u32 %v550, 16
        %v608 = vrot.slane %v606, 4
        %v609 = vshll.u32 %v550, 16
        %v611 = vrot.slane %v609, 5
        %v612 = vor.u32 %v608, %v611
        %v613 = vrot.slane %v612, 4
        %v615 = vshll.u32 %v551, 16
        %v617 = vrot.slane %v615, 5
        %v618 = vsel %vm562, %v613, %v617
        %v620 = vshrl.u32 %v552, 16
        %v622 = vrot.slane %v620, 4
        %v623 = vshll.u32 %v552, 16
        %v625 = vrot.slane %v623, 5
        %v626 = vor.u32 %v622, %v625
        %v627 = vrot.slane %v626, 4
        %v629 = vshll.u32 %v553, 16
        %v631 = vrot.slane %v629, 5
        %v632 = vsel %vm562, %v627, %v631
        %v634 = vshrl.u32 %v554, 16
        %v636 = vrot.slane %v634, 4
        %v637 = vshll.u32 %v554, 16
        %v639 = vrot.slane %v637, 5
        %v640 = vor.u32 %v636, %v639
        %v641 = vrot.slane %v640, 4
        %v643 = vshll.u32 %v555, 16
        %v645 = vrot.slane %v643, 5
        %v646 = vsel %vm562, %v641, %v645
        %v648 = vshrl.u32 %v556, 16
        %v650 = vrot.slane %v648, 4
        %v651 = vshll.u32 %v556, 16
        %v653 = vrot.slane %v651, 5
        %v654 = vor.u32 %v650, %v653
        %v655 = vrot.slane %v654, 4
        %v657 = vshll.u32 %v557, 16
        %v659 = vrot.slane %v657, 5
        %v660 = vsel %vm562, %v655, %v659
        %v662 = vshrl.u32 %v558, 16
        %v664 = vrot.slane %v662, 4
        %v665 = vshll.u32 %v558, 16
        %v667 = vrot.slane %v665, 5
        %v668 = vor.u32 %v664, %v667
        %v669 = vrot.slane %v668, 4
        %v671 = vshll.u32 %v559, 16
        %v673 = vrot.slane %v671, 5
        %v674 = vsel %vm562, %v669, %v673
        %s675 = scalar_lea.vmem %s4, 4
        %v676 = vld [vmem:[%s675] sm:$0x3]
        %v677 = vunpack.c.l.b16 %v576
        %v678 = vunpack.c.l.b16 %v590
        %v679 = vunpack.c.l.b16 %v604
        %v680 = vunpack.c.l.b16 %v618
        %v681 = vunpack.c.l.b16 %v632
        %v682 = vunpack.c.l.b16 %v646
        %v683 = vunpack.c.l.b16 %v660
        %v684 = vunpack.c.l.b16 %v674
        %v685 = vpack.c.b16 %v678, %v677
        %v686 = vpack.c.b16 %v680, %v679
        %v687 = vpack.c.b16 %v682, %v681
        %v688 = vpack.c.b16 %v684, %v683
        %v690 = vsel %vm362, %v685, 0
        %v693 = vsel %vm362, %v686, 0
        %v696 = vsel %vm362, %v687, 0
        %v699 = vsel %vm362, %v688, 0
        %v702 = vsel %vm375, %v676, 0
        %704 = vmatprep.subr.bf16.mxu0 0
        %705 = vmatpush1.bf16.msra.mxu0 %v702
        %706 = vmatprep.subr.bf16.mxu0 0
        %707 = vmatpush1.bf16.msra.mxu0 0
        %708 = vmatprep.subr.bf16.mxu0 0
        %709 = vmatpush1.bf16.msra.mxu0 0
        %710 = vmatprep.subr.bf16.mxu0 0
        %711 = vmatpush1.bf16.msra.mxu0 0
        %712 = vmatprep.subr.bf16.mxu0 0
        %713 = vmatpush1.bf16.msra.mxu0 0
        %714 = vmatprep.subr.bf16.mxu0 0
        %715 = vmatpush1.bf16.msra.mxu0 0
        %716 = vmatprep.subr.bf16.mxu0 0
        %717 = vmatpush1.bf16.msra.mxu0 0
        %718 = vmatprep.subr.bf16.mxu0 0
        %719 = vmatpush1.bf16.msra.mxu0 0
        %720 = vmatprep.subr.bf16.mxu0 0
        %721 = vmatpush1.bf16.msra.mxu0 0
        %722 = vmatprep.subr.bf16.mxu0 0
        %723 = vmatpush1.bf16.msra.mxu0 0
        %724 = vmatprep.subr.bf16.mxu0 0
        %725 = vmatpush1.bf16.msra.mxu0 0
        %726 = vmatprep.subr.bf16.mxu0 0
        %727 = vmatpush1.bf16.msra.mxu0 0
        %728 = vmatprep.subr.bf16.mxu0 0
        %729 = vmatpush1.bf16.msra.mxu0 0
        %730 = vmatprep.subr.bf16.mxu0 0
        %731 = vmatpush1.bf16.msra.mxu0 0
        %732 = vmatprep.subr.bf16.mxu0 0
        %733 = vmatpush1.bf16.msra.mxu0 0
        %734 = vmatprep.subr.bf16.mxu0 0
        %735 = vmatpush1.bf16.msra.mxu0 0
        %736 = vmatprep.mubr.bf16.mxu0 0
        %737 = vmatmul.mubr.bf16.gmra.mrb[0].mxu0 %v690
        %v738 = vpop.f32.mrb[0].mxu0
        %v739 = vadd.f32 0.0, %v738
        %v740 = vpop.f32.mrb[0].mxu0
        %v741 = vpop.f32.mrb[0].mxu0
        %v742 = vadd.f32 0.0, %v741
        %v743 = vpop.f32.mrb[0].mxu0
        %744 = vmatprep.mubr.bf16.mxu0 0
        %745 = vmatmul.mubr.bf16.gmra.mrb[0].mxu0 %v693
        %v746 = vpop.f32.mrb[0].mxu0
        %v747 = vadd.f32 0.0, %v746
        %v748 = vpop.f32.mrb[0].mxu0
        %v749 = vpop.f32.mrb[0].mxu0
        %v750 = vadd.f32 0.0, %v749
        %v751 = vpop.f32.mrb[0].mxu0
        %752 = vmatprep.mubr.bf16.mxu0 0
        %753 = vmatmul.mubr.bf16.gmra.mrb[0].mxu0 %v696
        %v754 = vpop.f32.mrb[0].mxu0
        %v755 = vadd.f32 0.0, %v754
        %v756 = vpop.f32.mrb[0].mxu0
        %v757 = vpop.f32.mrb[0].mxu0
        %v758 = vadd.f32 0.0, %v757
        %v759 = vpop.f32.mrb[0].mxu0
        %760 = vmatprep.mubr.bf16.mxu0 0
        %761 = vmatmul.mubr.bf16.gmra.mrb[0].mxu0 %v699
        %v762 = vpop.f32.mrb[0].mxu0
        %v763 = vadd.f32 0.0, %v762
        %v764 = vpop.f32.mrb[0].mxu0
        %v765 = vpop.f32.mrb[0].mxu0
        %v766 = vadd.f32 0.0, %v765
        %v767 = vpop.f32.mrb[0].mxu0
        %768 = vdwg.mxu0
        %v769 = vadd.f32 %v514, %v739
        %v770 = vadd.f32 %v517, %v742
        %v771 = vadd.f32 %v522, %v747
        %v772 = vadd.f32 %v525, %v750
        %v773 = vadd.f32 %v530, %v755
        %v774 = vadd.f32 %v533, %v758
        %v775 = vadd.f32 %v538, %v763
        %v776 = vadd.f32 %v541, %v766
        %v777 = vld [vmem:[%s315] sm:$0xf]
        %v778 = vld [vmem:[%s315 + $0x8] sm:$0xf]
        %v779 = vld [vmem:[%s315 + $0x10] sm:$0xf]
        %v780 = vld [vmem:[%s315 + $0x18] sm:$0xf]
        %v781 = vld [vmem:[%s315 + $0x20] sm:$0xf]
        %v782 = vld [vmem:[%s315 + $0x28] sm:$0xf]
        %v783 = vld [vmem:[%s315 + $0x30] sm:$0xf]
        %v784 = vld [vmem:[%s315 + $0x38] sm:$0xf]
        %s785 = scalar_lea.vmem %s4, 6
        %v786 = vld [vmem:[%s785] sm:$0x3]
        %v795 = vunpack.c.l.b16 %v777
        %v796 = vunpack.c.l.b16 %v778
        %v797 = vunpack.c.l.b16 %v779
        %v798 = vunpack.c.l.b16 %v780
        %v799 = vunpack.c.l.b16 %v781
        %v800 = vunpack.c.l.b16 %v782
        %v801 = vunpack.c.l.b16 %v783
        %v802 = vunpack.c.l.b16 %v784
        %v803 = vpack.c.b16 %v796, %v795
        %v804 = vpack.c.b16 %v798, %v797
        %v805 = vpack.c.b16 %v800, %v799
        %v806 = vpack.c.b16 %v802, %v801
        %v808 = vsel %vm362, %v803, 0
        %v811 = vsel %vm362, %v804, 0
        %v814 = vsel %vm362, %v805, 0
        %v817 = vsel %vm362, %v806, 0
        %v820 = vsel %vm375, %v786, 0
        %822 = vmatprep.subr.bf16.mxu0 0
        %823 = vmatpush1.bf16.msra.mxu0 %v820
        %824 = vmatprep.subr.bf16.mxu0 0
        %825 = vmatpush1.bf16.msra.mxu0 0
        %826 = vmatprep.subr.bf16.mxu0 0
        %827 = vmatpush1.bf16.msra.mxu0 0
        %828 = vmatprep.subr.bf16.mxu0 0
        %829 = vmatpush1.bf16.msra.mxu0 0
        %830 = vmatprep.subr.bf16.mxu0 0
        %831 = vmatpush1.bf16.msra.mxu0 0
        %832 = vmatprep.subr.bf16.mxu0 0
        %833 = vmatpush1.bf16.msra.mxu0 0
        %834 = vmatprep.subr.bf16.mxu0 0
        %835 = vmatpush1.bf16.msra.mxu0 0
        %836 = vmatprep.subr.bf16.mxu0 0
        %837 = vmatpush1.bf16.msra.mxu0 0
        %838 = vmatprep.subr.bf16.mxu0 0
        %839 = vmatpush1.bf16.msra.mxu0 0
        %840 = vmatprep.subr.bf16.mxu0 0
        %841 = vmatpush1.bf16.msra.mxu0 0
        %842 = vmatprep.subr.bf16.mxu0 0
        %843 = vmatpush1.bf16.msra.mxu0 0
        %844 = vmatprep.subr.bf16.mxu0 0
        %845 = vmatpush1.bf16.msra.mxu0 0
        %846 = vmatprep.subr.bf16.mxu0 0
        %847 = vmatpush1.bf16.msra.mxu0 0
        %848 = vmatprep.subr.bf16.mxu0 0
        %849 = vmatpush1.bf16.msra.mxu0 0
        %850 = vmatprep.subr.bf16.mxu0 0
        %851 = vmatpush1.bf16.msra.mxu0 0
        %852 = vmatprep.subr.bf16.mxu0 0
        %853 = vmatpush1.bf16.msra.mxu0 0
        %854 = vmatprep.mubr.bf16.mxu0 0
        %855 = vmatmul.mubr.bf16.gmra.mrb[0].mxu0 %v808
        %v856 = vpop.f32.mrb[0].mxu0
        %v857 = vadd.f32 0.0, %v856
        %v858 = vpop.f32.mrb[0].mxu0
        %v859 = vpop.f32.mrb[0].mxu0
        %v860 = vadd.f32 0.0, %v859
        %v861 = vpop.f32.mrb[0].mxu0
        %862 = vmatprep.mubr.bf16.mxu0 0
        %863 = vmatmul.mubr.bf16.gmra.mrb[0].mxu0 %v811
        %v864 = vpop.f32.mrb[0].mxu0
        %v865 = vadd.f32 0.0, %v864
        %v866 = vpop.f32.mrb[0].mxu0
        %v867 = vpop.f32.mrb[0].mxu0
        %v868 = vadd.f32 0.0, %v867
        %v869 = vpop.f32.mrb[0].mxu0
        %870 = vmatprep.mubr.bf16.mxu0 0
        %871 = vmatmul.mubr.bf16.gmra.mrb[0].mxu0 %v814
        %v872 = vpop.f32.mrb[0].mxu0
        %v873 = vadd.f32 0.0, %v872
        %v874 = vpop.f32.mrb[0].mxu0
        %v875 = vpop.f32.mrb[0].mxu0
        %v876 = vadd.f32 0.0, %v875
        %v877 = vpop.f32.mrb[0].mxu0
        %878 = vmatprep.mubr.bf16.mxu0 0
        %879 = vmatmul.mubr.bf16.gmra.mrb[0].mxu0 %v817
        %v880 = vpop.f32.mrb[0].mxu0
        %v881 = vadd.f32 0.0, %v880
        %v882 = vpop.f32.mrb[0].mxu0
        %v883 = vpop.f32.mrb[0].mxu0
        %v884 = vadd.f32 0.0, %v883
        %v885 = vpop.f32.mrb[0].mxu0
        %886 = vdwg.mxu0
        %v887 = vadd.f32 %v769, %v857
        %v888 = vadd.f32 %v770, %v860
        %v889 = vadd.f32 %v771, %v865
        %v890 = vadd.f32 %v772, %v868
        %v891 = vadd.f32 %v773, %v873
        %v892 = vadd.f32 %v774, %v876
        %v893 = vadd.f32 %v775, %v881
        %v894 = vadd.f32 %v776, %v884
        %v895 = vld [vmem:[%s320] sm:$0xf]
        %v896 = vld [vmem:[%s320 + $0x8] sm:$0xf]
        %v897 = vld [vmem:[%s320 + $0x10] sm:$0xf]
        %v898 = vld [vmem:[%s320 + $0x18] sm:$0xf]
        %v899 = vld [vmem:[%s320 + $0x20] sm:$0xf]
        %v900 = vld [vmem:[%s320 + $0x28] sm:$0xf]
        %v901 = vld [vmem:[%s320 + $0x30] sm:$0xf]
        %v902 = vld [vmem:[%s320 + $0x38] sm:$0xf]
        %s903 = scalar_lea.vmem %s4, 8
        %v904 = vld [vmem:[%s903] sm:$0x3]
        %v913 = vunpack.c.l.b16 %v895
        %v914 = vunpack.c.l.b16 %v896
        %v915 = vunpack.c.l.b16 %v897
        %v916 = vunpack.c.l.b16 %v898
        %v917 = vunpack.c.l.b16 %v899
        %v918 = vunpack.c.l.b16 %v900
        %v919 = vunpack.c.l.b16 %v901
        %v920 = vunpack.c.l.b16 %v902
        %v921 = vpack.c.b16 %v914, %v913
        %v922 = vpack.c.b16 %v916, %v915
        %v923 = vpack.c.b16 %v918, %v917
        %v924 = vpack.c.b16 %v920, %v919
        %v926 = vsel %vm362, %v921, 0
        %v929 = vsel %vm362, %v922, 0
        %v932 = vsel %vm362, %v923, 0
        %v935 = vsel %vm362, %v924, 0
        %v938 = vsel %vm375, %v904, 0
        %940 = vmatprep.subr.bf16.mxu0 0
        %941 = vmatpush1.bf16.msra.mxu0 %v938
        %942 = vmatprep.subr.bf16.mxu0 0
        %943 = vmatpush1.bf16.msra.mxu0 0
        %944 = vmatprep.subr.bf16.mxu0 0
        %945 = vmatpush1.bf16.msra.mxu0 0
        %946 = vmatprep.subr.bf16.mxu0 0
        %947 = vmatpush1.bf16.msra.mxu0 0
        %948 = vmatprep.subr.bf16.mxu0 0
        %949 = vmatpush1.bf16.msra.mxu0 0
        %950 = vmatprep.subr.bf16.mxu0 0
        %951 = vmatpush1.bf16.msra.mxu0 0
        %952 = vmatprep.subr.bf16.mxu0 0
        %953 = vmatpush1.bf16.msra.mxu0 0
        %954 = vmatprep.subr.bf16.mxu0 0
        %955 = vmatpush1.bf16.msra.mxu0 0
        %956 = vmatprep.subr.bf16.mxu0 0
        %957 = vmatpush1.bf16.msra.mxu0 0
        %958 = vmatprep.subr.bf16.mxu0 0
        %959 = vmatpush1.bf16.msra.mxu0 0
        %960 = vmatprep.subr.bf16.mxu0 0
        %961 = vmatpush1.bf16.msra.mxu0 0
        %962 = vmatprep.subr.bf16.mxu0 0
        %963 = vmatpush1.bf16.msra.mxu0 0
        %964 = vmatprep.subr.bf16.mxu0 0
        %965 = vmatpush1.bf16.msra.mxu0 0
        %966 = vmatprep.subr.bf16.mxu0 0
        %967 = vmatpush1.bf16.msra.mxu0 0
        %968 = vmatprep.subr.bf16.mxu0 0
        %969 = vmatpush1.bf16.msra.mxu0 0
        %970 = vmatprep.subr.bf16.mxu0 0
        %971 = vmatpush1.bf16.msra.mxu0 0
        %972 = vmatprep.mubr.bf16.mxu0 0
        %973 = vmatmul.mubr.bf16.gmra.mrb[0].mxu0 %v926
        %v974 = vpop.f32.mrb[0].mxu0
        %v975 = vadd.f32 0.0, %v974
        %v976 = vpop.f32.mrb[0].mxu0
        %v977 = vpop.f32.mrb[0].mxu0
        %v978 = vadd.f32 0.0, %v977
        %v979 = vpop.f32.mrb[0].mxu0
        %980 = vmatprep.mubr.bf16.mxu0 0
        %981 = vmatmul.mubr.bf16.gmra.mrb[0].mxu0 %v929
        %v982 = vpop.f32.mrb[0].mxu0
        %v983 = vadd.f32 0.0, %v982
        %v984 = vpop.f32.mrb[0].mxu0
        %v985 = vpop.f32.mrb[0].mxu0
        %v986 = vadd.f32 0.0, %v985
        %v987 = vpop.f32.mrb[0].mxu0
        %988 = vmatprep.mubr.bf16.mxu0 0
        %989 = vmatmul.mubr.bf16.gmra.mrb[0].mxu0 %v932
        %v990 = vpop.f32.mrb[0].mxu0
        %v991 = vadd.f32 0.0, %v990
        %v992 = vpop.f32.mrb[0].mxu0
        %v993 = vpop.f32.mrb[0].mxu0
        %v994 = vadd.f32 0.0, %v993
        %v995 = vpop.f32.mrb[0].mxu0
        %996 = vmatprep.mubr.bf16.mxu0 0
        %997 = vmatmul.mubr.bf16.gmra.mrb[0].mxu0 %v935
        %v998 = vpop.f32.mrb[0].mxu0
        %v999 = vadd.f32 0.0, %v998
        %v1000 = vpop.f32.mrb[0].mxu0
        %v1001 = vpop.f32.mrb[0].mxu0
        %v1002 = vadd.f32 0.0, %v1001
        %v1003 = vpop.f32.mrb[0].mxu0
        %1004 = vdwg.mxu0
        %v1005 = vadd.f32 %v887, %v975
        %v1006 = vadd.f32 %v888, %v978
        %v1007 = vadd.f32 %v889, %v983
        %v1008 = vadd.f32 %v890, %v986
        %v1009 = vadd.f32 %v891, %v991
        %v1010 = vadd.f32 %v892, %v994
        %v1011 = vadd.f32 %v893, %v999
        %v1012 = vadd.f32 %v894, %v1002
        %v1013 = vld [vmem:[%s315] sm:$0xf]
        %v1014 = vld [vmem:[%s315 + $0x4] sm:$0x1]
        %v1015 = vld [vmem:[%s315 + $0x8] sm:$0xf]
        %v1016 = vld [vmem:[%s315 + $0xc] sm:$0x1]
        %v1017 = vld [vmem:[%s315 + $0x10] sm:$0xf]
        %v1018 = vld [vmem:[%s315 + $0x14] sm:$0x1]
        %v1019 = vld [vmem:[%s315 + $0x18] sm:$0xf]
        %v1020 = vld [vmem:[%s315 + $0x1c] sm:$0x1]
        %v1021 = vld [vmem:[%s315 + $0x20] sm:$0xf]
        %v1022 = vld [vmem:[%s315 + $0x24] sm:$0x1]
        %v1023 = vld [vmem:[%s315 + $0x28] sm:$0xf]
        %v1024 = vld [vmem:[%s315 + $0x2c] sm:$0x1]
        %v1025 = vld [vmem:[%s315 + $0x30] sm:$0xf]
        %v1026 = vld [vmem:[%s315 + $0x34] sm:$0x1]
        %v1027 = vld [vmem:[%s315 + $0x38] sm:$0xf]
        %v1028 = vld [vmem:[%s315 + $0x3c] sm:$0x1]
        %v1030 = vshrl.u32 %v1013, 16
        %v1032 = vrot.slane %v1030, 4
        %v1033 = vshll.u32 %v1013, 16
        %v1035 = vrot.slane %v1033, 5
        %v1036 = vor.u32 %v1032, %v1035
        %v1037 = vrot.slane %v1036, 4
        %v1039 = vshll.u32 %v1014, 16
        %v1041 = vrot.slane %v1039, 5
        %v1042 = vsel %vm562, %v1037, %v1041
        %v1044 = vshrl.u32 %v1015, 16
        %v1046 = vrot.slane %v1044, 4
        %v1047 = vshll.u32 %v1015, 16
        %v1049 = vrot.slane %v1047, 5
        %v1050 = vor.u32 %v1046, %v1049
        %v1051 = vrot.slane %v1050, 4
        %v1053 = vshll.u32 %v1016, 16
        %v1055 = vrot.slane %v1053, 5
        %v1056 = vsel %vm562, %v1051, %v1055
        %v1058 = vshrl.u32 %v1017, 16
        %v1060 = vrot.slane %v1058, 4
        %v1061 = vshll.u32 %v1017, 16
        %v1063 = vrot.slane %v1061, 5
        %v1064 = vor.u32 %v1060, %v1063
        %v1065 = vrot.slane %v1064, 4
        %v1067 = vshll.u32 %v1018, 16
        %v1069 = vrot.slane %v1067, 5
        %v1070 = vsel %vm562, %v1065, %v1069
        %v1072 = vshrl.u32 %v1019, 16
        %v1074 = vrot.slane %v1072, 4
        %v1075 = vshll.u32 %v1019, 16
        %v1077 = vrot.slane %v1075, 5
        %v1078 = vor.u32 %v1074, %v1077
        %v1079 = vrot.slane %v1078, 4
        %v1081 = vshll.u32 %v1020, 16
        %v1083 = vrot.slane %v1081, 5
        %v1084 = vsel %vm562, %v1079, %v1083
        %v1086 = vshrl.u32 %v1021, 16
        %v1088 = vrot.slane %v1086, 4
        %v1089 = vshll.u32 %v1021, 16
        %v1091 = vrot.slane %v1089, 5
        %v1092 = vor.u32 %v1088, %v1091
        %v1093 = vrot.slane %v1092, 4
        %v1095 = vshll.u32 %v1022, 16
        %v1097 = vrot.slane %v1095, 5
        %v1098 = vsel %vm562, %v1093, %v1097
        %v1100 = vshrl.u32 %v1023, 16
        %v1102 = vrot.slane %v1100, 4
        %v1103 = vshll.u32 %v1023, 16
        %v1105 = vrot.slane %v1103, 5
        %v1106 = vor.u32 %v1102, %v1105
        %v1107 = vrot.slane %v1106, 4
        %v1109 = vshll.u32 %v1024, 16
        %v1111 = vrot.slane %v1109, 5
        %v1112 = vsel %vm562, %v1107, %v1111
        %v1114 = vshrl.u32 %v1025, 16
        %v1116 = vrot.slane %v1114, 4
        %v1117 = vshll.u32 %v1025, 16
        %v1119 = vrot.slane %v1117, 5
        %v1120 = vor.u32 %v1116, %v1119
        %v1121 = vrot.slane %v1120, 4
        %v1123 = vshll.u32 %v1026, 16
        %v1125 = vrot.slane %v1123, 5
        %v1126 = vsel %vm562, %v1121, %v1125
        %v1128 = vshrl.u32 %v1027, 16
        %v1130 = vrot.slane %v1128, 4
        %v1131 = vshll.u32 %v1027, 16
        %v1133 = vrot.slane %v1131, 5
        %v1134 = vor.u32 %v1130, %v1133
        %v1135 = vrot.slane %v1134, 4
        %v1137 = vshll.u32 %v1028, 16
        %v1139 = vrot.slane %v1137, 5
        %v1140 = vsel %vm562, %v1135, %v1139
        %s1141 = scalar_lea.vmem %s4, 10
        %v1142 = vld [vmem:[%s1141] sm:$0x3]
        %v1143 = vunpack.c.l.b16 %v1042
        %v1144 = vunpack.c.l.b16 %v1056
        %v1145 = vunpack.c.l.b16 %v1070
        %v1146 = vunpack.c.l.b16 %v1084
        %v1147 = vunpack.c.l.b16 %v1098
        %v1148 = vunpack.c.l.b16 %v1112
        %v1149 = vunpack.c.l.b16 %v1126
        %v1150 = vunpack.c.l.b16 %v1140
        %v1151 = vpack.c.b16 %v1144, %v1143
        %v1152 = vpack.c.b16 %v1146, %v1145
        %v1153 = vpack.c.b16 %v1148, %v1147
        %v1154 = vpack.c.b16 %v1150, %v1149
        %v1156 = vsel %vm362, %v1151, 0
        %v1159 = vsel %vm362, %v1152, 0
        %v1162 = vsel %vm362, %v1153, 0
        %v1165 = vsel %vm362, %v1154, 0
        %v1168 = vsel %vm375, %v1142, 0
        %1170 = vmatprep.subr.bf16.mxu0 0
        %1171 = vmatpush1.bf16.msra.mxu0 %v1168
        %1172 = vmatprep.subr.bf16.mxu0 0
        %1173 = vmatpush1.bf16.msra.mxu0 0
        %1174 = vmatprep.subr.bf16.mxu0 0
        %1175 = vmatpush1.bf16.msra.mxu0 0
        %1176 = vmatprep.subr.bf16.mxu0 0
        %1177 = vmatpush1.bf16.msra.mxu0 0
        %1178 = vmatprep.subr.bf16.mxu0 0
        %1179 = vmatpush1.bf16.msra.mxu0 0
        %1180 = vmatprep.subr.bf16.mxu0 0
        %1181 = vmatpush1.bf16.msra.mxu0 0
        %1182 = vmatprep.subr.bf16.mxu0 0
        %1183 = vmatpush1.bf16.msra.mxu0 0
        %1184 = vmatprep.subr.bf16.mxu0 0
        %1185 = vmatpush1.bf16.msra.mxu0 0
        %1186 = vmatprep.subr.bf16.mxu0 0
        %1187 = vmatpush1.bf16.msra.mxu0 0
        %1188 = vmatprep.subr.bf16.mxu0 0
        %1189 = vmatpush1.bf16.msra.mxu0 0
        %1190 = vmatprep.subr.bf16.mxu0 0
        %1191 = vmatpush1.bf16.msra.mxu0 0
        %1192 = vmatprep.subr.bf16.mxu0 0
        %1193 = vmatpush1.bf16.msra.mxu0 0
        %1194 = vmatprep.subr.bf16.mxu0 0
        %1195 = vmatpush1.bf16.msra.mxu0 0
        %1196 = vmatprep.subr.bf16.mxu0 0
        %1197 = vmatpush1.bf16.msra.mxu0 0
        %1198 = vmatprep.subr.bf16.mxu0 0
        %1199 = vmatpush1.bf16.msra.mxu0 0
        %1200 = vmatprep.subr.bf16.mxu0 0
        %1201 = vmatpush1.bf16.msra.mxu0 0
        %1202 = vmatprep.mubr.bf16.mxu0 0
        %1203 = vmatmul.mubr.bf16.gmra.mrb[0].mxu0 %v1156
        %v1204 = vpop.f32.mrb[0].mxu0
        %v1205 = vadd.f32 0.0, %v1204
        %v1206 = vpop.f32.mrb[0].mxu0
        %v1207 = vpop.f32.mrb[0].mxu0
        %v1208 = vadd.f32 0.0, %v1207
        %v1209 = vpop.f32.mrb[0].mxu0
        %1210 = vmatprep.mubr.bf16.mxu0 0
        %1211 = vmatmul.mubr.bf16.gmra.mrb[0].mxu0 %v1159
        %v1212 = vpop.f32.mrb[0].mxu0
        %v1213 = vadd.f32 0.0, %v1212
        %v1214 = vpop.f32.mrb[0].mxu0
        %v1215 = vpop.f32.mrb[0].mxu0
        %v1216 = vadd.f32 0.0, %v1215
        %v1217 = vpop.f32.mrb[0].mxu0
        %1218 = vmatprep.mubr.bf16.mxu0 0
        %1219 = vmatmul.mubr.bf16.gmra.mrb[0].mxu0 %v1162
        %v1220 = vpop.f32.mrb[0].mxu0
        %v1221 = vadd.f32 0.0, %v1220
        %v1222 = vpop.f32.mrb[0].mxu0
        %v1223 = vpop.f32.mrb[0].mxu0
        %v1224 = vadd.f32 0.0, %v1223
        %v1225 = vpop.f32.mrb[0].mxu0
        %1226 = vmatprep.mubr.bf16.mxu0 0
        %1227 = vmatmul.mubr.bf16.gmra.mrb[0].mxu0 %v1165
        %v1228 = vpop.f32.mrb[0].mxu0
        %v1229 = vadd.f32 0.0, %v1228
        %v1230 = vpop.f32.mrb[0].mxu0
        %v1231 = vpop.f32.mrb[0].mxu0
        %v1232 = vadd.f32 0.0, %v1231
        %v1233 = vpop.f32.mrb[0].mxu0
        %1234 = vdwg.mxu0
        %v1235 = vadd.f32 %v1005, %v1205
        %v1236 = vadd.f32 %v1006, %v1208
        %v1237 = vadd.f32 %v1007, %v1213
        %v1238 = vadd.f32 %v1008, %v1216
        %v1239 = vadd.f32 %v1009, %v1221
        %v1240 = vadd.f32 %v1010, %v1224
        %v1241 = vadd.f32 %v1011, %v1229
        %v1242 = vadd.f32 %v1012, %v1232
        %s1243 = scalar_lea.vmem %s305, 8
        %v1244 = vld [vmem:[%s1243] sm:$0xf]
        %v1245 = vld [vmem:[%s1243 + $0x8] sm:$0xf]
        %v1246 = vld [vmem:[%s1243 + $0x10] sm:$0xf]
        %v1247 = vld [vmem:[%s1243 + $0x18] sm:$0xf]
        %v1248 = vld [vmem:[%s1243 + $0x20] sm:$0xf]
        %v1249 = vld [vmem:[%s1243 + $0x28] sm:$0xf]
        %v1250 = vld [vmem:[%s1243 + $0x30] sm:$0xf]
        %v1251 = vld [vmem:[%s1243 + $0x38] sm:$0xf]
        %s1252 = scalar_lea.vmem %s4, 12
        %v1253 = vld [vmem:[%s1252] sm:$0x3]
        %v1262 = vunpack.c.l.b16 %v1244
        %v1263 = vunpack.c.l.b16 %v1245
        %v1264 = vunpack.c.l.b16 %v1246
        %v1265 = vunpack.c.l.b16 %v1247
        %v1266 = vunpack.c.l.b16 %v1248
        %v1267 = vunpack.c.l.b16 %v1249
        %v1268 = vunpack.c.l.b16 %v1250
        %v1269 = vunpack.c.l.b16 %v1251
        %v1270 = vpack.c.b16 %v1263, %v1262
        %v1271 = vpack.c.b16 %v1265, %v1264
        %v1272 = vpack.c.b16 %v1267, %v1266
        %v1273 = vpack.c.b16 %v1269, %v1268
        %v1275 = vsel %vm362, %v1270, 0
        %v1278 = vsel %vm362, %v1271, 0
        %v1281 = vsel %vm362, %v1272, 0
        %v1284 = vsel %vm362, %v1273, 0
        %v1287 = vsel %vm375, %v1253, 0
        %1289 = vmatprep.subr.bf16.mxu0 0
        %1290 = vmatpush1.bf16.msra.mxu0 %v1287
        %1291 = vmatprep.subr.bf16.mxu0 0
        %1292 = vmatpush1.bf16.msra.mxu0 0
        %1293 = vmatprep.subr.bf16.mxu0 0
        %1294 = vmatpush1.bf16.msra.mxu0 0
        %1295 = vmatprep.subr.bf16.mxu0 0
        %1296 = vmatpush1.bf16.msra.mxu0 0
        %1297 = vmatprep.subr.bf16.mxu0 0
        %1298 = vmatpush1.bf16.msra.mxu0 0
        %1299 = vmatprep.subr.bf16.mxu0 0
        %1300 = vmatpush1.bf16.msra.mxu0 0
        %1301 = vmatprep.subr.bf16.mxu0 0
        %1302 = vmatpush1.bf16.msra.mxu0 0
        %1303 = vmatprep.subr.bf16.mxu0 0
        %1304 = vmatpush1.bf16.msra.mxu0 0
        %1305 = vmatprep.subr.bf16.mxu0 0
        %1306 = vmatpush1.bf16.msra.mxu0 0
        %1307 = vmatprep.subr.bf16.mxu0 0
        %1308 = vmatpush1.bf16.msra.mxu0 0
        %1309 = vmatprep.subr.bf16.mxu0 0
        %1310 = vmatpush1.bf16.msra.mxu0 0
        %1311 = vmatprep.subr.bf16.mxu0 0
        %1312 = vmatpush1.bf16.msra.mxu0 0
        %1313 = vmatprep.subr.bf16.mxu0 0
        %1314 = vmatpush1.bf16.msra.mxu0 0
        %1315 = vmatprep.subr.bf16.mxu0 0
        %1316 = vmatpush1.bf16.msra.mxu0 0
        %1317 = vmatprep.subr.bf16.mxu0 0
        %1318 = vmatpush1.bf16.msra.mxu0 0
        %1319 = vmatprep.subr.bf16.mxu0 0
        %1320 = vmatpush1.bf16.msra.mxu0 0
        %1321 = vmatprep.mubr.bf16.mxu0 0
        %1322 = vmatmul.mubr.bf16.gmra.mrb[0].mxu0 %v1275
        %v1323 = vpop.f32.mrb[0].mxu0
        %v1324 = vadd.f32 0.0, %v1323
        %v1325 = vpop.f32.mrb[0].mxu0
        %v1326 = vpop.f32.mrb[0].mxu0
        %v1327 = vadd.f32 0.0, %v1326
        %v1328 = vpop.f32.mrb[0].mxu0
        %1329 = vmatprep.mubr.bf16.mxu0 0
        %1330 = vmatmul.mubr.bf16.gmra.mrb[0].mxu0 %v1278
        %v1331 = vpop.f32.mrb[0].mxu0
        %v1332 = vadd.f32 0.0, %v1331
        %v1333 = vpop.f32.mrb[0].mxu0
        %v1334 = vpop.f32.mrb[0].mxu0
        %v1335 = vadd.f32 0.0, %v1334
        %v1336 = vpop.f32.mrb[0].mxu0
        %1337 = vmatprep.mubr.bf16.mxu0 0
        %1338 = vmatmul.mubr.bf16.gmra.mrb[0].mxu0 %v1281
        %v1339 = vpop.f32.mrb[0].mxu0
        %v1340 = vadd.f32 0.0, %v1339
        %v1341 = vpop.f32.mrb[0].mxu0
        %v1342 = vpop.f32.mrb[0].mxu0
        %v1343 = vadd.f32 0.0, %v1342
        %v1344 = vpop.f32.mrb[0].mxu0
        %1345 = vmatprep.mubr.bf16.mxu0 0
        %1346 = vmatmul.mubr.bf16.gmra.mrb[0].mxu0 %v1284
        %v1347 = vpop.f32.mrb[0].mxu0
        %v1348 = vadd.f32 0.0, %v1347
        %v1349 = vpop.f32.mrb[0].mxu0
        %v1350 = vpop.f32.mrb[0].mxu0
        %v1351 = vadd.f32 0.0, %v1350
        %v1352 = vpop.f32.mrb[0].mxu0
        %1353 = vdwg.mxu0
        %v1354 = vadd.f32 %v1235, %v1324
        %v1355 = vadd.f32 %v1236, %v1327
        %v1356 = vadd.f32 %v1237, %v1332
        %v1357 = vadd.f32 %v1238, %v1335
        %v1358 = vadd.f32 %v1239, %v1340
        %v1359 = vadd.f32 %v1240, %v1343
        %v1360 = vadd.f32 %v1241, %v1348
        %v1361 = vadd.f32 %v1242, %v1351
        %s1362 = scalar_lea.vmem %s310, 8
        %v1363 = vld [vmem:[%s1362] sm:$0xf]
        %v1364 = vld [vmem:[%s1362 + $0x8] sm:$0xf]
        %v1365 = vld [vmem:[%s1362 + $0x10] sm:$0xf]
        %v1366 = vld [vmem:[%s1362 + $0x18] sm:$0xf]
        %v1367 = vld [vmem:[%s1362 + $0x20] sm:$0xf]
        %v1368 = vld [vmem:[%s1362 + $0x28] sm:$0xf]
        %v1369 = vld [vmem:[%s1362 + $0x30] sm:$0xf]
        %v1370 = vld [vmem:[%s1362 + $0x38] sm:$0xf]
        %s1371 = scalar_lea.vmem %s4, 14
        %v1372 = vld [vmem:[%s1371] sm:$0x3]
        %v1381 = vunpack.c.l.b16 %v1363
        %v1382 = vunpack.c.l.b16 %v1364
        %v1383 = vunpack.c.l.b16 %v1365
        %v1384 = vunpack.c.l.b16 %v1366
        %v1385 = vunpack.c.l.b16 %v1367
        %v1386 = vunpack.c.l.b16 %v1368
        %v1387 = vunpack.c.l.b16 %v1369
        %v1388 = vunpack.c.l.b16 %v1370
        %v1389 = vpack.c.b16 %v1382, %v1381
        %v1390 = vpack.c.b16 %v1384, %v1383
        %v1391 = vpack.c.b16 %v1386, %v1385
        %v1392 = vpack.c.b16 %v1388, %v1387
        %v1394 = vsel %vm362, %v1389, 0
        %v1397 = vsel %vm362, %v1390, 0
        %v1400 = vsel %vm362, %v1391, 0
        %v1403 = vsel %vm362, %v1392, 0
        %v1406 = vsel %vm375, %v1372, 0
        %1408 = vmatprep.subr.bf16.mxu0 0
        %1409 = vmatpush1.bf16.msra.mxu0 %v1406
        %1410 = vmatprep.subr.bf16.mxu0 0
        %1411 = vmatpush1.bf16.msra.mxu0 0
        %1412 = vmatprep.subr.bf16.mxu0 0
        %1413 = vmatpush1.bf16.msra.mxu0 0
        %1414 = vmatprep.subr.bf16.mxu0 0
        %1415 = vmatpush1.bf16.msra.mxu0 0
        %1416 = vmatprep.subr.bf16.mxu0 0
        %1417 = vmatpush1.bf16.msra.mxu0 0
        %1418 = vmatprep.subr.bf16.mxu0 0
        %1419 = vmatpush1.bf16.msra.mxu0 0
        %1420 = vmatprep.subr.bf16.mxu0 0
        %1421 = vmatpush1.bf16.msra.mxu0 0
        %1422 = vmatprep.subr.bf16.mxu0 0
        %1423 = vmatpush1.bf16.msra.mxu0 0
        %1424 = vmatprep.subr.bf16.mxu0 0
        %1425 = vmatpush1.bf16.msra.mxu0 0
        %1426 = vmatprep.subr.bf16.mxu0 0
        %1427 = vmatpush1.bf16.msra.mxu0 0
        %1428 = vmatprep.subr.bf16.mxu0 0
        %1429 = vmatpush1.bf16.msra.mxu0 0
        %1430 = vmatprep.subr.bf16.mxu0 0
        %1431 = vmatpush1.bf16.msra.mxu0 0
        %1432 = vmatprep.subr.bf16.mxu0 0
        %1433 = vmatpush1.bf16.msra.mxu0 0
        %1434 = vmatprep.subr.bf16.mxu0 0
        %1435 = vmatpush1.bf16.msra.mxu0 0
        %1436 = vmatprep.subr.bf16.mxu0 0
        %1437 = vmatpush1.bf16.msra.mxu0 0
        %1438 = vmatprep.subr.bf16.mxu0 0
        %1439 = vmatpush1.bf16.msra.mxu0 0
        %1440 = vmatprep.mubr.bf16.mxu0 0
        %1441 = vmatmul.mubr.bf16.gmra.mrb[0].mxu0 %v1394
        %v1442 = vpop.f32.mrb[0].mxu0
        %v1443 = vadd.f32 0.0, %v1442
        %v1444 = vpop.f32.mrb[0].mxu0
        %v1445 = vpop.f32.mrb[0].mxu0
        %v1446 = vadd.f32 0.0, %v1445
        %v1447 = vpop.f32.mrb[0].mxu0
        %1448 = vmatprep.mubr.bf16.mxu0 0
        %1449 = vmatmul.mubr.bf16.gmra.mrb[0].mxu0 %v1397
        %v1450 = vpop.f32.mrb[0].mxu0
        %v1451 = vadd.f32 0.0, %v1450
        %v1452 = vpop.f32.mrb[0].mxu0
        %v1453 = vpop.f32.mrb[0].mxu0
        %v1454 = vadd.f32 0.0, %v1453
        %v1455 = vpop.f32.mrb[0].mxu0
        %1456 = vmatprep.mubr.bf16.mxu0 0
        %1457 = vmatmul.mubr.bf16.gmra.mrb[0].mxu0 %v1400
        %v1458 = vpop.f32.mrb[0].mxu0
        %v1459 = vadd.f32 0.0, %v1458
        %v1460 = vpop.f32.mrb[0].mxu0
        %v1461 = vpop.f32.mrb[0].mxu0
        %v1462 = vadd.f32 0.0, %v1461
        %v1463 = vpop.f32.mrb[0].mxu0
        %1464 = vmatprep.mubr.bf16.mxu0 0
        %1465 = vmatmul.mubr.bf16.gmra.mrb[0].mxu0 %v1403
        %v1466 = vpop.f32.mrb[0].mxu0
        %v1467 = vadd.f32 0.0, %v1466
        %v1468 = vpop.f32.mrb[0].mxu0
        %v1469 = vpop.f32.mrb[0].mxu0
        %v1470 = vadd.f32 0.0, %v1469
        %v1471 = vpop.f32.mrb[0].mxu0
        %1472 = vdwg.mxu0
        %v1473 = vadd.f32 %v1354, %v1443
        %v1474 = vadd.f32 %v1355, %v1446
        %v1475 = vadd.f32 %v1356, %v1451
        %v1476 = vadd.f32 %v1357, %v1454
        %v1477 = vadd.f32 %v1358, %v1459
        %v1478 = vadd.f32 %v1359, %v1462
        %v1479 = vadd.f32 %v1360, %v1467
        %v1480 = vadd.f32 %v1361, %v1470
        %v1481 = vld [vmem:[%s1243] sm:$0xf]
        %v1482 = vld [vmem:[%s1243 + $0x4] sm:$0x1]
        %v1483 = vld [vmem:[%s1243 + $0x8] sm:$0xf]
        %v1484 = vld [vmem:[%s1243 + $0xc] sm:$0x1]
        %v1485 = vld [vmem:[%s1243 + $0x10] sm:$0xf]
        %v1486 = vld [vmem:[%s1243 + $0x14] sm:$0x1]
        %v1487 = vld [vmem:[%s1243 + $0x18] sm:$0xf]
        %v1488 = vld [vmem:[%s1243 + $0x1c] sm:$0x1]
        %v1489 = vld [vmem:[%s1243 + $0x20] sm:$0xf]
        %v1490 = vld [vmem:[%s1243 + $0x24] sm:$0x1]
        %v1491 = vld [vmem:[%s1243 + $0x28] sm:$0xf]
        %v1492 = vld [vmem:[%s1243 + $0x2c] sm:$0x1]
        %v1493 = vld [vmem:[%s1243 + $0x30] sm:$0xf]
        %v1494 = vld [vmem:[%s1243 + $0x34] sm:$0x1]
        %v1495 = vld [vmem:[%s1243 + $0x38] sm:$0xf]
        %v1496 = vld [vmem:[%s1243 + $0x3c] sm:$0x1]
        %v1498 = vshrl.u32 %v1481, 16
        %v1500 = vrot.slane %v1498, 4
        %v1501 = vshll.u32 %v1481, 16
        %v1503 = vrot.slane %v1501, 5
        %v1504 = vor.u32 %v1500, %v1503
        %v1505 = vrot.slane %v1504, 4
        %v1507 = vshll.u32 %v1482, 16
        %v1509 = vrot.slane %v1507, 5
        %v1510 = vsel %vm562, %v1505, %v1509
        %v1512 = vshrl.u32 %v1483, 16
        %v1514 = vrot.slane %v1512, 4
        %v1515 = vshll.u32 %v1483, 16
        %v1517 = vrot.slane %v1515, 5
        %v1518 = vor.u32 %v1514, %v1517
        %v1519 = vrot.slane %v1518, 4
        %v1521 = vshll.u32 %v1484, 16
        %v1523 = vrot.slane %v1521, 5
        %v1524 = vsel %vm562, %v1519, %v1523
        %v1526 = vshrl.u32 %v1485, 16
        %v1528 = vrot.slane %v1526, 4
        %v1529 = vshll.u32 %v1485, 16
        %v1531 = vrot.slane %v1529, 5
        %v1532 = vor.u32 %v1528, %v1531
        %v1533 = vrot.slane %v1532, 4
        %v1535 = vshll.u32 %v1486, 16
        %v1537 = vrot.slane %v1535, 5
        %v1538 = vsel %vm562, %v1533, %v1537
        %v1540 = vshrl.u32 %v1487, 16
        %v1542 = vrot.slane %v1540, 4
        %v1543 = vshll.u32 %v1487, 16
        %v1545 = vrot.slane %v1543, 5
        %v1546 = vor.u32 %v1542, %v1545
        %v1547 = vrot.slane %v1546, 4
        %v1549 = vshll.u32 %v1488, 16
        %v1551 = vrot.slane %v1549, 5
        %v1552 = vsel %vm562, %v1547, %v1551
        %v1554 = vshrl.u32 %v1489, 16
        %v1556 = vrot.slane %v1554, 4
        %v1557 = vshll.u32 %v1489, 16
        %v1559 = vrot.slane %v1557, 5
        %v1560 = vor.u32 %v1556, %v1559
        %v1561 = vrot.slane %v1560, 4
        %v1563 = vshll.u32 %v1490, 16
        %v1565 = vrot.slane %v1563, 5
        %v1566 = vsel %vm562, %v1561, %v1565
        %v1568 = vshrl.u32 %v1491, 16
        %v1570 = vrot.slane %v1568, 4
        %v1571 = vshll.u32 %v1491, 16
        %v1573 = vrot.slane %v1571, 5
        %v1574 = vor.u32 %v1570, %v1573
        %v1575 = vrot.slane %v1574, 4
        %v1577 = vshll.u32 %v1492, 16
        %v1579 = vrot.slane %v1577, 5
        %v1580 = vsel %vm562, %v1575, %v1579
        %v1582 = vshrl.u32 %v1493, 16
        %v1584 = vrot.slane %v1582, 4
        %v1585 = vshll.u32 %v1493, 16
        %v1587 = vrot.slane %v1585, 5
        %v1588 = vor.u32 %v1584, %v1587
        %v1589 = vrot.slane %v1588, 4
        %v1591 = vshll.u32 %v1494, 16
        %v1593 = vrot.slane %v1591, 5
        %v1594 = vsel %vm562, %v1589, %v1593
        %v1596 = vshrl.u32 %v1495, 16
        %v1598 = vrot.slane %v1596, 4
        %v1599 = vshll.u32 %v1495, 16
        %v1601 = vrot.slane %v1599, 5
        %v1602 = vor.u32 %v1598, %v1601
        %v1603 = vrot.slane %v1602, 4
        %v1605 = vshll.u32 %v1496, 16
        %v1607 = vrot.slane %v1605, 5
        %v1608 = vsel %vm562, %v1603, %v1607
        %s1609 = scalar_lea.vmem %s4, 16
        %v1610 = vld [vmem:[%s1609] sm:$0x3]
        %v1611 = vunpack.c.l.b16 %v1510
        %v1612 = vunpack.c.l.b16 %v1524
        %v1613 = vunpack.c.l.b16 %v1538
        %v1614 = vunpack.c.l.b16 %v1552
        %v1615 = vunpack.c.l.b16 %v1566
        %v1616 = vunpack.c.l.b16 %v1580
        %v1617 = vunpack.c.l.b16 %v1594
        %v1618 = vunpack.c.l.b16 %v1608
        %v1619 = vpack.c.b16 %v1612, %v1611
        %v1620 = vpack.c.b16 %v1614, %v1613
        %v1621 = vpack.c.b16 %v1616, %v1615
        %v1622 = vpack.c.b16 %v1618, %v1617
        %v1624 = vsel %vm362, %v1619, 0
        %v1627 = vsel %vm362, %v1620, 0
        %v1630 = vsel %vm362, %v1621, 0
        %v1633 = vsel %vm362, %v1622, 0
        %v1636 = vsel %vm375, %v1610, 0
        %1638 = vmatprep.subr.bf16.mxu0 0
        %1639 = vmatpush1.bf16.msra.mxu0 %v1636
        %1640 = vmatprep.subr.bf16.mxu0 0
        %1641 = vmatpush1.bf16.msra.mxu0 0
        %1642 = vmatprep.subr.bf16.mxu0 0
        %1643 = vmatpush1.bf16.msra.mxu0 0
        %1644 = vmatprep.subr.bf16.mxu0 0
        %1645 = vmatpush1.bf16.msra.mxu0 0
        %1646 = vmatprep.subr.bf16.mxu0 0
        %1647 = vmatpush1.bf16.msra.mxu0 0
        %1648 = vmatprep.subr.bf16.mxu0 0
        %1649 = vmatpush1.bf16.msra.mxu0 0
        %1650 = vmatprep.subr.bf16.mxu0 0
        %1651 = vmatpush1.bf16.msra.mxu0 0
        %1652 = vmatprep.subr.bf16.mxu0 0
        %1653 = vmatpush1.bf16.msra.mxu0 0
        %1654 = vmatprep.subr.bf16.mxu0 0
        %1655 = vmatpush1.bf16.msra.mxu0 0
        %1656 = vmatprep.subr.bf16.mxu0 0
        %1657 = vmatpush1.bf16.msra.mxu0 0
        %1658 = vmatprep.subr.bf16.mxu0 0
        %1659 = vmatpush1.bf16.msra.mxu0 0
        %1660 = vmatprep.subr.bf16.mxu0 0
        %1661 = vmatpush1.bf16.msra.mxu0 0
        %1662 = vmatprep.subr.bf16.mxu0 0
        %1663 = vmatpush1.bf16.msra.mxu0 0
        %1664 = vmatprep.subr.bf16.mxu0 0
        %1665 = vmatpush1.bf16.msra.mxu0 0
        %1666 = vmatprep.subr.bf16.mxu0 0
        %1667 = vmatpush1.bf16.msra.mxu0 0
        %1668 = vmatprep.subr.bf16.mxu0 0
        %1669 = vmatpush1.bf16.msra.mxu0 0
        %1670 = vmatprep.mubr.bf16.mxu0 0
        %1671 = vmatmul.mubr.bf16.gmra.mrb[0].mxu0 %v1624
        %v1672 = vpop.f32.mrb[0].mxu0
        %v1673 = vadd.f32 0.0, %v1672
        %v1674 = vpop.f32.mrb[0].mxu0
        %v1675 = vpop.f32.mrb[0].mxu0
        %v1676 = vadd.f32 0.0, %v1675
        %v1677 = vpop.f32.mrb[0].mxu0
        %1678 = vmatprep.mubr.bf16.mxu0 0
        %1679 = vmatmul.mubr.bf16.gmra.mrb[0].mxu0 %v1627
        %v1680 = vpop.f32.mrb[0].mxu0
        %v1681 = vadd.f32 0.0, %v1680
        %v1682 = vpop.f32.mrb[0].mxu0
        %v1683 = vpop.f32.mrb[0].mxu0
        %v1684 = vadd.f32 0.0, %v1683
        %v1685 = vpop.f32.mrb[0].mxu0
        %1686 = vmatprep.mubr.bf16.mxu0 0
        %1687 = vmatmul.mubr.bf16.gmra.mrb[0].mxu0 %v1630
        %v1688 = vpop.f32.mrb[0].mxu0
        %v1689 = vadd.f32 0.0, %v1688
        %v1690 = vpop.f32.mrb[0].mxu0
        %v1691 = vpop.f32.mrb[0].mxu0
        %v1692 = vadd.f32 0.0, %v1691
        %v1693 = vpop.f32.mrb[0].mxu0
        %1694 = vmatprep.mubr.bf16.mxu0 0
        %1695 = vmatmul.mubr.bf16.gmra.mrb[0].mxu0 %v1633
        %v1696 = vpop.f32.mrb[0].mxu0
        %v1697 = vadd.f32 0.0, %v1696
        %v1698 = vpop.f32.mrb[0].mxu0
        %v1699 = vpop.f32.mrb[0].mxu0
        %v1700 = vadd.f32 0.0, %v1699
        %v1701 = vpop.f32.mrb[0].mxu0
        %1702 = vdwg.mxu0
        %v1703 = vadd.f32 %v1473, %v1673
        %v1704 = vadd.f32 %v1474, %v1676
        %v1705 = vadd.f32 %v1475, %v1681
        %v1706 = vadd.f32 %v1476, %v1684
        %v1707 = vadd.f32 %v1477, %v1689
        %v1708 = vadd.f32 %v1478, %v1692
        %v1709 = vadd.f32 %v1479, %v1697
        %v1710 = vadd.f32 %v1480, %v1700
        %v1711 = vpack.c.bf16 %v1704, %v1703
        %v1712 = vpack.c.bf16 %v1706, %v1705
        %v1713 = vpack.c.bf16 %v1708, %v1707
        %v1714 = vpack.c.bf16 %v1710, %v1709
        %v1719 = vunpack.c.l.b16 %v1711
        %v1720 = vunpack.c.h.b16 %v1711
        %v1721 = vunpack.c.l.b16 %v1712
        %v1722 = vunpack.c.h.b16 %v1712
        %v1723 = vunpack.c.l.b16 %v1713
        %v1724 = vunpack.c.h.b16 %v1713
        %v1725 = vunpack.c.l.b16 %v1714
        %v1726 = vunpack.c.h.b16 %v1714
        %v1727 = vpack.c.b16 %v1719, %v1719
        %v1728 = vpack.c.b16 %v1720, %v1720
        %v1729 = vpack.c.b16 %v1721, %v1721
        %v1730 = vpack.c.b16 %v1722, %v1722
        %v1731 = vpack.c.b16 %v1723, %v1723
        %v1732 = vpack.c.b16 %v1724, %v1724
        %v1733 = vpack.c.b16 %v1725, %v1725
        %v1734 = vpack.c.b16 %v1726, %v1726
        %1743 = vst [vmem:[%s293] sm:$0xf] %v1727
        %1744 = vst [vmem:[%s293 + $0x4] sm:$0xf] %v1728
        %1745 = vst [vmem:[%s293 + $0x8] sm:$0xf] %v1729
        %1746 = vst [vmem:[%s293 + $0xc] sm:$0xf] %v1730
        %1747 = vst [vmem:[%s293 + $0x10] sm:$0xf] %v1731
        %1748 = vst [vmem:[%s293 + $0x14] sm:$0xf] %v1732
        %1749 = vst [vmem:[%s293 + $0x18] sm:$0xf] %v1733
        %1750 = vst [vmem:[%s293 + $0x1c] sm:$0xf] %v1734
        %v1751 = vadd.f32 %v1703, %v1704
        %v1752 = vadd.f32 %v1751, %v1705
        %v1753 = vadd.f32 %v1752, %v1706
        %v1754 = vadd.f32 %v1753, %v1707
        %v1755 = vadd.f32 %v1754, %v1708
        %v1756 = vadd.f32 %v1755, %v1709
        %v1757 = vadd.f32 %v1756, %v1710
        %v1758 = vrot.slane %v1757, 4
        %v1759 = vadd.f32 %v1757, %v1758
        %v1760 = vrot.slane %v1759, 2
        %v1761 = vadd.f32 %v1759, %v1760
        %v1762 = vrot.slane %v1761, 1
        %v1763 = vadd.f32 %v1761, %v1762
        %1764 = vst [vmem:[%s300] sm:$0x1] %v1763
        %v1765 = vmul.f32 %v1703, %v1703
        %v1766 = vmul.f32 %v1704, %v1704
        %v1767 = vmul.f32 %v1705, %v1705
        %v1768 = vmul.f32 %v1706, %v1706
        %v1769 = vmul.f32 %v1707, %v1707
        %v1770 = vmul.f32 %v1708, %v1708
        %v1771 = vmul.f32 %v1709, %v1709
        %v1772 = vmul.f32 %v1710, %v1710
        %v1773 = vadd.f32 %v1765, %v1766
        %v1774 = vadd.f32 %v1773, %v1767
        %v1775 = vadd.f32 %v1774, %v1768
        %v1776 = vadd.f32 %v1775, %v1769
        %v1777 = vadd.f32 %v1776, %v1770
        %v1778 = vadd.f32 %v1777, %v1771
        %v1779 = vadd.f32 %v1778, %v1772
        %v1780 = vrot.slane %v1779, 4
        %v1781 = vadd.f32 %v1779, %v1780
        %v1782 = vrot.slane %v1781, 2
        %v1783 = vadd.f32 %v1781, %v1782
        %v1784 = vrot.slane %v1783, 1
        %v1785 = vadd.f32 %v1783, %v1784
        %1786 = vst [vmem:[%s300 + $0x1] sm:$0x1] %v1785
        %s1787 = sand.u32 %s157, 1
        %s1788 = scalar_lea.sflag [#allocation3], %s1787
        %s1789 = sand.u32 %s157, 1
        %s1790 = smul.addr %s1789, 32
        %s1791 = scalar_lea.vmem [#allocation2], %s1790
        %s1792 = sand.u32 %s183, 1
        %s1793 = scalar_lea.sflag [#allocation5], %s1792
        %s1794 = sand.u32 %s183, 1
        %s1795 = smul.addr %s1794, 8
        %s1796 = scalar_lea.vmem [#allocation4], %s1795
        // Predicated region
        $region41: #{tpu_custom_call.1} parent=39 // pred_check
          %p1797 = pneg %p167
        $region42: #{tpu_custom_call.1} parent=39 // pred_check_branch
          %1799 = sbr.rel (%p1797) target = $region44
        $region43: #{tpu_custom_call.1} parent=39 // pred_region
          %s1800 = smul.u32 8, %s24
          %s1802 = ssub.s32 512, 512
          %1803 = vsyncadd %s1788, %s1802
          %s1804 = smul.addr %s1800, 64
          %s1805 = scalar_lea.hbm %s5, %s1804
          %s1806 = sshll.u32 %s1791, 4
          %s1807 = int_to_ptr.vmem [resolvable:$true] %s1806
          %1812 = dma.vmem_to_hbm [thread:$0]  %s1807, 512, %s1805, %s1788, 64, 64, 4
        $region44: #{tpu_custom_call.1} parent=39 // pred_fallthru
          _
        // Predicated region
        $region45: #{tpu_custom_call.1} parent=39 // pred_check
          %p1813 = pneg %p193
        $region46: #{tpu_custom_call.1} parent=39 // pred_check_branch
          %1815 = sbr.rel (%p1813) target = $region48
        $region47: #{tpu_custom_call.1} parent=39 // pred_region
          %s1817 = ssub.s32 128, 128
          %1818 = vsyncadd %s1793, %s1817
          %s1819 = smul.addr %s24, 128
          %s1820 = scalar_lea.hbm %s6, %s1819
          %s1822 = sshll.u32 %s1796, 4
          %s1823 = int_to_ptr.vmem [resolvable:$true] %s1822
          %1825 = dma.vmem_to_hbm [thread:$0]  %s1823, 128, %s1820, %s1793
        $region48: #{tpu_custom_call.1} parent=39 // pred_fallthru
          _
      $region40: #{tpu_custom_call.1} parent=5 // pred_fallthru
        _
      %p1826 = scmp.le.s32.totalorder 2, %s19
      // Predicated region
      $region49: #{tpu_custom_call.1} parent=5 // pred_check
        %p1827 = pneg %p1826
      $region50: #{tpu_custom_call.1} parent=5 // pred_check_branch
        %1829 = sbr.rel (%p1827) target = $region52
      $region51: #{tpu_custom_call.1} parent=5 // pred_region
        %s1830 = ssub.s32 %s19, 2
        // Predicated region
        $region53: #{tpu_custom_call.1} parent=51 // pred_check
          %p1831 = pneg %p173
        $region54: #{tpu_custom_call.1} parent=51 // pred_check_branch
          %1833 = sbr.rel (%p1831) target = $region56
        $region55: #{tpu_custom_call.1} parent=51 // pred_region
          %s1834 = sand.u32 %s158, 1
          %s1835 = scalar_lea.sflag [#allocation3], %s1834
          %s1836 = sand.u32 %s158, 1
          %s1837 = smul.addr %s1836, 32
          %s1838 = scalar_lea.vmem [#allocation2], %s1837
          %1839 = dma.done %s1835, 512
        $region56: #{tpu_custom_call.1} parent=51 // pred_fallthru
          _
        // Predicated region
        $region57: #{tpu_custom_call.1} parent=51 // pred_check
          %p1840 = pneg %p199
        $region58: #{tpu_custom_call.1} parent=51 // pred_check_branch
          %1842 = sbr.rel (%p1840) target = $region60
        $region59: #{tpu_custom_call.1} parent=51 // pred_region
          %s1843 = sand.u32 %s184, 1
          %s1844 = scalar_lea.sflag [#allocation5], %s1843
          %s1845 = sand.u32 %s184, 1
          %s1846 = smul.addr %s1845, 8
          %s1847 = scalar_lea.vmem [#allocation4], %s1846
          %1848 = dma.done %s1844, 128
        $region60: #{tpu_custom_call.1} parent=51 // pred_fallthru
          _
      $region52: #{tpu_custom_call.1} parent=5 // pred_fallthru
        _
    $region6: #{tpu_custom_call.1} parent=1 // loop_footer
      %s23 = sadd.s32 1, %s19
    $region7: #{tpu_custom_call.1} parent=1 // loop_footer_branch
      %18 = sbr.rel target = $region3
    $region8: #{tpu_custom_call.1} parent=1 // loop_exit
      _
    %1849 = vsyncpa [#allocation3], 1
    %s1850 = scalar_lea.sflag [#allocation3], 1
    %1851 = vsyncpa %s1850, 1
    %1852 = vsyncpa [#allocation5], 1
    %s1853 = scalar_lea.sflag [#allocation5], 1
    %1854 = vsyncpa %s1853, 1

// kernel: tpu_custom_call.1
$region0: #{tpu_custom_call.1}
  #allocation0 [shape = 'u32[]', space=smem, size = 0x4, offset = 0x4, fixed_abs, tag = 'smem constant byte address 0x4 - core index']
  #allocation1 [shape = 'u32[144,128]{1,0:T(1,128)}', space=vmem, size = 0x12000, scoped, tag = 'internal scratch']
  %s0 = inlined_call_operand.vmem [shape: bf16[2,9,9,4], index: 0, kind: input, shape index: {}]
  %s1 = inlined_call_operand.vmem [shape: bf16[2,9,9,4], index: 1, kind: input, shape index: {}]
  %s2 = inlined_call_operand.vmem [shape: bf16[2,9,9,4], index: 2, kind: input, shape index: {}]
  %s3 = inlined_call_operand.vmem [shape: bf16[2,9,9,4], index: 3, kind: input, shape index: {}]
  %s4 = inlined_call_operand.vmem [shape: bf16[9,4,128], index: 4, kind: input, shape index: {}]
  %s5 = inlined_call_operand.hbm [shape: bf16[128,128], index: 5, kind: output, shape index: {0}]
  %s6 = inlined_call_operand.hbm [shape: f32[8,256], index: 6, kind: output, shape index: {1}]
  %7 = xla_tuple %s5, %s6
  %s8 = sld [smem:[#allocation0]]
  $region61: #{tpu_custom_call.1} parent=0
    _
  %s10 = ssub.s32 1, %s8
  %s11 = scalar_select 0, %s10, %s8
  $region1: #{tpu_custom_call.1} parent=0
    #allocation2 [shape = 'u8[32768]{0}', space=vmem, size = 0x8000, scoped, tag = 'output window, operand 0']
    #allocation3 [shape = 's32[2]{0}', space=sflag, size = 0x8, scoped, tag = 'scoped memory for tpu_custom_call.1']
    #allocation4 [shape = 'u8[8192]{0}', space=vmem, size = 0x2000, scoped, tag = 'output window, operand 1']
    #allocation5 [shape = 's32[2]{0}', space=sflag, size = 0x8, scoped, tag = 'scoped memory for tpu_custom_call.1']
    %12 = vsyncpa [#allocation3], 0
    %s13 = scalar_lea.sflag [#allocation3], 1
    %14 = vsyncpa %s13, 0
    %15 = vsyncpa [#allocation5], 0
    %s16 = scalar_lea.sflag [#allocation5], 1
    %17 = vsyncpa %s16, 0
    loop: start=0, step=1, limit=4
    $region2: #{tpu_custom_call.1} parent=1 // loop_pre_header
      _
    $region3: #{tpu_custom_call.1} parent=1 // loop_header
      %s19 = sphi 0, %s23
      %p20 = scmp.ge.s32.totalorder %s19, 4
      %s29 = sphi 0, %s31
      %s32 = sphi 0, %s29
      %s33 = sphi 0, %s32
      %s49 = sphi 0, %s33
      %s55 = sphi 0, %s57
      %s58 = sphi 0, %s55
      %s59 = sphi 0, %s58
      %s75 = sphi 0, %s59
      %s81 = sphi 0, %s83
      %s84 = sphi 0, %s81
      %s85 = sphi 0, %s84
      %s101 = sphi 0, %s85
      %s107 = sphi 0, %s109
      %s110 = sphi 0, %s107
      %s111 = sphi 0, %s110
      %s127 = sphi 0, %s111
      %s131 = sphi 0, %s131
      %s133 = sphi 0, %s131
      %s134 = sphi 0, %s133
      %s148 = sphi 0, %s134
      %s154 = sphi 0, %s156
      %s157 = sphi 0, %s154
      %s158 = sphi 0, %s157
      %s174 = sphi 0, %s158
      %s180 = sphi 0, %s182
      %s183 = sphi 0, %s180
      %s184 = sphi 0, %s183
      %s200 = sphi 0, %s184
    $region4: #{tpu_custom_call.1} parent=1 // loop_header_branch
      %22 = sbr.rel (%p20) target = $region8
    $region5: #{tpu_custom_call.1} parent=1 // loop_body
      %s24 = ssub.s32 %s19, 1
      %s25 = ssub.s32 %s19, 2
      %s26 = sadd.s32 %s19, 1
      %s27 = ssub.s32 %s19, %s26
      %p28 = scmp.eq.s32.totalorder %s27, 0
      %s30 = sadd.s32 %s29, 1
      %s31 = scalar_select %p28, %s29, %s30
      %p34 = pneg %p28
      %p35 = scmp.eq.s32.totalorder %s19, 1
      %p36 = por %p34, %p35
      %p37 = scmp.ne.s32.totalorder %s29, %s32
      %p38 = scmp.eq.s32.totalorder %s19, 0
      %p39 = por %p37, %p38
      %p40 = scmp.ne.s32.totalorder %s29, %s32
      %p41 = scmp.eq.s32.totalorder %s24, 1
      %p42 = por %p40, %p41
      %p43 = scmp.ne.s32.totalorder %s32, %s33
      %p44 = scmp.eq.s32.totalorder %s24, 0
      %p45 = por %p43, %p44
      %p46 = scmp.ne.s32.totalorder %s32, %s33
      %p47 = scmp.eq.s32.totalorder %s25, 1
      %p48 = por %p46, %p47
      %p50 = scmp.ne.s32.totalorder %s33, %s49
      %p51 = scmp.eq.s32.totalorder %s25, 0
      %p52 = por %p50, %p51
      %s53 = ssub.s32 %s19, %s26
      %p54 = scmp.eq.s32.totalorder %s53, 0
      %s56 = sadd.s32 %s55, 1
      %s57 = scalar_select %p54, %s55, %s56
      %p60 = pneg %p54
      %p61 = scmp.eq.s32.totalorder %s19, 1
      %p62 = por %p60, %p61
      %p63 = scmp.ne.s32.totalorder %s55, %s58
      %p64 = scmp.eq.s32.totalorder %s19, 0
      %p65 = por %p63, %p64
      %p66 = scmp.ne.s32.totalorder %s55, %s58
      %p67 = scmp.eq.s32.totalorder %s24, 1
      %p68 = por %p66, %p67
      %p69 = scmp.ne.s32.totalorder %s58, %s59
      %p70 = scmp.eq.s32.totalorder %s24, 0
      %p71 = por %p69, %p70
      %p72 = scmp.ne.s32.totalorder %s58, %s59
      %p73 = scmp.eq.s32.totalorder %s25, 1
      %p74 = por %p72, %p73
      %p76 = scmp.ne.s32.totalorder %s59, %s75
      %p77 = scmp.eq.s32.totalorder %s25, 0
      %p78 = por %p76, %p77
      %s79 = ssub.s32 %s19, %s26
      %p80 = scmp.eq.s32.totalorder %s79, 0
      %s82 = sadd.s32 %s81, 1
      %s83 = scalar_select %p80, %s81, %s82
      %p86 = pneg %p80
      %p87 = scmp.eq.s32.totalorder %s19, 1
      %p88 = por %p86, %p87
      %p89 = scmp.ne.s32.totalorder %s81, %s84
      %p90 = scmp.eq.s32.totalorder %s19, 0
      %p91 = por %p89, %p90
      %p92 = scmp.ne.s32.totalorder %s81, %s84
      %p93 = scmp.eq.s32.totalorder %s24, 1
      %p94 = por %p92, %p93
      %p95 = scmp.ne.s32.totalorder %s84, %s85
      %p96 = scmp.eq.s32.totalorder %s24, 0
      %p97 = por %p95, %p96
      %p98 = scmp.ne.s32.totalorder %s84, %s85
      %p99 = scmp.eq.s32.totalorder %s25, 1
      %p100 = por %p98, %p99
      %p102 = scmp.ne.s32.totalorder %s85, %s101
      %p103 = scmp.eq.s32.totalorder %s25, 0
      %p104 = por %p102, %p103
      %s105 = ssub.s32 %s19, %s26
      %p106 = scmp.eq.s32.totalorder %s105, 0
      %s108 = sadd.s32 %s107, 1
      %s109 = scalar_select %p106, %s107, %s108
      %p112 = pneg %p106
      %p113 = scmp.eq.s32.totalorder %s19, 1
      %p114 = por %p112, %p113
      %p115 = scmp.ne.s32.totalorder %s107, %s110
      %p116 = scmp.eq.s32.totalorder %s19, 0
      %p117 = por %p115, %p116
      %p118 = scmp.ne.s32.totalorder %s107, %s110
      %p119 = scmp.eq.s32.totalorder %s24, 1
      %p120 = por %p118, %p119
      %p121 = scmp.ne.s32.totalorder %s110, %s111
      %p122 = scmp.eq.s32.totalorder %s24, 0
      %p123 = por %p121, %p122
      %p124 = scmp.ne.s32.totalorder %s110, %s111
      %p125 = scmp.eq.s32.totalorder %s25, 1
      %p126 = por %p124, %p125
      %p128 = scmp.ne.s32.totalorder %s111, %s127
      %p129 = scmp.eq.s32.totalorder %s25, 0
      %p130 = por %p128, %p129
      %s132 = sadd.s32 %s131, 1
      %p135 = scmp.eq.s32.totalorder %s19, 1
      %p136 = scmp.ne.s32.totalorder %s131, %s133
      %p137 = scmp.eq.s32.totalorder %s19, 0
      %p138 = por %p136, %p137
      %p139 = scmp.ne.s32.totalorder %s131, %s133
      %p140 = scmp.eq.s32.totalorder %s24, 1
      %p141 = por %p139, %p140
      %p142 = scmp.ne.s32.totalorder %s133, %s134
      %p143 = scmp.eq.s32.totalorder %s24, 0
      %p144 = por %p142, %p143
      %p145 = scmp.ne.s32.totalorder %s133, %s134
      %p146 = scmp.eq.s32.totalorder %s25, 1
      %p147 = por %p145, %p146
      %p149 = scmp.ne.s32.totalorder %s134, %s148
      %p150 = scmp.eq.s32.totalorder %s25, 0
      %p151 = por %p149, %p150
      %s152 = ssub.s32 %s19, %s26
      %p153 = scmp.eq.s32.totalorder %s152, 0
      %s155 = sadd.s32 %s154, 1
      %s156 = scalar_select %p153, %s154, %s155
      %p159 = pneg %p153
      %p160 = scmp.eq.s32.totalorder %s19, 1
      %p161 = por %p159, %p160
      %p162 = scmp.ne.s32.totalorder %s154, %s157
      %p163 = scmp.eq.s32.totalorder %s19, 0
      %p164 = por %p162, %p163
      %p165 = scmp.ne.s32.totalorder %s154, %s157
      %p166 = scmp.eq.s32.totalorder %s24, 1
      %p167 = por %p165, %p166
      %p168 = scmp.ne.s32.totalorder %s157, %s158
      %p169 = scmp.eq.s32.totalorder %s24, 0
      %p170 = por %p168, %p169
      %p171 = scmp.ne.s32.totalorder %s157, %s158
      %p172 = scmp.eq.s32.totalorder %s25, 1
      %p173 = por %p171, %p172
      %p175 = scmp.ne.s32.totalorder %s158, %s174
      %p176 = scmp.eq.s32.totalorder %s25, 0
      %p177 = por %p175, %p176
      %s178 = ssub.s32 %s19, %s26
      %p179 = scmp.eq.s32.totalorder %s178, 0
      %s181 = sadd.s32 %s180, 1
      %s182 = scalar_select %p179, %s180, %s181
      %p185 = pneg %p179
      %p186 = scmp.eq.s32.totalorder %s19, 1
      %p187 = por %p185, %p186
      %p188 = scmp.ne.s32.totalorder %s180, %s183
      %p189 = scmp.eq.s32.totalorder %s19, 0
      %p190 = por %p188, %p189
      %p191 = scmp.ne.s32.totalorder %s180, %s183
      %p192 = scmp.eq.s32.totalorder %s24, 1
      %p193 = por %p191, %p192
      %p194 = scmp.ne.s32.totalorder %s183, %s184
      %p195 = scmp.eq.s32.totalorder %s24, 0
      %p196 = por %p194, %p195
      %p197 = scmp.ne.s32.totalorder %s183, %s184
      %p198 = scmp.eq.s32.totalorder %s25, 1
      %p199 = por %p197, %p198
      %p201 = scmp.ne.s32.totalorder %s184, %s200
      %p202 = scmp.eq.s32.totalorder %s25, 0
      %p203 = por %p201, %p202
      %p204 = scmp.le.s32.totalorder 1, %s19
      %p205 = scmp.lt.s32.totalorder %s19, 3
      %p206 = pnand %p204, %p205
      %p207 = pneg %p206
      // Predicated region
      $region9: #{tpu_custom_call.1} parent=5 // pred_check
        _
      $region10: #{tpu_custom_call.1} parent=5 // pred_check_branch
        %209 = sbr.rel (%p206) target = $region12
      $region11: #{tpu_custom_call.1} parent=5 // pred_region
        %s210 = ssub.s32 %s19, 1
        // Predicated region
        $region13: #{tpu_custom_call.1} parent=11 // pred_check
          %p211 = pneg %p144
        $region14: #{tpu_custom_call.1} parent=11 // pred_check_branch
          %213 = sbr.rel (%p211) target = $region16
        $region15: #{tpu_custom_call.1} parent=11 // pred_region
          _
        $region16: #{tpu_custom_call.1} parent=11 // pred_fallthru
          _
      $region12: #{tpu_custom_call.1} parent=5 // pred_fallthru
        _
      %p214 = scmp.lt.s32.totalorder %s19, 2
      // Predicated region
      $region17: #{tpu_custom_call.1} parent=5 // pred_check
        %p215 = pneg %p214
      $region18: #{tpu_custom_call.1} parent=5 // pred_check_branch
        %217 = sbr.rel (%p215) target = $region20
      $region19: #{tpu_custom_call.1} parent=5 // pred_region
        // Predicated region
        $region21: #{tpu_custom_call.1} parent=19 // pred_check
          %p218 = pneg %p39
        $region22: #{tpu_custom_call.1} parent=19 // pred_check_branch
          %220 = sbr.rel (%p218) target = $region24
        $region23: #{tpu_custom_call.1} parent=19 // pred_region
          %p221 = scmp.lt.s32.totalorder %s19, 1
          %s222 = scalar_select %p221, %s19, 1
          %s223 = smul.addr %s222, 18
          %s224 = smul.addr %s223, 4
          %s225 = scalar_lea.vmem %s0, %s224
        $region24: #{tpu_custom_call.1} parent=19 // pred_fallthru
          _
        // Predicated region
        $region25: #{tpu_custom_call.1} parent=19 // pred_check
          %p226 = pneg %p65
        $region26: #{tpu_custom_call.1} parent=19 // pred_check_branch
          %228 = sbr.rel (%p226) target = $region28
        $region27: #{tpu_custom_call.1} parent=19 // pred_region
          %p229 = scmp.lt.s32.totalorder %s19, 1
          %s230 = scalar_select %p229, %s19, 1
          %s231 = smul.addr %s230, 18
          %s232 = smul.addr %s231, 4
          %s233 = scalar_lea.vmem %s1, %s232
        $region28: #{tpu_custom_call.1} parent=19 // pred_fallthru
          _
        // Predicated region
        $region29: #{tpu_custom_call.1} parent=19 // pred_check
          %p234 = pneg %p91
        $region30: #{tpu_custom_call.1} parent=19 // pred_check_branch
          %236 = sbr.rel (%p234) target = $region32
        $region31: #{tpu_custom_call.1} parent=19 // pred_region
          %p237 = scmp.lt.s32.totalorder %s19, 1
          %s238 = scalar_select %p237, %s19, 1
          %s239 = smul.addr %s238, 18
          %s240 = smul.addr %s239, 4
          %s241 = scalar_lea.vmem %s2, %s240
        $region32: #{tpu_custom_call.1} parent=19 // pred_fallthru
          _
        // Predicated region
        $region33: #{tpu_custom_call.1} parent=19 // pred_check
          %p242 = pneg %p117
        $region34: #{tpu_custom_call.1} parent=19 // pred_check_branch
          %244 = sbr.rel (%p242) target = $region36
        $region35: #{tpu_custom_call.1} parent=19 // pred_region
          %p245 = scmp.lt.s32.totalorder %s19, 1
          %s246 = scalar_select %p245, %s19, 1
          %s247 = smul.addr %s246, 18
          %s248 = smul.addr %s247, 4
          %s249 = scalar_lea.vmem %s3, %s248
        $region36: #{tpu_custom_call.1} parent=19 // pred_fallthru
          _
      $region20: #{tpu_custom_call.1} parent=5 // pred_fallthru
        _
      %p250 = scmp.le.s32.totalorder 1, %s19
      %p251 = scmp.lt.s32.totalorder %s19, 3
      %p252 = pnand %p250, %p251
      %p253 = pneg %p252
      // Predicated region
      $region37: #{tpu_custom_call.1} parent=5 // pred_check
        _
      $region38: #{tpu_custom_call.1} parent=5 // pred_check_branch
        %255 = sbr.rel (%p252) target = $region40
      $region39: #{tpu_custom_call.1} parent=5 // pred_region
        %s256 = ssub.s32 %s19, 1
        %p257 = scmp.lt.s32.totalorder %s24, 1
        %s258 = scalar_select %p257, %s24, 1
        %s259 = smul.addr %s258, 18
        %s260 = smul.addr %s259, 4
        %s261 = scalar_lea.vmem %s0, %s260
        %p262 = pneg %p45
        %p263 = pneg %p42
        %p264 = scmp.lt.s32.totalorder %s24, 1
        %s265 = scalar_select %p264, %s24, 1
        %s266 = smul.addr %s265, 18
        %s267 = smul.addr %s266, 4
        %s268 = scalar_lea.vmem %s1, %s267
        %p269 = pneg %p71
        %p270 = pneg %p68
        %p271 = scmp.lt.s32.totalorder %s24, 1
        %s272 = scalar_select %p271, %s24, 1
        %s273 = smul.addr %s272, 18
        %s274 = smul.addr %s273, 4
        %s275 = scalar_lea.vmem %s2, %s274
        %p276 = pneg %p97
        %p277 = pneg %p94
        %p278 = scmp.lt.s32.totalorder %s24, 1
        %s279 = scalar_select %p278, %s24, 1
        %s280 = smul.addr %s279, 18
        %s281 = smul.addr %s280, 4
        %s282 = scalar_lea.vmem %s3, %s281
        %p283 = pneg %p123
        %p284 = pneg %p120
        %p285 = pneg %p144
        %p286 = pneg %p141
        %p287 = pneg %p170
        %p288 = pneg %p167
        %s289 = sand.u32 %s157, 1
        %s290 = scalar_lea.sflag [#allocation3], %s289
        %s291 = sand.u32 %s157, 1
        %s292 = smul.addr %s291, 32
        %s293 = scalar_lea.vmem [#allocation2], %s292
        %p294 = pneg %p196
        %p295 = pneg %p193
        %s296 = sand.u32 %s183, 1
        %s297 = scalar_lea.sflag [#allocation5], %s296
        %s298 = sand.u32 %s183, 1
        %s299 = smul.addr %s298, 8
        %s300 = scalar_lea.vmem [#allocation4], %s299
        %p301 = scmp.lt.s32.totalorder %s24, 1
        %s302 = scalar_select %p301, %s24, 1
        %s303 = smul.addr %s302, 18
        %s304 = smul.addr %s303, 4
        %s305 = scalar_lea.vmem %s0, %s304
        %p306 = scmp.lt.s32.totalorder %s24, 1
        %s307 = scalar_select %p306, %s24, 1
        %s308 = smul.addr %s307, 18
        %s309 = smul.addr %s308, 4
        %s310 = scalar_lea.vmem %s1, %s309
        %p311 = scmp.lt.s32.totalorder %s24, 1
        %s312 = scalar_select %p311, %s24, 1
        %s313 = smul.addr %s312, 18
        %s314 = smul.addr %s313, 4
        %s315 = scalar_lea.vmem %s2, %s314
        %p316 = scmp.lt.s32.totalorder %s24, 1
        %s317 = scalar_select %p316, %s24, 1
        %s318 = smul.addr %s317, 18
        %s319 = smul.addr %s318, 4
        %s320 = scalar_lea.vmem %s3, %s319
        %s321 = smul.u32 8, %s24
        %v323 = vld [vmem:[%s305] sm:$0xf]
        %v324 = vld [vmem:[%s305 + $0x8] sm:$0xf]
        %v325 = vld [vmem:[%s305 + $0x10] sm:$0xf]
        %v326 = vld [vmem:[%s305 + $0x18] sm:$0xf]
        %v327 = vld [vmem:[%s305 + $0x20] sm:$0xf]
        %v328 = vld [vmem:[%s305 + $0x28] sm:$0xf]
        %v329 = vld [vmem:[%s305 + $0x30] sm:$0xf]
        %v330 = vld [vmem:[%s305 + $0x38] sm:$0xf]
        %v331 = vld [vmem:[%s4] sm:$0x3]
        %v332 = vld [vmem:[%s310] sm:$0xf]
        %v333 = vld [vmem:[%s310 + $0x8] sm:$0xf]
        %v334 = vld [vmem:[%s310 + $0x10] sm:$0xf]
        %v335 = vld [vmem:[%s310 + $0x18] sm:$0xf]
        %v336 = vld [vmem:[%s310 + $0x20] sm:$0xf]
        %v337 = vld [vmem:[%s310 + $0x28] sm:$0xf]
        %v338 = vld [vmem:[%s310 + $0x30] sm:$0xf]
        %v339 = vld [vmem:[%s310 + $0x38] sm:$0xf]
        %s340 = scalar_lea.vmem %s4, 2
        %v341 = vld [vmem:[%s340] sm:$0x3]
        %v350 = vunpack.c.l.b16 %v332
        %v351 = vunpack.c.l.b16 %v333
        %v352 = vunpack.c.l.b16 %v334
        %v353 = vunpack.c.l.b16 %v335
        %v354 = vunpack.c.l.b16 %v336
        %v355 = vunpack.c.l.b16 %v337
        %v356 = vunpack.c.l.b16 %v338
        %v357 = vunpack.c.l.b16 %v339
        %v358 = vpack.c.b16 %v351, %v350
        %v359 = vpack.c.b16 %v353, %v352
        %v360 = vpack.c.b16 %v355, %v354
        %v361 = vpack.c.b16 %v357, %v356
        %vm362 = vcmask 31744
        %v364 = vsel %vm362, %v358, 0
        %v367 = vsel %vm362, %v359, 0
        %v370 = vsel %vm362, %v360, 0
        %v373 = vsel %vm362, %v361, 0
        %vm375 = vcmask 1041408
        %v377 = vsel %vm375, %v341, 0
        %379 = vmatprep.subr.bf16.mxu0 0
        %380 = vmatpush1.bf16.msra.mxu0 %v377
        %381 = vmatprep.subr.bf16.mxu0 0
        %382 = vmatpush1.bf16.msra.mxu0 0
        %383 = vmatprep.subr.bf16.mxu0 0
        %384 = vmatpush1.bf16.msra.mxu0 0
        %385 = vmatprep.subr.bf16.mxu0 0
        %386 = vmatpush1.bf16.msra.mxu0 0
        %387 = vmatprep.subr.bf16.mxu0 0
        %388 = vmatpush1.bf16.msra.mxu0 0
        %389 = vmatprep.subr.bf16.mxu0 0
        %390 = vmatpush1.bf16.msra.mxu0 0
        %391 = vmatprep.subr.bf16.mxu0 0
        %392 = vmatpush1.bf16.msra.mxu0 0
        %393 = vmatprep.subr.bf16.mxu0 0
        %394 = vmatpush1.bf16.msra.mxu0 0
        %395 = vmatprep.subr.bf16.mxu0 0
        %396 = vmatpush1.bf16.msra.mxu0 0
        %397 = vmatprep.subr.bf16.mxu0 0
        %398 = vmatpush1.bf16.msra.mxu0 0
        %399 = vmatprep.subr.bf16.mxu0 0
        %400 = vmatpush1.bf16.msra.mxu0 0
        %401 = vmatprep.subr.bf16.mxu0 0
        %402 = vmatpush1.bf16.msra.mxu0 0
        %403 = vmatprep.subr.bf16.mxu0 0
        %404 = vmatpush1.bf16.msra.mxu0 0
        %405 = vmatprep.subr.bf16.mxu0 0
        %406 = vmatpush1.bf16.msra.mxu0 0
        %407 = vmatprep.subr.bf16.mxu0 0
        %408 = vmatpush1.bf16.msra.mxu0 0
        %409 = vmatprep.subr.bf16.mxu0 0
        %410 = vmatpush1.bf16.msra.mxu0 0
        %411 = vmatprep.mubr.bf16.mxu0 0
        %412 = vmatmul.mubr.bf16.gmra.mrb[0].mxu0 %v364
        %v413 = vpop.f32.mrb[0].mxu0
        %v414 = vadd.f32 0.0, %v413
        %v415 = vpop.f32.mrb[0].mxu0
        %v416 = vpop.f32.mrb[0].mxu0
        %v417 = vadd.f32 0.0, %v416
        %v418 = vpop.f32.mrb[0].mxu0
        %419 = vmatprep.mubr.bf16.mxu0 0
        %420 = vmatmul.mubr.bf16.gmra.mrb[0].mxu0 %v367
        %v421 = vpop.f32.mrb[0].mxu0
        %v422 = vadd.f32 0.0, %v421
        %v423 = vpop.f32.mrb[0].mxu0
        %v424 = vpop.f32.mrb[0].mxu0
        %v425 = vadd.f32 0.0, %v424
        %v426 = vpop.f32.mrb[0].mxu0
        %427 = vmatprep.mubr.bf16.mxu0 0
        %428 = vmatmul.mubr.bf16.gmra.mrb[0].mxu0 %v370
        %v429 = vpop.f32.mrb[0].mxu0
        %v430 = vadd.f32 0.0, %v429
        %v431 = vpop.f32.mrb[0].mxu0
        %v432 = vpop.f32.mrb[0].mxu0
        %v433 = vadd.f32 0.0, %v432
        %v434 = vpop.f32.mrb[0].mxu0
        %435 = vmatprep.mubr.bf16.mxu0 0
        %436 = vmatmul.mubr.bf16.gmra.mrb[0].mxu0 %v373
        %v437 = vpop.f32.mrb[0].mxu0
        %v438 = vadd.f32 0.0, %v437
        %v439 = vpop.f32.mrb[0].mxu0
        %v440 = vpop.f32.mrb[0].mxu0
        %v441 = vadd.f32 0.0, %v440
        %v442 = vpop.f32.mrb[0].mxu0
        %443 = vdwg.mxu0
        %v452 = vunpack.c.l.b16 %v323
        %v453 = vunpack.c.l.b16 %v324
        %v454 = vunpack.c.l.b16 %v325
        %v455 = vunpack.c.l.b16 %v326
        %v456 = vunpack.c.l.b16 %v327
        %v457 = vunpack.c.l.b16 %v328
        %v458 = vunpack.c.l.b16 %v329
        %v459 = vunpack.c.l.b16 %v330
        %v460 = vpack.c.b16 %v453, %v452
        %v461 = vpack.c.b16 %v455, %v454
        %v462 = vpack.c.b16 %v457, %v456
        %v463 = vpack.c.b16 %v459, %v458
        %v465 = vsel %vm362, %v460, 0
        %v468 = vsel %vm362, %v461, 0
        %v471 = vsel %vm362, %v462, 0
        %v474 = vsel %vm362, %v463, 0
        %v477 = vsel %vm375, %v331, 0
        %479 = vmatprep.subr.bf16.mxu0 0
        %480 = vmatpush1.bf16.msra.mxu0 %v477
        %481 = vmatprep.subr.bf16.mxu0 0
        %482 = vmatpush1.bf16.msra.mxu0 0
        %483 = vmatprep.subr.bf16.mxu0 0
        %484 = vmatpush1.bf16.msra.mxu0 0
        %485 = vmatprep.subr.bf16.mxu0 0
        %486 = vmatpush1.bf16.msra.mxu0 0
        %487 = vmatprep.subr.bf16.mxu0 0
        %488 = vmatpush1.bf16.msra.mxu0 0
        %489 = vmatprep.subr.bf16.mxu0 0
        %490 = vmatpush1.bf16.msra.mxu0 0
        %491 = vmatprep.subr.bf16.mxu0 0
        %492 = vmatpush1.bf16.msra.mxu0 0
        %493 = vmatprep.subr.bf16.mxu0 0
        %494 = vmatpush1.bf16.msra.mxu0 0
        %495 = vmatprep.subr.bf16.mxu0 0
        %496 = vmatpush1.bf16.msra.mxu0 0
        %497 = vmatprep.subr.bf16.mxu0 0
        %498 = vmatpush1.bf16.msra.mxu0 0
        %499 = vmatprep.subr.bf16.mxu0 0
        %500 = vmatpush1.bf16.msra.mxu0 0
        %501 = vmatprep.subr.bf16.mxu0 0
        %502 = vmatpush1.bf16.msra.mxu0 0
        %503 = vmatprep.subr.bf16.mxu0 0
        %504 = vmatpush1.bf16.msra.mxu0 0
        %505 = vmatprep.subr.bf16.mxu0 0
        %506 = vmatpush1.bf16.msra.mxu0 0
        %507 = vmatprep.subr.bf16.mxu0 0
        %508 = vmatpush1.bf16.msra.mxu0 0
        %509 = vmatprep.subr.bf16.mxu0 0
        %510 = vmatpush1.bf16.msra.mxu0 0
        %511 = vmatprep.mubr.bf16.mxu0 0
        %512 = vmatmul.mubr.bf16.gmra.mrb[0].mxu0 %v465
        %v513 = vpop.f32.mrb[0].mxu0
        %v514 = vadd.f32 %v414, %v513
        %v515 = vpop.f32.mrb[0].mxu0
        %v516 = vpop.f32.mrb[0].mxu0
        %v517 = vadd.f32 %v417, %v516
        %v518 = vpop.f32.mrb[0].mxu0
        %519 = vmatprep.mubr.bf16.mxu0 0
        %520 = vmatmul.mubr.bf16.gmra.mrb[0].mxu0 %v468
        %v521 = vpop.f32.mrb[0].mxu0
        %v522 = vadd.f32 %v422, %v521
        %v523 = vpop.f32.mrb[0].mxu0
        %v524 = vpop.f32.mrb[0].mxu0
        %v525 = vadd.f32 %v425, %v524
        %v526 = vpop.f32.mrb[0].mxu0
        %527 = vmatprep.mubr.bf16.mxu0 0
        %528 = vmatmul.mubr.bf16.gmra.mrb[0].mxu0 %v471
        %v529 = vpop.f32.mrb[0].mxu0
        %v530 = vadd.f32 %v430, %v529
        %v531 = vpop.f32.mrb[0].mxu0
        %v532 = vpop.f32.mrb[0].mxu0
        %v533 = vadd.f32 %v433, %v532
        %v534 = vpop.f32.mrb[0].mxu0
        %535 = vmatprep.mubr.bf16.mxu0 0
        %536 = vmatmul.mubr.bf16.gmra.mrb[0].mxu0 %v474
        %v537 = vpop.f32.mrb[0].mxu0
        %v538 = vadd.f32 %v438, %v537
        %v539 = vpop.f32.mrb[0].mxu0
        %v540 = vpop.f32.mrb[0].mxu0
        %v541 = vadd.f32 %v441, %v540
        %v542 = vpop.f32.mrb[0].mxu0
        %543 = vdwg.mxu0
        %v544 = vld [vmem:[%s305] sm:$0xf]
        %v545 = vld [vmem:[%s305 + $0x4] sm:$0x1]
        %v546 = vld [vmem:[%s305 + $0x8] sm:$0xf]
        %v547 = vld [vmem:[%s305 + $0xc] sm:$0x1]
        %v548 = vld [vmem:[%s305 + $0x10] sm:$0xf]
        %v549 = vld [vmem:[%s305 + $0x14] sm:$0x1]
        %v550 = vld [vmem:[%s305 + $0x18] sm:$0xf]
        %v551 = vld [vmem:[%s305 + $0x1c] sm:$0x1]
        %v552 = vld [vmem:[%s305 + $0x20] sm:$0xf]
        %v553 = vld [vmem:[%s305 + $0x24] sm:$0x1]
        %v554 = vld [vmem:[%s305 + $0x28] sm:$0xf]
        %v555 = vld [vmem:[%s305 + $0x2c] sm:$0x1]
        %v556 = vld [vmem:[%s305 + $0x30] sm:$0xf]
        %v557 = vld [vmem:[%s305 + $0x34] sm:$0x1]
        %v558 = vld [vmem:[%s305 + $0x38] sm:$0xf]
        %v559 = vld [vmem:[%s305 + $0x3c] sm:$0x1]
        %vm560 = vsmask.f32 3328
        %vm561 = vsmask.f32 7440
        %vm562 = vmor %vm560, %vm561
        %v564 = vshrl.u32 %v544, 16
        %v566 = vrot.slane %v564, 4
        %v567 = vshll.u32 %v544, 16
        %v569 = vrot.slane %v567, 5
        %v570 = vor.u32 %v566, %v569
        %v571 = vrot.slane %v570, 4
        %v573 = vshll.u32 %v545, 16
        %v575 = vrot.slane %v573, 5
        %v576 = vsel %vm562, %v571, %v575
        %v578 = vshrl.u32 %v546, 16
        %v580 = vrot.slane %v578, 4
        %v581 = vshll.u32 %v546, 16
        %v583 = vrot.slane %v581, 5
        %v584 = vor.u32 %v580, %v583
        %v585 = vrot.slane %v584, 4
        %v587 = vshll.u32 %v547, 16
        %v589 = vrot.slane %v587, 5
        %v590 = vsel %vm562, %v585, %v589
        %v592 = vshrl.u32 %v548, 16
        %v594 = vrot.slane %v592, 4
        %v595 = vshll.u32 %v548, 16
        %v597 = vrot.slane %v595, 5
        %v598 = vor.u32 %v594, %v597
        %v599 = vrot.slane %v598, 4
        %v601 = vshll.u32 %v549, 16
        %v603 = vrot.slane %v601, 5
        %v604 = vsel %vm562, %v599, %v603
        %v606 = vshrl.u32 %v550, 16
        %v608 = vrot.slane %v606, 4
        %v609 = vshll.u32 %v550, 16
        %v611 = vrot.slane %v609, 5
        %v612 = vor.u32 %v608, %v611
        %v613 = vrot.slane %v612, 4
        %v615 = vshll.u32 %v551, 16
        %v617 = vrot.slane %v615, 5
        %v618 = vsel %vm562, %v613, %v617
        %v620 = vshrl.u32 %v552, 16
        %v622 = vrot.slane %v620, 4
        %v623 = vshll.u32 %v552, 16
        %v625 = vrot.slane %v623, 5
        %v626 = vor.u32 %v622, %v625
        %v627 = vrot.slane %v626, 4
        %v629 = vshll.u32 %v553, 16
        %v631 = vrot.slane %v629, 5
        %v632 = vsel %vm562, %v627, %v631
        %v634 = vshrl.u32 %v554, 16
        %v636 = vrot.slane %v634, 4
        %v637 = vshll.u32 %v554, 16
        %v639 = vrot.slane %v637, 5
        %v640 = vor.u32 %v636, %v639
        %v641 = vrot.slane %v640, 4
        %v643 = vshll.u32 %v555, 16
        %v645 = vrot.slane %v643, 5
        %v646 = vsel %vm562, %v641, %v645
        %v648 = vshrl.u32 %v556, 16
        %v650 = vrot.slane %v648, 4
        %v651 = vshll.u32 %v556, 16
        %v653 = vrot.slane %v651, 5
        %v654 = vor.u32 %v650, %v653
        %v655 = vrot.slane %v654, 4
        %v657 = vshll.u32 %v557, 16
        %v659 = vrot.slane %v657, 5
        %v660 = vsel %vm562, %v655, %v659
        %v662 = vshrl.u32 %v558, 16
        %v664 = vrot.slane %v662, 4
        %v665 = vshll.u32 %v558, 16
        %v667 = vrot.slane %v665, 5
        %v668 = vor.u32 %v664, %v667
        %v669 = vrot.slane %v668, 4
        %v671 = vshll.u32 %v559, 16
        %v673 = vrot.slane %v671, 5
        %v674 = vsel %vm562, %v669, %v673
        %s675 = scalar_lea.vmem %s4, 4
        %v676 = vld [vmem:[%s675] sm:$0x3]
        %v677 = vunpack.c.l.b16 %v576
        %v678 = vunpack.c.l.b16 %v590
        %v679 = vunpack.c.l.b16 %v604
        %v680 = vunpack.c.l.b16 %v618
        %v681 = vunpack.c.l.b16 %v632
        %v682 = vunpack.c.l.b16 %v646
        %v683 = vunpack.c.l.b16 %v660
        %v684 = vunpack.c.l.b16 %v674
        %v685 = vpack.c.b16 %v678, %v677
        %v686 = vpack.c.b16 %v680, %v679
        %v687 = vpack.c.b16 %v682, %v681
        %v688 = vpack.c.b16 %v684, %v683
        %v690 = vsel %vm362, %v685, 0
        %v693 = vsel %vm362, %v686, 0
        %v696 = vsel %vm362, %v687, 0
        %v699 = vsel %vm362, %v688, 0
        %v702 = vsel %vm375, %v676, 0
        %704 = vmatprep.subr.bf16.mxu0 0
        %705 = vmatpush1.bf16.msra.mxu0 %v702
        %706 = vmatprep.subr.bf16.mxu0 0
        %707 = vmatpush1.bf16.msra.mxu0 0
        %708 = vmatprep.subr.bf16.mxu0 0
        %709 = vmatpush1.bf16.msra.mxu0 0
        %710 = vmatprep.subr.bf16.mxu0 0
        %711 = vmatpush1.bf16.msra.mxu0 0
        %712 = vmatprep.subr.bf16.mxu0 0
        %713 = vmatpush1.bf16.msra.mxu0 0
        %714 = vmatprep.subr.bf16.mxu0 0
        %715 = vmatpush1.bf16.msra.mxu0 0
        %716 = vmatprep.subr.bf16.mxu0 0
        %717 = vmatpush1.bf16.msra.mxu0 0
        %718 = vmatprep.subr.bf16.mxu0 0
        %719 = vmatpush1.bf16.msra.mxu0 0
        %720 = vmatprep.subr.bf16.mxu0 0
        %721 = vmatpush1.bf16.msra.mxu0 0
        %722 = vmatprep.subr.bf16.mxu0 0
        %723 = vmatpush1.bf16.msra.mxu0 0
        %724 = vmatprep.subr.bf16.mxu0 0
        %725 = vmatpush1.bf16.msra.mxu0 0
        %726 = vmatprep.subr.bf16.mxu0 0
        %727 = vmatpush1.bf16.msra.mxu0 0
        %728 = vmatprep.subr.bf16.mxu0 0
        %729 = vmatpush1.bf16.msra.mxu0 0
        %730 = vmatprep.subr.bf16.mxu0 0
        %731 = vmatpush1.bf16.msra.mxu0 0
        %732 = vmatprep.subr.bf16.mxu0 0
        %733 = vmatpush1.bf16.msra.mxu0 0
        %734 = vmatprep.subr.bf16.mxu0 0
        %735 = vmatpush1.bf16.msra.mxu0 0
        %736 = vmatprep.mubr.bf16.mxu0 0
        %737 = vmatmul.mubr.bf16.gmra.mrb[0].mxu0 %v690
        %v738 = vpop.f32.mrb[0].mxu0
        %v739 = vadd.f32 0.0, %v738
        %v740 = vpop.f32.mrb[0].mxu0
        %v741 = vpop.f32.mrb[0].mxu0
        %v742 = vadd.f32 0.0, %v741
        %v743 = vpop.f32.mrb[0].mxu0
        %744 = vmatprep.mubr.bf16.mxu0 0
        %745 = vmatmul.mubr.bf16.gmra.mrb[0].mxu0 %v693
        %v746 = vpop.f32.mrb[0].mxu0
        %v747 = vadd.f32 0.0, %v746
        %v748 = vpop.f32.mrb[0].mxu0
        %v749 = vpop.f32.mrb[0].mxu0
        %v750 = vadd.f32 0.0, %v749
        %v751 = vpop.f32.mrb[0].mxu0
        %752 = vmatprep.mubr.bf16.mxu0 0
        %753 = vmatmul.mubr.bf16.gmra.mrb[0].mxu0 %v696
        %v754 = vpop.f32.mrb[0].mxu0
        %v755 = vadd.f32 0.0, %v754
        %v756 = vpop.f32.mrb[0].mxu0
        %v757 = vpop.f32.mrb[0].mxu0
        %v758 = vadd.f32 0.0, %v757
        %v759 = vpop.f32.mrb[0].mxu0
        %760 = vmatprep.mubr.bf16.mxu0 0
        %761 = vmatmul.mubr.bf16.gmra.mrb[0].mxu0 %v699
        %v762 = vpop.f32.mrb[0].mxu0
        %v763 = vadd.f32 0.0, %v762
        %v764 = vpop.f32.mrb[0].mxu0
        %v765 = vpop.f32.mrb[0].mxu0
        %v766 = vadd.f32 0.0, %v765
        %v767 = vpop.f32.mrb[0].mxu0
        %768 = vdwg.mxu0
        %v769 = vadd.f32 %v514, %v739
        %v770 = vadd.f32 %v517, %v742
        %v771 = vadd.f32 %v522, %v747
        %v772 = vadd.f32 %v525, %v750
        %v773 = vadd.f32 %v530, %v755
        %v774 = vadd.f32 %v533, %v758
        %v775 = vadd.f32 %v538, %v763
        %v776 = vadd.f32 %v541, %v766
        %v777 = vld [vmem:[%s315] sm:$0xf]
        %v778 = vld [vmem:[%s315 + $0x8] sm:$0xf]
        %v779 = vld [vmem:[%s315 + $0x10] sm:$0xf]
        %v780 = vld [vmem:[%s315 + $0x18] sm:$0xf]
        %v781 = vld [vmem:[%s315 + $0x20] sm:$0xf]
        %v782 = vld [vmem:[%s315 + $0x28] sm:$0xf]
        %v783 = vld [vmem:[%s315 + $0x30] sm:$0xf]
        %v784 = vld [vmem:[%s315 + $0x38] sm:$0xf]
        %s785 = scalar_lea.vmem %s4, 6
        %v786 = vld [vmem:[%s785] sm:$0x3]
        %v795 = vunpack.c.l.b16 %v777
        %v796 = vunpack.c.l.b16 %v778
        %v797 = vunpack.c.l.b16 %v779
        %v798 = vunpack.c.l.b16 %v780
        %v799 = vunpack.c.l.b16 %v781
        %v800 = vunpack.c.l.b16 %v782
        %v801 = vunpack.c.l.b16 %v783
        %v802 = vunpack.c.l.b16 %v784
        %v803 = vpack.c.b16 %v796, %v795
        %v804 = vpack.c.b16 %v798, %v797
        %v805 = vpack.c.b16 %v800, %v799
        %v806 = vpack.c.b16 %v802, %v801
        %v808 = vsel %vm362, %v803, 0
        %v811 = vsel %vm362, %v804, 0
        %v814 = vsel %vm362, %v805, 0
        %v817 = vsel %vm362, %v806, 0
        %v820 = vsel %vm375, %v786, 0
        %822 = vmatprep.subr.bf16.mxu0 0
        %823 = vmatpush1.bf16.msra.mxu0 %v820
        %824 = vmatprep.subr.bf16.mxu0 0
        %825 = vmatpush1.bf16.msra.mxu0 0
        %826 = vmatprep.subr.bf16.mxu0 0
        %827 = vmatpush1.bf16.msra.mxu0 0
        %828 = vmatprep.subr.bf16.mxu0 0
        %829 = vmatpush1.bf16.msra.mxu0 0
        %830 = vmatprep.subr.bf16.mxu0 0
        %831 = vmatpush1.bf16.msra.mxu0 0
        %832 = vmatprep.subr.bf16.mxu0 0
        %833 = vmatpush1.bf16.msra.mxu0 0
        %834 = vmatprep.subr.bf16.mxu0 0
        %835 = vmatpush1.bf16.msra.mxu0 0
        %836 = vmatprep.subr.bf16.mxu0 0
        %837 = vmatpush1.bf16.msra.mxu0 0
        %838 = vmatprep.subr.bf16.mxu0 0
        %839 = vmatpush1.bf16.msra.mxu0 0
        %840 = vmatprep.subr.bf16.mxu0 0
        %841 = vmatpush1.bf16.msra.mxu0 0
        %842 = vmatprep.subr.bf16.mxu0 0
        %843 = vmatpush1.bf16.msra.mxu0 0
        %844 = vmatprep.subr.bf16.mxu0 0
        %845 = vmatpush1.bf16.msra.mxu0 0
        %846 = vmatprep.subr.bf16.mxu0 0
        %847 = vmatpush1.bf16.msra.mxu0 0
        %848 = vmatprep.subr.bf16.mxu0 0
        %849 = vmatpush1.bf16.msra.mxu0 0
        %850 = vmatprep.subr.bf16.mxu0 0
        %851 = vmatpush1.bf16.msra.mxu0 0
        %852 = vmatprep.subr.bf16.mxu0 0
        %853 = vmatpush1.bf16.msra.mxu0 0
        %854 = vmatprep.mubr.bf16.mxu0 0
        %855 = vmatmul.mubr.bf16.gmra.mrb[0].mxu0 %v808
        %v856 = vpop.f32.mrb[0].mxu0
        %v857 = vadd.f32 0.0, %v856
        %v858 = vpop.f32.mrb[0].mxu0
        %v859 = vpop.f32.mrb[0].mxu0
        %v860 = vadd.f32 0.0, %v859
        %v861 = vpop.f32.mrb[0].mxu0
        %862 = vmatprep.mubr.bf16.mxu0 0
        %863 = vmatmul.mubr.bf16.gmra.mrb[0].mxu0 %v811
        %v864 = vpop.f32.mrb[0].mxu0
        %v865 = vadd.f32 0.0, %v864
        %v866 = vpop.f32.mrb[0].mxu0
        %v867 = vpop.f32.mrb[0].mxu0
        %v868 = vadd.f32 0.0, %v867
        %v869 = vpop.f32.mrb[0].mxu0
        %870 = vmatprep.mubr.bf16.mxu0 0
        %871 = vmatmul.mubr.bf16.gmra.mrb[0].mxu0 %v814
        %v872 = vpop.f32.mrb[0].mxu0
        %v873 = vadd.f32 0.0, %v872
        %v874 = vpop.f32.mrb[0].mxu0
        %v875 = vpop.f32.mrb[0].mxu0
        %v876 = vadd.f32 0.0, %v875
        %v877 = vpop.f32.mrb[0].mxu0
        %878 = vmatprep.mubr.bf16.mxu0 0
        %879 = vmatmul.mubr.bf16.gmra.mrb[0].mxu0 %v817
        %v880 = vpop.f32.mrb[0].mxu0
        %v881 = vadd.f32 0.0, %v880
        %v882 = vpop.f32.mrb[0].mxu0
        %v883 = vpop.f32.mrb[0].mxu0
        %v884 = vadd.f32 0.0, %v883
        %v885 = vpop.f32.mrb[0].mxu0
        %886 = vdwg.mxu0
        %v887 = vadd.f32 %v769, %v857
        %v888 = vadd.f32 %v770, %v860
        %v889 = vadd.f32 %v771, %v865
        %v890 = vadd.f32 %v772, %v868
        %v891 = vadd.f32 %v773, %v873
        %v892 = vadd.f32 %v774, %v876
        %v893 = vadd.f32 %v775, %v881
        %v894 = vadd.f32 %v776, %v884
        %v895 = vld [vmem:[%s320] sm:$0xf]
        %v896 = vld [vmem:[%s320 + $0x8] sm:$0xf]
        %v897 = vld [vmem:[%s320 + $0x10] sm:$0xf]
        %v898 = vld [vmem:[%s320 + $0x18] sm:$0xf]
        %v899 = vld [vmem:[%s320 + $0x20] sm:$0xf]
        %v900 = vld [vmem:[%s320 + $0x28] sm:$0xf]
        %v901 = vld [vmem:[%s320 + $0x30] sm:$0xf]
        %v902 = vld [vmem:[%s320 + $0x38] sm:$0xf]
        %s903 = scalar_lea.vmem %s4, 8
        %v904 = vld [vmem:[%s903] sm:$0x3]
        %v913 = vunpack.c.l.b16 %v895
        %v914 = vunpack.c.l.b16 %v896
        %v915 = vunpack.c.l.b16 %v897
        %v916 = vunpack.c.l.b16 %v898
        %v917 = vunpack.c.l.b16 %v899
        %v918 = vunpack.c.l.b16 %v900
        %v919 = vunpack.c.l.b16 %v901
        %v920 = vunpack.c.l.b16 %v902
        %v921 = vpack.c.b16 %v914, %v913
        %v922 = vpack.c.b16 %v916, %v915
        %v923 = vpack.c.b16 %v918, %v917
        %v924 = vpack.c.b16 %v920, %v919
        %v926 = vsel %vm362, %v921, 0
        %v929 = vsel %vm362, %v922, 0
        %v932 = vsel %vm362, %v923, 0
        %v935 = vsel %vm362, %v924, 0
        %v938 = vsel %vm375, %v904, 0
        %940 = vmatprep.subr.bf16.mxu0 0
        %941 = vmatpush1.bf16.msra.mxu0 %v938
        %942 = vmatprep.subr.bf16.mxu0 0
        %943 = vmatpush1.bf16.msra.mxu0 0
        %944 = vmatprep.subr.bf16.mxu0 0
        %945 = vmatpush1.bf16.msra.mxu0 0
        %946 = vmatprep.subr.bf16.mxu0 0
        %947 = vmatpush1.bf16.msra.mxu0 0
        %948 = vmatprep.subr.bf16.mxu0 0
        %949 = vmatpush1.bf16.msra.mxu0 0
        %950 = vmatprep.subr.bf16.mxu0 0
        %951 = vmatpush1.bf16.msra.mxu0 0
        %952 = vmatprep.subr.bf16.mxu0 0
        %953 = vmatpush1.bf16.msra.mxu0 0
        %954 = vmatprep.subr.bf16.mxu0 0
        %955 = vmatpush1.bf16.msra.mxu0 0
        %956 = vmatprep.subr.bf16.mxu0 0
        %957 = vmatpush1.bf16.msra.mxu0 0
        %958 = vmatprep.subr.bf16.mxu0 0
        %959 = vmatpush1.bf16.msra.mxu0 0
        %960 = vmatprep.subr.bf16.mxu0 0
        %961 = vmatpush1.bf16.msra.mxu0 0
        %962 = vmatprep.subr.bf16.mxu0 0
        %963 = vmatpush1.bf16.msra.mxu0 0
        %964 = vmatprep.subr.bf16.mxu0 0
        %965 = vmatpush1.bf16.msra.mxu0 0
        %966 = vmatprep.subr.bf16.mxu0 0
        %967 = vmatpush1.bf16.msra.mxu0 0
        %968 = vmatprep.subr.bf16.mxu0 0
        %969 = vmatpush1.bf16.msra.mxu0 0
        %970 = vmatprep.subr.bf16.mxu0 0
        %971 = vmatpush1.bf16.msra.mxu0 0
        %972 = vmatprep.mubr.bf16.mxu0 0
        %973 = vmatmul.mubr.bf16.gmra.mrb[0].mxu0 %v926
        %v974 = vpop.f32.mrb[0].mxu0
        %v975 = vadd.f32 0.0, %v974
        %v976 = vpop.f32.mrb[0].mxu0
        %v977 = vpop.f32.mrb[0].mxu0
        %v978 = vadd.f32 0.0, %v977
        %v979 = vpop.f32.mrb[0].mxu0
        %980 = vmatprep.mubr.bf16.mxu0 0
        %981 = vmatmul.mubr.bf16.gmra.mrb[0].mxu0 %v929
        %v982 = vpop.f32.mrb[0].mxu0
        %v983 = vadd.f32 0.0, %v982
        %v984 = vpop.f32.mrb[0].mxu0
        %v985 = vpop.f32.mrb[0].mxu0
        %v986 = vadd.f32 0.0, %v985
        %v987 = vpop.f32.mrb[0].mxu0
        %988 = vmatprep.mubr.bf16.mxu0 0
        %989 = vmatmul.mubr.bf16.gmra.mrb[0].mxu0 %v932
        %v990 = vpop.f32.mrb[0].mxu0
        %v991 = vadd.f32 0.0, %v990
        %v992 = vpop.f32.mrb[0].mxu0
        %v993 = vpop.f32.mrb[0].mxu0
        %v994 = vadd.f32 0.0, %v993
        %v995 = vpop.f32.mrb[0].mxu0
        %996 = vmatprep.mubr.bf16.mxu0 0
        %997 = vmatmul.mubr.bf16.gmra.mrb[0].mxu0 %v935
        %v998 = vpop.f32.mrb[0].mxu0
        %v999 = vadd.f32 0.0, %v998
        %v1000 = vpop.f32.mrb[0].mxu0
        %v1001 = vpop.f32.mrb[0].mxu0
        %v1002 = vadd.f32 0.0, %v1001
        %v1003 = vpop.f32.mrb[0].mxu0
        %1004 = vdwg.mxu0
        %v1005 = vadd.f32 %v887, %v975
        %v1006 = vadd.f32 %v888, %v978
        %v1007 = vadd.f32 %v889, %v983
        %v1008 = vadd.f32 %v890, %v986
        %v1009 = vadd.f32 %v891, %v991
        %v1010 = vadd.f32 %v892, %v994
        %v1011 = vadd.f32 %v893, %v999
        %v1012 = vadd.f32 %v894, %v1002
        %v1013 = vld [vmem:[%s315] sm:$0xf]
        %v1014 = vld [vmem:[%s315 + $0x4] sm:$0x1]
        %v1015 = vld [vmem:[%s315 + $0x8] sm:$0xf]
        %v1016 = vld [vmem:[%s315 + $0xc] sm:$0x1]
        %v1017 = vld [vmem:[%s315 + $0x10] sm:$0xf]
        %v1018 = vld [vmem:[%s315 + $0x14] sm:$0x1]
        %v1019 = vld [vmem:[%s315 + $0x18] sm:$0xf]
        %v1020 = vld [vmem:[%s315 + $0x1c] sm:$0x1]
        %v1021 = vld [vmem:[%s315 + $0x20] sm:$0xf]
        %v1022 = vld [vmem:[%s315 + $0x24] sm:$0x1]
        %v1023 = vld [vmem:[%s315 + $0x28] sm:$0xf]
        %v1024 = vld [vmem:[%s315 + $0x2c] sm:$0x1]
        %v1025 = vld [vmem:[%s315 + $0x30] sm:$0xf]
        %v1026 = vld [vmem:[%s315 + $0x34] sm:$0x1]
        %v1027 = vld [vmem:[%s315 + $0x38] sm:$0xf]
        %v1028 = vld [vmem:[%s315 + $0x3c] sm:$0x1]
        %v1030 = vshrl.u32 %v1013, 16
        %v1032 = vrot.slane %v1030, 4
        %v1033 = vshll.u32 %v1013, 16
        %v1035 = vrot.slane %v1033, 5
        %v1036 = vor.u32 %v1032, %v1035
        %v1037 = vrot.slane %v1036, 4
        %v1039 = vshll.u32 %v1014, 16
        %v1041 = vrot.slane %v1039, 5
        %v1042 = vsel %vm562, %v1037, %v1041
        %v1044 = vshrl.u32 %v1015, 16
        %v1046 = vrot.slane %v1044, 4
        %v1047 = vshll.u32 %v1015, 16
        %v1049 = vrot.slane %v1047, 5
        %v1050 = vor.u32 %v1046, %v1049
        %v1051 = vrot.slane %v1050, 4
        %v1053 = vshll.u32 %v1016, 16
        %v1055 = vrot.slane %v1053, 5
        %v1056 = vsel %vm562, %v1051, %v1055
        %v1058 = vshrl.u32 %v1017, 16
        %v1060 = vrot.slane %v1058, 4
        %v1061 = vshll.u32 %v1017, 16
        %v1063 = vrot.slane %v1061, 5
        %v1064 = vor.u32 %v1060, %v1063
        %v1065 = vrot.slane %v1064, 4
        %v1067 = vshll.u32 %v1018, 16
        %v1069 = vrot.slane %v1067, 5
        %v1070 = vsel %vm562, %v1065, %v1069
        %v1072 = vshrl.u32 %v1019, 16
        %v1074 = vrot.slane %v1072, 4
        %v1075 = vshll.u32 %v1019, 16
        %v1077 = vrot.slane %v1075, 5
        %v1078 = vor.u32 %v1074, %v1077
        %v1079 = vrot.slane %v1078, 4
        %v1081 = vshll.u32 %v1020, 16
        %v1083 = vrot.slane %v1081, 5
        %v1084 = vsel %vm562, %v1079, %v1083
        %v1086 = vshrl.u32 %v1021, 16
        %v1088 = vrot.slane %v1086, 4
        %v1089 = vshll.u32 %v1021, 16
        %v1091 = vrot.slane %v1089, 5
        %v1092 = vor.u32 %v1088, %v1091
        %v1093 = vrot.slane %v1092, 4
        %v1095 = vshll.u32 %v1022, 16
        %v1097 = vrot.slane %v1095, 5
        %v1098 = vsel %vm562, %v1093, %v1097
        %v1100 = vshrl.u32 %v1023, 16
        %v1102 = vrot.slane %v1100, 4
        %v1103 = vshll.u32 %v1023, 16
        %v1105 = vrot.slane %v1103, 5
        %v1106 = vor.u32 %v1102, %v1105
        %v1107 = vrot.slane %v1106, 4
        %v1109 = vshll.u32 %v1024, 16
        %v1111 = vrot.slane %v1109, 5
        %v1112 = vsel %vm562, %v1107, %v1111
        %v1114 = vshrl.u32 %v1025, 16
        %v1116 = vrot.slane %v1114, 4
        %v1117 = vshll.u32 %v1025, 16
        %v1119 = vrot.slane %v1117, 5
        %v1120 = vor.u32 %v1116, %v1119
        %v1121 = vrot.slane %v1120, 4
        %v1123 = vshll.u32 %v1026, 16
        %v1125 = vrot.slane %v1123, 5
        %v1126 = vsel %vm562, %v1121, %v1125
        %v1128 = vshrl.u32 %v1027, 16
        %v1130 = vrot.slane %v1128, 4
        %v1131 = vshll.u32 %v1027, 16
        %v1133 = vrot.slane %v1131, 5
        %v1134 = vor.u32 %v1130, %v1133
        %v1135 = vrot.slane %v1134, 4
        %v1137 = vshll.u32 %v1028, 16
        %v1139 = vrot.slane %v1137, 5
        %v1140 = vsel %vm562, %v1135, %v1139
        %s1141 = scalar_lea.vmem %s4, 10
        %v1142 = vld [vmem:[%s1141] sm:$0x3]
        %v1143 = vunpack.c.l.b16 %v1042
        %v1144 = vunpack.c.l.b16 %v1056
        %v1145 = vunpack.c.l.b16 %v1070
        %v1146 = vunpack.c.l.b16 %v1084
        %v1147 = vunpack.c.l.b16 %v1098
        %v1148 = vunpack.c.l.b16 %v1112
        %v1149 = vunpack.c.l.b16 %v1126
        %v1150 = vunpack.c.l.b16 %v1140
        %v1151 = vpack.c.b16 %v1144, %v1143
        %v1152 = vpack.c.b16 %v1146, %v1145
        %v1153 = vpack.c.b16 %v1148, %v1147
        %v1154 = vpack.c.b16 %v1150, %v1149
        %v1156 = vsel %vm362, %v1151, 0
        %v1159 = vsel %vm362, %v1152, 0
        %v1162 = vsel %vm362, %v1153, 0
        %v1165 = vsel %vm362, %v1154, 0
        %v1168 = vsel %vm375, %v1142, 0
        %1170 = vmatprep.subr.bf16.mxu0 0
        %1171 = vmatpush1.bf16.msra.mxu0 %v1168
        %1172 = vmatprep.subr.bf16.mxu0 0
        %1173 = vmatpush1.bf16.msra.mxu0 0
        %1174 = vmatprep.subr.bf16.mxu0 0
        %1175 = vmatpush1.bf16.msra.mxu0 0
        %1176 = vmatprep.subr.bf16.mxu0 0
        %1177 = vmatpush1.bf16.msra.mxu0 0
        %1178 = vmatprep.subr.bf16.mxu0 0
        %1179 = vmatpush1.bf16.msra.mxu0 0
        %1180 = vmatprep.subr.bf16.mxu0 0
        %1181 = vmatpush1.bf16.msra.mxu0 0
        %1182 = vmatprep.subr.bf16.mxu0 0
        %1183 = vmatpush1.bf16.msra.mxu0 0
        %1184 = vmatprep.subr.bf16.mxu0 0
        %1185 = vmatpush1.bf16.msra.mxu0 0
        %1186 = vmatprep.subr.bf16.mxu0 0
        %1187 = vmatpush1.bf16.msra.mxu0 0
        %1188 = vmatprep.subr.bf16.mxu0 0
        %1189 = vmatpush1.bf16.msra.mxu0 0
        %1190 = vmatprep.subr.bf16.mxu0 0
        %1191 = vmatpush1.bf16.msra.mxu0 0
        %1192 = vmatprep.subr.bf16.mxu0 0
        %1193 = vmatpush1.bf16.msra.mxu0 0
        %1194 = vmatprep.subr.bf16.mxu0 0
        %1195 = vmatpush1.bf16.msra.mxu0 0
        %1196 = vmatprep.subr.bf16.mxu0 0
        %1197 = vmatpush1.bf16.msra.mxu0 0
        %1198 = vmatprep.subr.bf16.mxu0 0
        %1199 = vmatpush1.bf16.msra.mxu0 0
        %1200 = vmatprep.subr.bf16.mxu0 0
        %1201 = vmatpush1.bf16.msra.mxu0 0
        %1202 = vmatprep.mubr.bf16.mxu0 0
        %1203 = vmatmul.mubr.bf16.gmra.mrb[0].mxu0 %v1156
        %v1204 = vpop.f32.mrb[0].mxu0
        %v1205 = vadd.f32 0.0, %v1204
        %v1206 = vpop.f32.mrb[0].mxu0
        %v1207 = vpop.f32.mrb[0].mxu0
        %v1208 = vadd.f32 0.0, %v1207
        %v1209 = vpop.f32.mrb[0].mxu0
        %1210 = vmatprep.mubr.bf16.mxu0 0
        %1211 = vmatmul.mubr.bf16.gmra.mrb[0].mxu0 %v1159
        %v1212 = vpop.f32.mrb[0].mxu0
        %v1213 = vadd.f32 0.0, %v1212
        %v1214 = vpop.f32.mrb[0].mxu0
        %v1215 = vpop.f32.mrb[0].mxu0
        %v1216 = vadd.f32 0.0, %v1215
        %v1217 = vpop.f32.mrb[0].mxu0
        %1218 = vmatprep.mubr.bf16.mxu0 0
        %1219 = vmatmul.mubr.bf16.gmra.mrb[0].mxu0 %v1162
        %v1220 = vpop.f32.mrb[0].mxu0
        %v1221 = vadd.f32 0.0, %v1220
        %v1222 = vpop.f32.mrb[0].mxu0
        %v1223 = vpop.f32.mrb[0].mxu0
        %v1224 = vadd.f32 0.0, %v1223
        %v1225 = vpop.f32.mrb[0].mxu0
        %1226 = vmatprep.mubr.bf16.mxu0 0
        %1227 = vmatmul.mubr.bf16.gmra.mrb[0].mxu0 %v1165
        %v1228 = vpop.f32.mrb[0].mxu0
        %v1229 = vadd.f32 0.0, %v1228
        %v1230 = vpop.f32.mrb[0].mxu0
        %v1231 = vpop.f32.mrb[0].mxu0
        %v1232 = vadd.f32 0.0, %v1231
        %v1233 = vpop.f32.mrb[0].mxu0
        %1234 = vdwg.mxu0
        %v1235 = vadd.f32 %v1005, %v1205
        %v1236 = vadd.f32 %v1006, %v1208
        %v1237 = vadd.f32 %v1007, %v1213
        %v1238 = vadd.f32 %v1008, %v1216
        %v1239 = vadd.f32 %v1009, %v1221
        %v1240 = vadd.f32 %v1010, %v1224
        %v1241 = vadd.f32 %v1011, %v1229
        %v1242 = vadd.f32 %v1012, %v1232
        %s1243 = scalar_lea.vmem %s305, 8
        %v1244 = vld [vmem:[%s1243] sm:$0xf]
        %v1245 = vld [vmem:[%s1243 + $0x8] sm:$0xf]
        %v1246 = vld [vmem:[%s1243 + $0x10] sm:$0xf]
        %v1247 = vld [vmem:[%s1243 + $0x18] sm:$0xf]
        %v1248 = vld [vmem:[%s1243 + $0x20] sm:$0xf]
        %v1249 = vld [vmem:[%s1243 + $0x28] sm:$0xf]
        %v1250 = vld [vmem:[%s1243 + $0x30] sm:$0xf]
        %v1251 = vld [vmem:[%s1243 + $0x38] sm:$0xf]
        %s1252 = scalar_lea.vmem %s4, 12
        %v1253 = vld [vmem:[%s1252] sm:$0x3]
        %v1262 = vunpack.c.l.b16 %v1244
        %v1263 = vunpack.c.l.b16 %v1245
        %v1264 = vunpack.c.l.b16 %v1246
        %v1265 = vunpack.c.l.b16 %v1247
        %v1266 = vunpack.c.l.b16 %v1248
        %v1267 = vunpack.c.l.b16 %v1249
        %v1268 = vunpack.c.l.b16 %v1250
        %v1269 = vunpack.c.l.b16 %v1251
        %v1270 = vpack.c.b16 %v1263, %v1262
        %v1271 = vpack.c.b16 %v1265, %v1264
        %v1272 = vpack.c.b16 %v1267, %v1266
        %v1273 = vpack.c.b16 %v1269, %v1268
        %v1275 = vsel %vm362, %v1270, 0
        %v1278 = vsel %vm362, %v1271, 0
        %v1281 = vsel %vm362, %v1272, 0
        %v1284 = vsel %vm362, %v1273, 0
        %v1287 = vsel %vm375, %v1253, 0
        %1289 = vmatprep.subr.bf16.mxu0 0
        %1290 = vmatpush1.bf16.msra.mxu0 %v1287
        %1291 = vmatprep.subr.bf16.mxu0 0
        %1292 = vmatpush1.bf16.msra.mxu0 0
        %1293 = vmatprep.subr.bf16.mxu0 0
        %1294 = vmatpush1.bf16.msra.mxu0 0
        %1295 = vmatprep.subr.bf16.mxu0 0
        %1296 = vmatpush1.bf16.msra.mxu0 0
        %1297 = vmatprep.subr.bf16.mxu0 0
        %1298 = vmatpush1.bf16.msra.mxu0 0
        %1299 = vmatprep.subr.bf16.mxu0 0
        %1300 = vmatpush1.bf16.msra.mxu0 0
        %1301 = vmatprep.subr.bf16.mxu0 0
        %1302 = vmatpush1.bf16.msra.mxu0 0
        %1303 = vmatprep.subr.bf16.mxu0 0
        %1304 = vmatpush1.bf16.msra.mxu0 0
        %1305 = vmatprep.subr.bf16.mxu0 0
        %1306 = vmatpush1.bf16.msra.mxu0 0
        %1307 = vmatprep.subr.bf16.mxu0 0
        %1308 = vmatpush1.bf16.msra.mxu0 0
        %1309 = vmatprep.subr.bf16.mxu0 0
        %1310 = vmatpush1.bf16.msra.mxu0 0
        %1311 = vmatprep.subr.bf16.mxu0 0
        %1312 = vmatpush1.bf16.msra.mxu0 0
        %1313 = vmatprep.subr.bf16.mxu0 0
        %1314 = vmatpush1.bf16.msra.mxu0 0
        %1315 = vmatprep.subr.bf16.mxu0 0
        %1316 = vmatpush1.bf16.msra.mxu0 0
        %1317 = vmatprep.subr.bf16.mxu0 0
        %1318 = vmatpush1.bf16.msra.mxu0 0
        %1319 = vmatprep.subr.bf16.mxu0 0
        %1320 = vmatpush1.bf16.msra.mxu0 0
        %1321 = vmatprep.mubr.bf16.mxu0 0
        %1322 = vmatmul.mubr.bf16.gmra.mrb[0].mxu0 %v1275
        %v1323 = vpop.f32.mrb[0].mxu0
        %v1324 = vadd.f32 0.0, %v1323
        %v1325 = vpop.f32.mrb[0].mxu0
        %v1326 = vpop.f32.mrb[0].mxu0
        %v1327 = vadd.f32 0.0, %v1326
        %v1328 = vpop.f32.mrb[0].mxu0
        %1329 = vmatprep.mubr.bf16.mxu0 0
        %1330 = vmatmul.mubr.bf16.gmra.mrb[0].mxu0 %v1278
        %v1331 = vpop.f32.mrb[0].mxu0
        %v1332 = vadd.f32 0.0, %v1331
        %v1333 = vpop.f32.mrb[0].mxu0
        %v1334 = vpop.f32.mrb[0].mxu0
        %v1335 = vadd.f32 0.0, %v1334
        %v1336 = vpop.f32.mrb[0].mxu0
        %1337 = vmatprep.mubr.bf16.mxu0 0
        %1338 = vmatmul.mubr.bf16.gmra.mrb[0].mxu0 %v1281
        %v1339 = vpop.f32.mrb[0].mxu0
        %v1340 = vadd.f32 0.0, %v1339
        %v1341 = vpop.f32.mrb[0].mxu0
        %v1342 = vpop.f32.mrb[0].mxu0
        %v1343 = vadd.f32 0.0, %v1342
        %v1344 = vpop.f32.mrb[0].mxu0
        %1345 = vmatprep.mubr.bf16.mxu0 0
        %1346 = vmatmul.mubr.bf16.gmra.mrb[0].mxu0 %v1284
        %v1347 = vpop.f32.mrb[0].mxu0
        %v1348 = vadd.f32 0.0, %v1347
        %v1349 = vpop.f32.mrb[0].mxu0
        %v1350 = vpop.f32.mrb[0].mxu0
        %v1351 = vadd.f32 0.0, %v1350
        %v1352 = vpop.f32.mrb[0].mxu0
        %1353 = vdwg.mxu0
        %v1354 = vadd.f32 %v1235, %v1324
        %v1355 = vadd.f32 %v1236, %v1327
        %v1356 = vadd.f32 %v1237, %v1332
        %v1357 = vadd.f32 %v1238, %v1335
        %v1358 = vadd.f32 %v1239, %v1340
        %v1359 = vadd.f32 %v1240, %v1343
        %v1360 = vadd.f32 %v1241, %v1348
        %v1361 = vadd.f32 %v1242, %v1351
        %s1362 = scalar_lea.vmem %s310, 8
        %v1363 = vld [vmem:[%s1362] sm:$0xf]
        %v1364 = vld [vmem:[%s1362 + $0x8] sm:$0xf]
        %v1365 = vld [vmem:[%s1362 + $0x10] sm:$0xf]
        %v1366 = vld [vmem:[%s1362 + $0x18] sm:$0xf]
        %v1367 = vld [vmem:[%s1362 + $0x20] sm:$0xf]
        %v1368 = vld [vmem:[%s1362 + $0x28] sm:$0xf]
        %v1369 = vld [vmem:[%s1362 + $0x30] sm:$0xf]
        %v1370 = vld [vmem:[%s1362 + $0x38] sm:$0xf]
        %s1371 = scalar_lea.vmem %s4, 14
        %v1372 = vld [vmem:[%s1371] sm:$0x3]
        %v1381 = vunpack.c.l.b16 %v1363
        %v1382 = vunpack.c.l.b16 %v1364
        %v1383 = vunpack.c.l.b16 %v1365
        %v1384 = vunpack.c.l.b16 %v1366
        %v1385 = vunpack.c.l.b16 %v1367
        %v1386 = vunpack.c.l.b16 %v1368
        %v1387 = vunpack.c.l.b16 %v1369
        %v1388 = vunpack.c.l.b16 %v1370
        %v1389 = vpack.c.b16 %v1382, %v1381
        %v1390 = vpack.c.b16 %v1384, %v1383
        %v1391 = vpack.c.b16 %v1386, %v1385
        %v1392 = vpack.c.b16 %v1388, %v1387
        %v1394 = vsel %vm362, %v1389, 0
        %v1397 = vsel %vm362, %v1390, 0
        %v1400 = vsel %vm362, %v1391, 0
        %v1403 = vsel %vm362, %v1392, 0
        %v1406 = vsel %vm375, %v1372, 0
        %1408 = vmatprep.subr.bf16.mxu0 0
        %1409 = vmatpush1.bf16.msra.mxu0 %v1406
        %1410 = vmatprep.subr.bf16.mxu0 0
        %1411 = vmatpush1.bf16.msra.mxu0 0
        %1412 = vmatprep.subr.bf16.mxu0 0
        %1413 = vmatpush1.bf16.msra.mxu0 0
        %1414 = vmatprep.subr.bf16.mxu0 0
        %1415 = vmatpush1.bf16.msra.mxu0 0
        %1416 = vmatprep.subr.bf16.mxu0 0
        %1417 = vmatpush1.bf16.msra.mxu0 0
        %1418 = vmatprep.subr.bf16.mxu0 0
        %1419 = vmatpush1.bf16.msra.mxu0 0
        %1420 = vmatprep.subr.bf16.mxu0 0
        %1421 = vmatpush1.bf16.msra.mxu0 0
        %1422 = vmatprep.subr.bf16.mxu0 0
        %1423 = vmatpush1.bf16.msra.mxu0 0
        %1424 = vmatprep.subr.bf16.mxu0 0
        %1425 = vmatpush1.bf16.msra.mxu0 0
        %1426 = vmatprep.subr.bf16.mxu0 0
        %1427 = vmatpush1.bf16.msra.mxu0 0
        %1428 = vmatprep.subr.bf16.mxu0 0
        %1429 = vmatpush1.bf16.msra.mxu0 0
        %1430 = vmatprep.subr.bf16.mxu0 0
        %1431 = vmatpush1.bf16.msra.mxu0 0
        %1432 = vmatprep.subr.bf16.mxu0 0
        %1433 = vmatpush1.bf16.msra.mxu0 0
        %1434 = vmatprep.subr.bf16.mxu0 0
        %1435 = vmatpush1.bf16.msra.mxu0 0
        %1436 = vmatprep.subr.bf16.mxu0 0
        %1437 = vmatpush1.bf16.msra.mxu0 0
        %1438 = vmatprep.subr.bf16.mxu0 0
        %1439 = vmatpush1.bf16.msra.mxu0 0
        %1440 = vmatprep.mubr.bf16.mxu0 0
        %1441 = vmatmul.mubr.bf16.gmra.mrb[0].mxu0 %v1394
        %v1442 = vpop.f32.mrb[0].mxu0
        %v1443 = vadd.f32 0.0, %v1442
        %v1444 = vpop.f32.mrb[0].mxu0
        %v1445 = vpop.f32.mrb[0].mxu0
        %v1446 = vadd.f32 0.0, %v1445
        %v1447 = vpop.f32.mrb[0].mxu0
        %1448 = vmatprep.mubr.bf16.mxu0 0
        %1449 = vmatmul.mubr.bf16.gmra.mrb[0].mxu0 %v1397
        %v1450 = vpop.f32.mrb[0].mxu0
        %v1451 = vadd.f32 0.0, %v1450
        %v1452 = vpop.f32.mrb[0].mxu0
        %v1453 = vpop.f32.mrb[0].mxu0
        %v1454 = vadd.f32 0.0, %v1453
        %v1455 = vpop.f32.mrb[0].mxu0
        %1456 = vmatprep.mubr.bf16.mxu0 0
        %1457 = vmatmul.mubr.bf16.gmra.mrb[0].mxu0 %v1400
        %v1458 = vpop.f32.mrb[0].mxu0
        %v1459 = vadd.f32 0.0, %v1458
        %v1460 = vpop.f32.mrb[0].mxu0
        %v1461 = vpop.f32.mrb[0].mxu0
        %v1462 = vadd.f32 0.0, %v1461
        %v1463 = vpop.f32.mrb[0].mxu0
        %1464 = vmatprep.mubr.bf16.mxu0 0
        %1465 = vmatmul.mubr.bf16.gmra.mrb[0].mxu0 %v1403
        %v1466 = vpop.f32.mrb[0].mxu0
        %v1467 = vadd.f32 0.0, %v1466
        %v1468 = vpop.f32.mrb[0].mxu0
        %v1469 = vpop.f32.mrb[0].mxu0
        %v1470 = vadd.f32 0.0, %v1469
        %v1471 = vpop.f32.mrb[0].mxu0
        %1472 = vdwg.mxu0
        %v1473 = vadd.f32 %v1354, %v1443
        %v1474 = vadd.f32 %v1355, %v1446
        %v1475 = vadd.f32 %v1356, %v1451
        %v1476 = vadd.f32 %v1357, %v1454
        %v1477 = vadd.f32 %v1358, %v1459
        %v1478 = vadd.f32 %v1359, %v1462
        %v1479 = vadd.f32 %v1360, %v1467
        %v1480 = vadd.f32 %v1361, %v1470
        %v1481 = vld [vmem:[%s1243] sm:$0xf]
        %v1482 = vld [vmem:[%s1243 + $0x4] sm:$0x1]
        %v1483 = vld [vmem:[%s1243 + $0x8] sm:$0xf]
        %v1484 = vld [vmem:[%s1243 + $0xc] sm:$0x1]
        %v1485 = vld [vmem:[%s1243 + $0x10] sm:$0xf]
        %v1486 = vld [vmem:[%s1243 + $0x14] sm:$0x1]
        %v1487 = vld [vmem:[%s1243 + $0x18] sm:$0xf]
        %v1488 = vld [vmem:[%s1243 + $0x1c] sm:$0x1]
        %v1489 = vld [vmem:[%s1243 + $0x20] sm:$0xf]
        %v1490 = vld [vmem:[%s1243 + $0x24] sm:$0x1]
        %v1491 = vld [vmem:[%s1243 + $0x28] sm:$0xf]
        %v1492 = vld [vmem:[%s1243 + $0x2c] sm:$0x1]
        %v1493 = vld [vmem:[%s1243 + $0x30] sm:$0xf]
        %v1494 = vld [vmem:[%s1243 + $0x34] sm:$0x1]
        %v1495 = vld [vmem:[%s1243 + $0x38] sm:$0xf]
        %v1496 = vld [vmem:[%s1243 + $0x3c] sm:$0x1]
        %v1498 = vshrl.u32 %v1481, 16
        %v1500 = vrot.slane %v1498, 4
        %v1501 = vshll.u32 %v1481, 16
        %v1503 = vrot.slane %v1501, 5
        %v1504 = vor.u32 %v1500, %v1503
        %v1505 = vrot.slane %v1504, 4
        %v1507 = vshll.u32 %v1482, 16
        %v1509 = vrot.slane %v1507, 5
        %v1510 = vsel %vm562, %v1505, %v1509
        %v1512 = vshrl.u32 %v1483, 16
        %v1514 = vrot.slane %v1512, 4
        %v1515 = vshll.u32 %v1483, 16
        %v1517 = vrot.slane %v1515, 5
        %v1518 = vor.u32 %v1514, %v1517
        %v1519 = vrot.slane %v1518, 4
        %v1521 = vshll.u32 %v1484, 16
        %v1523 = vrot.slane %v1521, 5
        %v1524 = vsel %vm562, %v1519, %v1523
        %v1526 = vshrl.u32 %v1485, 16
        %v1528 = vrot.slane %v1526, 4
        %v1529 = vshll.u32 %v1485, 16
        %v1531 = vrot.slane %v1529, 5
        %v1532 = vor.u32 %v1528, %v1531
        %v1533 = vrot.slane %v1532, 4
        %v1535 = vshll.u32 %v1486, 16
        %v1537 = vrot.slane %v1535, 5
        %v1538 = vsel %vm562, %v1533, %v1537
        %v1540 = vshrl.u32 %v1487, 16
        %v1542 = vrot.slane %v1540, 4
        %v1543 = vshll.u32 %v1487, 16
        %v1545 = vrot.slane %v1543, 5
        %v1546 = vor.u32 %v1542, %v1545
        %v1547 = vrot.slane %v1546, 4
        %v1549 = vshll.u32 %v1488, 16
        %v1551 = vrot.slane %v1549, 5
        %v1552 = vsel %vm562, %v1547, %v1551
        %v1554 = vshrl.u32 %v1489, 16
        %v1556 = vrot.slane %v1554, 4
        %v1557 = vshll.u32 %v1489, 16
        %v1559 = vrot.slane %v1557, 5
        %v1560 = vor.u32 %v1556, %v1559
        %v1561 = vrot.slane %v1560, 4
        %v1563 = vshll.u32 %v1490, 16
        %v1565 = vrot.slane %v1563, 5
        %v1566 = vsel %vm562, %v1561, %v1565
        %v1568 = vshrl.u32 %v1491, 16
        %v1570 = vrot.slane %v1568, 4
        %v1571 = vshll.u32 %v1491, 16
        %v1573 = vrot.slane %v1571, 5
        %v1574 = vor.u32 %v1570, %v1573
        %v1575 = vrot.slane %v1574, 4
        %v1577 = vshll.u32 %v1492, 16
        %v1579 = vrot.slane %v1577, 5
        %v1580 = vsel %vm562, %v1575, %v1579
        %v1582 = vshrl.u32 %v1493, 16
        %v1584 = vrot.slane %v1582, 4
        %v1585 = vshll.u32 %v1493, 16
        %v1587 = vrot.slane %v1585, 5
        %v1588 = vor.u32 %v1584, %v1587
        %v1589 = vrot.slane %v1588, 4
        %v1591 = vshll.u32 %v1494, 16
        %v1593 = vrot.slane %v1591, 5
        %v1594 = vsel %vm562, %v1589, %v1593
        %v1596 = vshrl.u32 %v1495, 16
        %v1598 = vrot.slane %v1596, 4
        %v1599 = vshll.u32 %v1495, 16
        %v1601 = vrot.slane %v1599, 5
        %v1602 = vor.u32 %v1598, %v1601
        %v1603 = vrot.slane %v1602, 4
        %v1605 = vshll.u32 %v1496, 16
        %v1607 = vrot.slane %v1605, 5
        %v1608 = vsel %vm562, %v1603, %v1607
        %s1609 = scalar_lea.vmem %s4, 16
        %v1610 = vld [vmem:[%s1609] sm:$0x3]
        %v1611 = vunpack.c.l.b16 %v1510
        %v1612 = vunpack.c.l.b16 %v1524
        %v1613 = vunpack.c.l.b16 %v1538
        %v1614 = vunpack.c.l.b16 %v1552
        %v1615 = vunpack.c.l.b16 %v1566
        %v1616 = vunpack.c.l.b16 %v1580
        %v1617 = vunpack.c.l.b16 %v1594
        %v1618 = vunpack.c.l.b16 %v1608
        %v1619 = vpack.c.b16 %v1612, %v1611
        %v1620 = vpack.c.b16 %v1614, %v1613
        %v1621 = vpack.c.b16 %v1616, %v1615
        %v1622 = vpack.c.b16 %v1618, %v1617
        %v1624 = vsel %vm362, %v1619, 0
        %v1627 = vsel %vm362, %v1620, 0
        %v1630 = vsel %vm362, %v1621, 0
        %v1633 = vsel %vm362, %v1622, 0
        %v1636 = vsel %vm375, %v1610, 0
        %1638 = vmatprep.subr.bf16.mxu0 0
        %1639 = vmatpush1.bf16.msra.mxu0 %v1636
        %1640 = vmatprep.subr.bf16.mxu0 0
        %1641 = vmatpush1.bf16.msra.mxu0 0
        %1642 = vmatprep.subr.bf16.mxu0 0
        %1643 = vmatpush1.bf16.msra.mxu0 0
        %1644 = vmatprep.subr.bf16.mxu0 0
        %1645 = vmatpush1.bf16.msra.mxu0 0
        %1646 = vmatprep.subr.bf16.mxu0 0
        %1647 = vmatpush1.bf16.msra.mxu0 0
        %1648 = vmatprep.subr.bf16.mxu0 0
        %1649 = vmatpush1.bf16.msra.mxu0 0
        %1650 = vmatprep.subr.bf16.mxu0 0
        %1651 = vmatpush1.bf16.msra.mxu0 0
        %1652 = vmatprep.subr.bf16.mxu0 0
        %1653 = vmatpush1.bf16.msra.mxu0 0
        %1654 = vmatprep.subr.bf16.mxu0 0
        %1655 = vmatpush1.bf16.msra.mxu0 0
        %1656 = vmatprep.subr.bf16.mxu0 0
        %1657 = vmatpush1.bf16.msra.mxu0 0
        %1658 = vmatprep.subr.bf16.mxu0 0
        %1659 = vmatpush1.bf16.msra.mxu0 0
        %1660 = vmatprep.subr.bf16.mxu0 0
        %1661 = vmatpush1.bf16.msra.mxu0 0
        %1662 = vmatprep.subr.bf16.mxu0 0
        %1663 = vmatpush1.bf16.msra.mxu0 0
        %1664 = vmatprep.subr.bf16.mxu0 0
        %1665 = vmatpush1.bf16.msra.mxu0 0
        %1666 = vmatprep.subr.bf16.mxu0 0
        %1667 = vmatpush1.bf16.msra.mxu0 0
        %1668 = vmatprep.subr.bf16.mxu0 0
        %1669 = vmatpush1.bf16.msra.mxu0 0
        %1670 = vmatprep.mubr.bf16.mxu0 0
        %1671 = vmatmul.mubr.bf16.gmra.mrb[0].mxu0 %v1624
        %v1672 = vpop.f32.mrb[0].mxu0
        %v1673 = vadd.f32 0.0, %v1672
        %v1674 = vpop.f32.mrb[0].mxu0
        %v1675 = vpop.f32.mrb[0].mxu0
        %v1676 = vadd.f32 0.0, %v1675
        %v1677 = vpop.f32.mrb[0].mxu0
        %1678 = vmatprep.mubr.bf16.mxu0 0
        %1679 = vmatmul.mubr.bf16.gmra.mrb[0].mxu0 %v1627
        %v1680 = vpop.f32.mrb[0].mxu0
        %v1681 = vadd.f32 0.0, %v1680
        %v1682 = vpop.f32.mrb[0].mxu0
        %v1683 = vpop.f32.mrb[0].mxu0
        %v1684 = vadd.f32 0.0, %v1683
        %v1685 = vpop.f32.mrb[0].mxu0
        %1686 = vmatprep.mubr.bf16.mxu0 0
        %1687 = vmatmul.mubr.bf16.gmra.mrb[0].mxu0 %v1630
        %v1688 = vpop.f32.mrb[0].mxu0
        %v1689 = vadd.f32 0.0, %v1688
        %v1690 = vpop.f32.mrb[0].mxu0
        %v1691 = vpop.f32.mrb[0].mxu0
        %v1692 = vadd.f32 0.0, %v1691
        %v1693 = vpop.f32.mrb[0].mxu0
        %1694 = vmatprep.mubr.bf16.mxu0 0
        %1695 = vmatmul.mubr.bf16.gmra.mrb[0].mxu0 %v1633
        %v1696 = vpop.f32.mrb[0].mxu0
        %v1697 = vadd.f32 0.0, %v1696
        %v1698 = vpop.f32.mrb[0].mxu0
        %v1699 = vpop.f32.mrb[0].mxu0
        %v1700 = vadd.f32 0.0, %v1699
        %v1701 = vpop.f32.mrb[0].mxu0
        %1702 = vdwg.mxu0
        %v1703 = vadd.f32 %v1473, %v1673
        %v1704 = vadd.f32 %v1474, %v1676
        %v1705 = vadd.f32 %v1475, %v1681
        %v1706 = vadd.f32 %v1476, %v1684
        %v1707 = vadd.f32 %v1477, %v1689
        %v1708 = vadd.f32 %v1478, %v1692
        %v1709 = vadd.f32 %v1479, %v1697
        %v1710 = vadd.f32 %v1480, %v1700
        %v1711 = vpack.c.bf16 %v1704, %v1703
        %v1712 = vpack.c.bf16 %v1706, %v1705
        %v1713 = vpack.c.bf16 %v1708, %v1707
        %v1714 = vpack.c.bf16 %v1710, %v1709
        %v1719 = vunpack.c.l.b16 %v1711
        %v1720 = vunpack.c.h.b16 %v1711
        %v1721 = vunpack.c.l.b16 %v1712
        %v1722 = vunpack.c.h.b16 %v1712
        %v1723 = vunpack.c.l.b16 %v1713
        %v1724 = vunpack.c.h.b16 %v1713
        %v1725 = vunpack.c.l.b16 %v1714
        %v1726 = vunpack.c.h.b16 %v1714
        %v1727 = vpack.c.b16 %v1719, %v1719
        %v1728 = vpack.c.b16 %v1720, %v1720
        %v1729 = vpack.c.b16 %v1721, %v1721
        %v1730 = vpack.c.b16 %v1722, %v1722
        %v1731 = vpack.c.b16 %v1723, %v1723
        %v1732 = vpack.c.b16 %v1724, %v1724
        %v1733 = vpack.c.b16 %v1725, %v1725
        %v1734 = vpack.c.b16 %v1726, %v1726
        %1743 = vst [vmem:[%s293] sm:$0xf] %v1727
        %1744 = vst [vmem:[%s293 + $0x4] sm:$0xf] %v1728
        %1745 = vst [vmem:[%s293 + $0x8] sm:$0xf] %v1729
        %1746 = vst [vmem:[%s293 + $0xc] sm:$0xf] %v1730
        %1747 = vst [vmem:[%s293 + $0x10] sm:$0xf] %v1731
        %1748 = vst [vmem:[%s293 + $0x14] sm:$0xf] %v1732
        %1749 = vst [vmem:[%s293 + $0x18] sm:$0xf] %v1733
        %1750 = vst [vmem:[%s293 + $0x1c] sm:$0xf] %v1734
        %v1751 = vadd.f32 %v1703, %v1704
        %v1752 = vadd.f32 %v1751, %v1705
        %v1753 = vadd.f32 %v1752, %v1706
        %v1754 = vadd.f32 %v1753, %v1707
        %v1755 = vadd.f32 %v1754, %v1708
        %v1756 = vadd.f32 %v1755, %v1709
        %v1757 = vadd.f32 %v1756, %v1710
        %v1758 = vrot.slane %v1757, 4
        %v1759 = vadd.f32 %v1757, %v1758
        %v1760 = vrot.slane %v1759, 2
        %v1761 = vadd.f32 %v1759, %v1760
        %v1762 = vrot.slane %v1761, 1
        %v1763 = vadd.f32 %v1761, %v1762
        %1764 = vst [vmem:[%s300] sm:$0x1] %v1763
        %v1765 = vmul.f32 %v1703, %v1703
        %v1766 = vmul.f32 %v1704, %v1704
        %v1767 = vmul.f32 %v1705, %v1705
        %v1768 = vmul.f32 %v1706, %v1706
        %v1769 = vmul.f32 %v1707, %v1707
        %v1770 = vmul.f32 %v1708, %v1708
        %v1771 = vmul.f32 %v1709, %v1709
        %v1772 = vmul.f32 %v1710, %v1710
        %v1773 = vadd.f32 %v1765, %v1766
        %v1774 = vadd.f32 %v1773, %v1767
        %v1775 = vadd.f32 %v1774, %v1768
        %v1776 = vadd.f32 %v1775, %v1769
        %v1777 = vadd.f32 %v1776, %v1770
        %v1778 = vadd.f32 %v1777, %v1771
        %v1779 = vadd.f32 %v1778, %v1772
        %v1780 = vrot.slane %v1779, 4
        %v1781 = vadd.f32 %v1779, %v1780
        %v1782 = vrot.slane %v1781, 2
        %v1783 = vadd.f32 %v1781, %v1782
        %v1784 = vrot.slane %v1783, 1
        %v1785 = vadd.f32 %v1783, %v1784
        %1786 = vst [vmem:[%s300 + $0x1] sm:$0x1] %v1785
        %s1787 = sand.u32 %s157, 1
        %s1788 = scalar_lea.sflag [#allocation3], %s1787
        %s1789 = sand.u32 %s157, 1
        %s1790 = smul.addr %s1789, 32
        %s1791 = scalar_lea.vmem [#allocation2], %s1790
        %s1792 = sand.u32 %s183, 1
        %s1793 = scalar_lea.sflag [#allocation5], %s1792
        %s1794 = sand.u32 %s183, 1
        %s1795 = smul.addr %s1794, 8
        %s1796 = scalar_lea.vmem [#allocation4], %s1795
        // Predicated region
        $region41: #{tpu_custom_call.1} parent=39 // pred_check
          %p1797 = pneg %p167
        $region42: #{tpu_custom_call.1} parent=39 // pred_check_branch
          %1799 = sbr.rel (%p1797) target = $region44
        $region43: #{tpu_custom_call.1} parent=39 // pred_region
          %s1800 = smul.u32 8, %s24
          %s1802 = ssub.s32 512, 512
          %1803 = vsyncadd %s1788, %s1802
          %s1804 = smul.addr %s1800, 64
          %s1805 = scalar_lea.hbm %s5, %s1804
          %s1806 = sshll.u32 %s1791, 4
          %s1807 = int_to_ptr.vmem [resolvable:$true] %s1806
          %1812 = dma.vmem_to_hbm [thread:$0]  %s1807, 512, %s1805, %s1788, 64, 64, 4
        $region44: #{tpu_custom_call.1} parent=39 // pred_fallthru
          _
        // Predicated region
        $region45: #{tpu_custom_call.1} parent=39 // pred_check
          %p1813 = pneg %p193
        $region46: #{tpu_custom_call.1} parent=39 // pred_check_branch
          %1815 = sbr.rel (%p1813) target = $region48
        $region47: #{tpu_custom_call.1} parent=39 // pred_region
          %s1817 = ssub.s32 128, 128
          %1818 = vsyncadd %s1793, %s1817
          %s1819 = smul.addr %s24, 128
          %s1820 = scalar_lea.hbm %s6, %s1819
          %s1822 = sshll.u32 %s1796, 4
          %s1823 = int_to_ptr.vmem [resolvable:$true] %s1822
          %1825 = dma.vmem_to_hbm [thread:$0]  %s1823, 128, %s1820, %s1793
        $region48: #{tpu_custom_call.1} parent=39 // pred_fallthru
          _
      $region40: #{tpu_custom_call.1} parent=5 // pred_fallthru
        _
      %p1826 = scmp.le.s32.totalorder 2, %s19
      // Predicated region
      $region49: #{tpu_custom_call.1} parent=5 // pred_check
        %p1827 = pneg %p1826
      $region50: #{tpu_custom_call.1} parent=5 // pred_check_branch
        %1829 = sbr.rel (%p1827) target = $region52
      $region51: #{tpu_custom_call.1} parent=5 // pred_region
        %s1830 = ssub.s32 %s19, 2
        // Predicated region
        $region53: #{tpu_custom_call.1} parent=51 // pred_check
          %p1831 = pneg %p173
        $region54: #{tpu_custom_call.1} parent=51 // pred_check_branch
          %1833 = sbr.rel (%p1831) target = $region56
        $region55: #{tpu_custom_call.1} parent=51 // pred_region
          %s1834 = sand.u32 %s158, 1
          %s1835 = scalar_lea.sflag [#allocation3], %s1834
          %s1836 = sand.u32 %s158, 1
          %s1837 = smul.addr %s1836, 32
          %s1838 = scalar_lea.vmem [#allocation2], %s1837
          %1839 = dma.done %s1835, 512
        $region56: #{tpu_custom_call.1} parent=51 // pred_fallthru
          _
        // Predicated region
        $region57: #{tpu_custom_call.1} parent=51 // pred_check
          %p1840 = pneg %p199
        $region58: #{tpu_custom_call.1} parent=51 // pred_check_branch
          %1842 = sbr.rel (%p1840) target = $region60
        $region59: #{tpu_custom_call.1} parent=51 // pred_region
          %s1843 = sand.u32 %s184, 1
          %s1844 = scalar_lea.sflag [#allocation5], %s1843
          %s1845 = sand.u32 %s184, 1
          %s1846 = smul.addr %s1845, 8
          %s1847 = scalar_lea.vmem [#allocation4], %s1846
          %1848 = dma.done %s1844, 128
        $region60: #{tpu_custom_call.1} parent=51 // pred_fallthru
          _
      $region52: #{tpu_custom_call.1} parent=5 // pred_fallthru
        _
    $region6: #{tpu_custom_call.1} parent=1 // loop_footer
      %s23 = sadd.s32 1, %s19
    $region7: #{tpu_custom_call.1} parent=1 // loop_footer_branch
      %18 = sbr.rel target = $region3
    $region8: #{tpu_custom_call.1} parent=1 // loop_exit
      _
    %1849 = vsyncpa [#allocation3], 1
    %s1850 = scalar_lea.sflag [#allocation3], 1
    %1851 = vsyncpa %s1850, 1
    %1852 = vsyncpa [#allocation5], 1
    %s1853 = scalar_lea.sflag [#allocation5], 1
    %1854 = vsyncpa %s1853, 1

</llo_original>
